<compile_context>
chip_gen: v7x
topology: tpu7x:2x2x1
jax: 0.10.0
libtpu: 0.0.40
codegen_flags: <defaults>
</compile_context>

<pallas_src>
import jax
import jax.numpy as jnp
from jax.experimental import pallas as pl
from jax.experimental.pallas import tpu as pltpu


IMG_C, IMG_H, IMG_W = 3, 32, 32
FLAT = IMG_C * IMG_H * IMG_W        # 3072 (multiple of 128 -> lane friendly)
IN_FEATURES = 512                   # resnet18 fc.in_features
HIDDEN = 256                        # head Linear(in_features, 256)
SE_REDUCTION = 16                   # SEBlock(256, reduction=16)
SE_HIDDEN = HIDDEN // SE_REDUCTION  # 16
OUT_DIM = 4                         # bbox
DEFAULT_TILE_B = 1024               # safe on v7x 64 MiB VMEM; MXU-aligned


def _fused_kernel(x_ref, wb_ref, w1_ref, b1_ref,
                  sw1_ref, sb1_ref, sw2_ref, sb2_ref,
                  w2_ref, b2_ref, o_ref):
    # x tile: [TILE_B, FLAT] bf16. All matmuls are bf16 x bf16 -> f32 on the
    # MXU; all elementwise / transcendental math stays f32 (VPU / EUP).
    x = x_ref[...]

    # Stand-in backbone projection: [TILE_B, 3072] @ [3072, 512]
    feats = jnp.dot(x, wb_ref[...], preferred_element_type=jnp.float32)

    # head Linear(512 -> 256)
    h = jnp.dot(feats.astype(jnp.bfloat16), w1_ref[...],
                preferred_element_type=jnp.float32) + b1_ref[...]

    # SEBlock: Linear(256->16) -> ReLU -> Linear(16->256) -> Sigmoid, scale.
    s = jnp.dot(h.astype(jnp.bfloat16), sw1_ref[...],
                preferred_element_type=jnp.float32) + sb1_ref[...]
    s = jnp.maximum(s, 0.0)
    scale = jax.nn.sigmoid(
        jnp.dot(s.astype(jnp.bfloat16), sw2_ref[...],
                preferred_element_type=jnp.float32) + sb2_ref[...])
    h = h * scale

    # ReLU -> Dropout(0.2) [inference: identity]
    h = jnp.maximum(h, 0.0)

    # Linear(256 -> 4) -> Sigmoid
    out = jnp.dot(h.astype(jnp.bfloat16), w2_ref[...],
                  preferred_element_type=jnp.float32) + b2_ref[...]
    o_ref[...] = jax.nn.sigmoid(out)


def _round_up(n, m):
    return ((n + m - 1) // m) * m


def bbox_cnn_forward(x_nchw, params, tile_b=DEFAULT_TILE_B):
    """x_nchw: [B, 3, 32, 32] image (NCHW, like PyTorch) -> [B, 4] f32."""
    B = x_nchw.shape[0]
    x_flat = x_nchw.reshape(B, FLAT).astype(jnp.bfloat16)

    # Tile selection: never exceed tile_b, never exceed (padded) batch.
    tile_b = min(tile_b, max(8, _round_up(B, 8)))
    b_pad = _round_up(B, tile_b)
    if b_pad != B:
        x_flat = jnp.pad(x_flat, ((0, b_pad - B), (0, 0)))
    grid = (b_pad // tile_b,)

    def const2(i):
        return (0, 0)

    weight_specs = [
        pl.BlockSpec((FLAT, IN_FEATURES), const2),       # backbone_proj
        pl.BlockSpec((IN_FEATURES, HIDDEN), const2),     # w1
        pl.BlockSpec((1, HIDDEN), const2),               # b1
        pl.BlockSpec((HIDDEN, SE_HIDDEN), const2),       # se_w1
        pl.BlockSpec((1, SE_HIDDEN), const2),            # se_b1
        pl.BlockSpec((SE_HIDDEN, HIDDEN), const2),       # se_w2
        pl.BlockSpec((1, HIDDEN), const2),               # se_b2
        pl.BlockSpec((HIDDEN, OUT_DIM), const2),         # w2
        pl.BlockSpec((1, OUT_DIM), const2),              # b2
    ]

    flops_per_row = 2 * (FLAT * IN_FEATURES + IN_FEATURES * HIDDEN
                         + HIDDEN * SE_HIDDEN + SE_HIDDEN * HIDDEN
                         + HIDDEN * OUT_DIM)
    weight_bytes = (2 * (FLAT * IN_FEATURES + IN_FEATURES * HIDDEN
                         + HIDDEN * SE_HIDDEN + SE_HIDDEN * HIDDEN
                         + HIDDEN * OUT_DIM)
                    + 4 * (2 * HIDDEN + SE_HIDDEN + OUT_DIM))
    cost = pl.CostEstimate(
        flops=flops_per_row * b_pad,
        transcendentals=b_pad * (HIDDEN + OUT_DIM),
        bytes_accessed=b_pad * (FLAT * 2 + OUT_DIM * 4) + weight_bytes,
    )

    out = pl.pallas_call(
        _fused_kernel,
        out_shape=jax.ShapeDtypeStruct((b_pad, OUT_DIM), jnp.float32),
        grid=grid,
        in_specs=[pl.BlockSpec((tile_b, FLAT), lambda i: (i, 0))] + weight_specs,
        out_specs=pl.BlockSpec((tile_b, OUT_DIM), lambda i: (i, 0)),
        compiler_params=pltpu.CompilerParams(
            dimension_semantics=("parallel",)),
        cost_estimate=cost,
    )(
        x_flat,
        params["backbone_proj"],
        params["w1"], params["b1"],
        params["se_w1"], params["se_b1"],
        params["se_w2"], params["se_b2"],
        params["w2"], params["b2"],
    )
    return out[:B]


def init_params(key):
    ks = jax.random.split(key, 5)

    def lin(k, fan_in, fan_out):
        scale = 1.0 / jnp.sqrt(fan_in)
        w = jax.random.uniform(k, (fan_in, fan_out), jnp.float32, -scale, scale)
        return w.astype(jnp.bfloat16)   # matmul operands in bf16

    return {
        # TODO(synk): deterministic stand-in for the pretrained resnet18 backbone.
        "backbone_proj": lin(ks[0], FLAT, IN_FEATURES),
        "w1":    lin(ks[1], IN_FEATURES, HIDDEN),
        "b1":    jnp.zeros((1, HIDDEN), jnp.float32),
        "se_w1": lin(ks[2], HIDDEN, SE_HIDDEN),
        "se_b1": jnp.zeros((1, SE_HIDDEN), jnp.float32),
        "se_w2": lin(ks[3], SE_HIDDEN, HIDDEN),
        "se_b2": jnp.zeros((1, HIDDEN), jnp.float32),
        "w2":    lin(ks[4], HIDDEN, OUT_DIM),
        "b2":    jnp.zeros((1, OUT_DIM), jnp.float32),
    }


def _reference_forward(x_nchw, p):
    """Pure-JAX f32 reference of the same forward (bf16 weights up-cast)."""
    B = x_nchw.shape[0]
    xf = x_nchw.reshape(B, FLAT).astype(jnp.float32)
    feats = xf @ p["backbone_proj"].astype(jnp.float32)
    h = feats @ p["w1"].astype(jnp.float32) + p["b1"]
    s = jnp.maximum(h @ p["se_w1"].astype(jnp.float32) + p["se_b1"], 0.0)
    scale = jax.nn.sigmoid(s @ p["se_w2"].astype(jnp.float32) + p["se_b2"])
    h = jnp.maximum(h * scale, 0.0)
    return jax.nn.sigmoid(h @ p["w2"].astype(jnp.float32) + p["b2"])


if __name__ == "__main__":
    key = jax.random.PRNGKey(0)
    k_param, k_x = jax.random.split(key)
    params = init_params(k_param)

    # small NCHW image, consistent with the PyTorch conv-input convention
    x = jax.random.normal(k_x, (2, IMG_C, IMG_H, IMG_W), dtype=jnp.float32)

    out = jax.block_until_ready(bbox_cnn_forward(x, params))
    assert out.shape == (2, OUT_DIM)

    # sanity check against a pure-JAX f32 reference (bf16 matmul operands in
    # the kernel -> loosened absolute tolerance; sigmoid output is in [0,1]).
    ref = _reference_forward(x, params)
    max_err = jnp.max(jnp.abs(out - ref))
    assert jnp.allclose(out, ref, atol=2e-2, rtol=0.0), f"max abs err {max_err}"

    # exercise the padded / non-multiple-of-tile batch path
    x3 = jax.random.normal(jax.random.PRNGKey(1), (3, IMG_C, IMG_H, IMG_W),
                           dtype=jnp.float32)
    out3 = jax.block_until_ready(bbox_cnn_forward(x3, params))
    assert out3.shape == (3, OUT_DIM)
    ref3 = _reference_forward(x3, params)
    assert jnp.allclose(out3, ref3, atol=2e-2, rtol=0.0)

    print("KERNEL_OK")
</pallas_src>

<mosaic_0001>
module attributes {stable_mosaic.version = 11 : i64} {
  func.func @_fused_kernel(%arg0: i32, %arg1: memref<8x3072xbf16, #tpu.memory_space<vmem>>, %arg2: memref<3072x512xbf16, #tpu.memory_space<vmem>>, %arg3: memref<512x256xbf16, #tpu.memory_space<vmem>>, %arg4: memref<1x256xf32, #tpu.memory_space<vmem>>, %arg5: memref<256x16xbf16, #tpu.memory_space<vmem>>, %arg6: memref<1x16xf32, #tpu.memory_space<vmem>>, %arg7: memref<16x256xbf16, #tpu.memory_space<vmem>>, %arg8: memref<1x256xf32, #tpu.memory_space<vmem>>, %arg9: memref<256x4xbf16, #tpu.memory_space<vmem>>, %arg10: memref<1x4xf32, #tpu.memory_space<vmem>>, %arg11: memref<8x4xf32, #tpu.memory_space<vmem>>) attributes {dimension_semantics = [#tpu.dimension_semantics<parallel>], iteration_bounds = array<i64: 1>, scalar_prefetch = 0 : i64, scratch_operands = 0 : i64, tpu.core_type = #tpu.core_type<tc>, window_params = [{transform_indices = @transform_0, window_bounds = array<i64: 8, 3072>}, {pipeline_mode = #tpu.pipeline_mode<synchronous>, transform_indices = @transform_1, window_bounds = array<i64: 3072, 512>}, {pipeline_mode = #tpu.pipeline_mode<synchronous>, transform_indices = @transform_2, window_bounds = array<i64: 512, 256>}, {pipeline_mode = #tpu.pipeline_mode<synchronous>, transform_indices = @transform_3, window_bounds = array<i64: 1, 256>}, {pipeline_mode = #tpu.pipeline_mode<synchronous>, transform_indices = @transform_4, window_bounds = array<i64: 256, 16>}, {pipeline_mode = #tpu.pipeline_mode<synchronous>, transform_indices = @transform_5, window_bounds = array<i64: 1, 16>}, {pipeline_mode = #tpu.pipeline_mode<synchronous>, transform_indices = @transform_6, window_bounds = array<i64: 16, 256>}, {pipeline_mode = #tpu.pipeline_mode<synchronous>, transform_indices = @transform_7, window_bounds = array<i64: 1, 256>}, {pipeline_mode = #tpu.pipeline_mode<synchronous>, transform_indices = @transform_8, window_bounds = array<i64: 256, 4>}, {pipeline_mode = #tpu.pipeline_mode<synchronous>, transform_indices = @transform_9, window_bounds = array<i64: 1, 4>}, {transform_indices = @transform_10, window_bounds = array<i64: 8, 4>}]} {
    %c0 = arith.constant 0 : index
    %c0_0 = arith.constant 0 : index
    %0 = vector.load %arg1[%c0, %c0_0] : memref<8x3072xbf16, #tpu.memory_space<vmem>>, vector<8x3072xbf16>
    %c0_1 = arith.constant 0 : index
    %c0_2 = arith.constant 0 : index
    %1 = vector.load %arg2[%c0_1, %c0_2] : memref<3072x512xbf16, #tpu.memory_space<vmem>>, vector<3072x512xbf16>
    %cst = arith.constant dense<0.000000e+00> : vector<8x512xf32>
    %2 = tpu.matmul %0, %1, %cst {dimension_numbers = #tpu.dot_dimension_numbers<[1], [0], [0], [1], [0, 0, 1, 1], [], []>} : vector<8x3072xbf16>, vector<3072x512xbf16>, vector<8x512xf32> -> vector<8x512xf32>
    %3 = arith.truncf %2 : vector<8x512xf32> to vector<8x512xbf16>
    %c0_3 = arith.constant 0 : index
    %c0_4 = arith.constant 0 : index
    %4 = vector.load %arg3[%c0_3, %c0_4] : memref<512x256xbf16, #tpu.memory_space<vmem>>, vector<512x256xbf16>
    %cst_5 = arith.constant dense<0.000000e+00> : vector<8x256xf32>
    %5 = tpu.matmul %3, %4, %cst_5 {dimension_numbers = #tpu.dot_dimension_numbers<[1], [0], [0], [1], [0, 0, 1, 1], [], []>} : vector<8x512xbf16>, vector<512x256xbf16>, vector<8x256xf32> -> vector<8x256xf32>
    %c0_6 = arith.constant 0 : index
    %c0_7 = arith.constant 0 : index
    %6 = vector.load %arg4[%c0_6, %c0_7] : memref<1x256xf32, #tpu.memory_space<vmem>>, vector<1x256xf32>
    %7 = vector.broadcast %6 : vector<1x256xf32> to vector<8x256xf32>
    %8 = arith.addf %5, %7 : vector<8x256xf32>
    %9 = arith.truncf %8 : vector<8x256xf32> to vector<8x256xbf16>
    %c0_8 = arith.constant 0 : index
    %c0_9 = arith.constant 0 : index
    %10 = vector.load %arg5[%c0_8, %c0_9] : memref<256x16xbf16, #tpu.memory_space<vmem>>, vector<256x16xbf16>
    %cst_10 = arith.constant dense<0.000000e+00> : vector<8x16xf32>
    %11 = tpu.matmul %9, %10, %cst_10 {dimension_numbers = #tpu.dot_dimension_numbers<[1], [0], [0], [1], [0, 0, 1, 1], [], []>} : vector<8x256xbf16>, vector<256x16xbf16>, vector<8x16xf32> -> vector<8x16xf32>
    %c0_11 = arith.constant 0 : index
    %c0_12 = arith.constant 0 : index
    %12 = vector.load %arg6[%c0_11, %c0_12] : memref<1x16xf32, #tpu.memory_space<vmem>>, vector<1x16xf32>
    %13 = vector.broadcast %12 : vector<1x16xf32> to vector<8x16xf32>
    %14 = arith.addf %11, %13 : vector<8x16xf32>
    %cst_13 = arith.constant 0.000000e+00 : f32
    %15 = vector.broadcast %cst_13 : f32 to vector<8x16xf32>
    %16 = arith.maximumf %14, %15 : vector<8x16xf32>
    %17 = arith.truncf %16 : vector<8x16xf32> to vector<8x16xbf16>
    %c0_14 = arith.constant 0 : index
    %c0_15 = arith.constant 0 : index
    %18 = vector.load %arg7[%c0_14, %c0_15] : memref<16x256xbf16, #tpu.memory_space<vmem>>, vector<16x256xbf16>
    %cst_16 = arith.constant dense<0.000000e+00> : vector<8x256xf32>
    %19 = tpu.matmul %17, %18, %cst_16 {dimension_numbers = #tpu.dot_dimension_numbers<[1], [0], [0], [1], [0, 0, 1, 1], [], []>} : vector<8x16xbf16>, vector<16x256xbf16>, vector<8x256xf32> -> vector<8x256xf32>
    %c0_17 = arith.constant 0 : index
    %c0_18 = arith.constant 0 : index
    %20 = vector.load %arg8[%c0_17, %c0_18] : memref<1x256xf32, #tpu.memory_space<vmem>>, vector<1x256xf32>
    %21 = vector.broadcast %20 : vector<1x256xf32> to vector<8x256xf32>
    %22 = arith.addf %19, %21 : vector<8x256xf32>
    %23 = arith.negf %22 : vector<8x256xf32>
    %24 = math.exp %23 : vector<8x256xf32>
    %cst_19 = arith.constant 1.000000e+00 : f32
    %25 = vector.broadcast %cst_19 : f32 to vector<8x256xf32>
    %26 = arith.addf %25, %24 : vector<8x256xf32>
    %27 = arith.divf %25, %26 : vector<8x256xf32>
    %28 = arith.mulf %8, %27 : vector<8x256xf32>
    %cst_20 = arith.constant 0.000000e+00 : f32
    %29 = vector.broadcast %cst_20 : f32 to vector<8x256xf32>
    %30 = arith.maximumf %28, %29 : vector<8x256xf32>
    %31 = arith.truncf %30 : vector<8x256xf32> to vector<8x256xbf16>
    %c0_21 = arith.constant 0 : index
    %c0_22 = arith.constant 0 : index
    %32 = vector.load %arg9[%c0_21, %c0_22] : memref<256x4xbf16, #tpu.memory_space<vmem>>, vector<256x4xbf16>
    %cst_23 = arith.constant dense<0.000000e+00> : vector<8x4xf32>
    %33 = tpu.matmul %31, %32, %cst_23 {dimension_numbers = #tpu.dot_dimension_numbers<[1], [0], [0], [1], [0, 0, 1, 1], [], []>} : vector<8x256xbf16>, vector<256x4xbf16>, vector<8x4xf32> -> vector<8x4xf32>
    %c0_24 = arith.constant 0 : index
    %c0_25 = arith.constant 0 : index
    %34 = vector.load %arg10[%c0_24, %c0_25] : memref<1x4xf32, #tpu.memory_space<vmem>>, vector<1x4xf32>
    %35 = vector.broadcast %34 : vector<1x4xf32> to vector<8x4xf32>
    %36 = arith.addf %33, %35 : vector<8x4xf32>
    %37 = arith.negf %36 : vector<8x4xf32>
    %38 = math.exp %37 : vector<8x4xf32>
    %cst_26 = arith.constant 1.000000e+00 : f32
    %39 = vector.broadcast %cst_26 : f32 to vector<8x4xf32>
    %40 = arith.addf %39, %38 : vector<8x4xf32>
    %41 = arith.divf %39, %40 : vector<8x4xf32>
    %c0_27 = arith.constant 0 : index
    %c0_28 = arith.constant 0 : index
    %42 = vector.load %arg11[%c0_27, %c0_28] : memref<8x4xf32, #tpu.memory_space<vmem>>, vector<8x4xf32>
    tpu.vector_store %arg11[%c0_27, %c0_28], %41 {strides = array<i32>} : memref<8x4xf32, #tpu.memory_space<vmem>>, vector<8x4xf32>,
    return
  }
  func.func @transform_0(%arg0: i32) -> (i32, i32) {
    %c0_i32 = arith.constant 0 : i32
    %c0_i32_0 = arith.constant 0 : i32
    return %arg0, %c0_i32 : i32, i32
  }
  func.func @transform_1(%arg0: i32) -> (i32, i32) {
    %c0_i32 = arith.constant 0 : i32
    %c0_i32_0 = arith.constant 0 : i32
    %c0_i32_1 = arith.constant 0 : i32
    return %c0_i32, %c0_i32_0 : i32, i32
  }
  func.func @transform_2(%arg0: i32) -> (i32, i32) {
    %c0_i32 = arith.constant 0 : i32
    %c0_i32_0 = arith.constant 0 : i32
    %c0_i32_1 = arith.constant 0 : i32
    return %c0_i32, %c0_i32_0 : i32, i32
  }
  func.func @transform_3(%arg0: i32) -> (i32, i32) {
    %c0_i32 = arith.constant 0 : i32
    %c0_i32_0 = arith.constant 0 : i32
    %c0_i32_1 = arith.constant 0 : i32
    return %c0_i32, %c0_i32_0 : i32, i32
  }
  func.func @transform_4(%arg0: i32) -> (i32, i32) {
    %c0_i32 = arith.constant 0 : i32
    %c0_i32_0 = arith.constant 0 : i32
    %c0_i32_1 = arith.constant 0 : i32
    return %c0_i32, %c0_i32_0 : i32, i32
  }
  func.func @transform_5(%arg0: i32) -> (i32, i32) {
    %c0_i32 = arith.constant 0 : i32
    %c0_i32_0 = arith.constant 0 : i32
    %c0_i32_1 = arith.constant 0 : i32
    return %c0_i32, %c0_i32_0 : i32, i32
  }
  func.func @transform_6(%arg0: i32) -> (i32, i32) {
    %c0_i32 = arith.constant 0 : i32
    %c0_i32_0 = arith.constant 0 : i32
    %c0_i32_1 = arith.constant 0 : i32
    return %c0_i32, %c0_i32_0 : i32, i32
  }
  func.func @transform_7(%arg0: i32) -> (i32, i32) {
    %c0_i32 = arith.constant 0 : i32
    %c0_i32_0 = arith.constant 0 : i32
    %c0_i32_1 = arith.constant 0 : i32
    return %c0_i32, %c0_i32_0 : i32, i32
  }
  func.func @transform_8(%arg0: i32) -> (i32, i32) {
    %c0_i32 = arith.constant 0 : i32
    %c0_i32_0 = arith.constant 0 : i32
    %c0_i32_1 = arith.constant 0 : i32
    return %c0_i32, %c0_i32_0 : i32, i32
  }
  func.func @transform_9(%arg0: i32) -> (i32, i32) {
    %c0_i32 = arith.constant 0 : i32
    %c0_i32_0 = arith.constant 0 : i32
    %c0_i32_1 = arith.constant 0 : i32
    return %c0_i32, %c0_i32_0 : i32, i32
  }
  func.func @transform_10(%arg0: i32) -> (i32, i32) {
    %c0_i32 = arith.constant 0 : i32
    %c0_i32_0 = arith.constant 0 : i32
    return %arg0, %c0_i32 : i32, i32
  }
}

</mosaic_0001>

<llo_original>
// kernel: tpu_custom_call.1
$region0: #{tpu_custom_call.1}
  #allocation0 [shape = 'u32[]', space=smem, size = 0x4, offset = 0x4, fixed_abs, tag = 'smem constant byte address 0x4 - core index']
  #allocation1 [shape = 'u32[144,128]{1,0:T(1,128)}', space=vmem, size = 0x12000, scoped, tag = 'internal scratch']
  %s0 = inlined_call_operand.hbm [shape: bf16[8,3072], index: 0, kind: input, shape index: {}]
  %s1 = inlined_call_operand.hbm [shape: bf16[3072,512], index: 1, kind: input, shape index: {}]
  %s2 = inlined_call_operand.hbm [shape: bf16[512,256], index: 2, kind: input, shape index: {}]
  %s3 = inlined_call_operand.hbm [shape: f32[1,256], index: 3, kind: input, shape index: {}]
  %s4 = inlined_call_operand.vmem [shape: bf16[256,16], index: 4, kind: input, shape index: {}]
  %s5 = inlined_call_operand.hbm [shape: f32[1,16], index: 5, kind: input, shape index: {}]
  %s6 = inlined_call_operand.hbm [shape: bf16[16,256], index: 6, kind: input, shape index: {}]
  %s7 = inlined_call_operand.hbm [shape: f32[1,256], index: 7, kind: input, shape index: {}]
  %s8 = inlined_call_operand.vmem [shape: bf16[256,4], index: 8, kind: input, shape index: {}]
  %s9 = inlined_call_operand.hbm [shape: f32[1,4], index: 9, kind: input, shape index: {}]
  %s10 = inlined_call_operand.vmem [shape: f32[8,4], index: 10, kind: output, shape index: {}]
  %s11 = sld [smem:[#allocation0]]
  $region82: #{tpu_custom_call.1} parent=0
    _
  %s13 = ssub.s32 1, %s11
  %s14 = scalar_select 0, %s13, %s11
  $region1: #{tpu_custom_call.1} parent=0
    #allocation2 [shape = 'u8[49152]{0}', space=vmem, size = 0xc000, scoped, tag = 'input window, operand 0, single buffered']
    #allocation3 [shape = 's32[1]{0}', space=sflag, size = 0x4, scoped, tag = 'scoped memory for tpu_custom_call.1']
    #allocation4 [shape = 'u8[3145728]{0}', space=vmem, size = 0x300000, scoped, tag = 'input window, operand 1, single buffered']
    #allocation5 [shape = 's32[1]{0}', space=sflag, size = 0x4, scoped, tag = 'scoped memory for tpu_custom_call.1']
    #allocation6 [shape = 'u8[262144]{0}', space=vmem, size = 0x40000, scoped, tag = 'input window, operand 2, single buffered']
    #allocation7 [shape = 'u8[1024]{0}', space=vmem, size = 0x400, scoped, tag = 'input window, operand 3, single buffered']
    #allocation8 [shape = 's32[1]{0}', space=sflag, size = 0x4, scoped, tag = 'scoped memory for tpu_custom_call.1']
    #allocation9 [shape = 'u8[512]{0}', space=vmem, size = 0x400, scoped, tag = 'input window, operand 5, single buffered']
    #allocation10 [shape = 'u8[8192]{0}', space=vmem, size = 0x2000, scoped, tag = 'input window, operand 6, single buffered']
    #allocation11 [shape = 's32[1]{0}', space=sflag, size = 0x4, scoped, tag = 'scoped memory for tpu_custom_call.1']
    #allocation12 [shape = 'u8[1024]{0}', space=vmem, size = 0x400, scoped, tag = 'input window, operand 7, single buffered']
    #allocation13 [shape = 'u8[512]{0}', space=vmem, size = 0x400, scoped, tag = 'input window, operand 9, single buffered']
    #allocation14 [shape = 's32[1]{0}', space=sflag, size = 0x4, scoped, tag = 'scoped memory for tpu_custom_call.1']
    %15 = vsyncpa [#allocation3], 0
    %16 = vsyncpa [#allocation5], 0
    %17 = vsyncpa [#allocation8], 0
    %18 = vsyncpa [#allocation11], 0
    %19 = vsyncpa [#allocation14], 0
    // Predicated region
    $region2: #{tpu_custom_call.1} parent=1 // pred_check
      _
    $region3: #{tpu_custom_call.1} parent=1 // pred_check_branch
      %21 = sbr.rel (0) target = $region5
    $region4: #{tpu_custom_call.1} parent=1 // pred_region
      %s23 = ssub.s32 1536, 1536
      %24 = vsyncadd [#allocation3], %s23
      %s26 = sshll.u32 [#allocation2], 4
      %s27 = int_to_ptr.vmem [resolvable:$true] %s26
      %29 = dma.hbm_to_vmem [thread:$0]  %s0, 1536, %s27, [#allocation3]
    $region5: #{tpu_custom_call.1} parent=1 // pred_fallthru
      _
    // Predicated region
    $region6: #{tpu_custom_call.1} parent=1 // pred_check
      _
    $region7: #{tpu_custom_call.1} parent=1 // pred_check_branch
      %31 = sbr.rel (0) target = $region9
    $region8: #{tpu_custom_call.1} parent=1 // pred_region
      %s33 = ssub.s32 98304, 98304
      %34 = vsyncadd [#allocation5], %s33
      %s35 = sshll.u32 [#allocation4], 4
      %s36 = int_to_ptr.vmem [resolvable:$true] %s35
      %41 = dma.hbm_to_vmem [thread:$0]  %s1, 98304, %s36, [#allocation5], 256, 256, 16
    $region9: #{tpu_custom_call.1} parent=1 // pred_fallthru
      _
    // Predicated region
    $region10: #{tpu_custom_call.1} parent=1 // pred_check
      _
    $region11: #{tpu_custom_call.1} parent=1 // pred_check_branch
      %43 = sbr.rel (0) target = $region13
    $region12: #{tpu_custom_call.1} parent=1 // pred_region
      %s45 = ssub.s32 8192, 8192
      %46 = vsyncadd [#allocation5], %s45
      %s47 = sshll.u32 [#allocation6], 4
      %s48 = int_to_ptr.vmem [resolvable:$true] %s47
      %53 = dma.hbm_to_vmem [thread:$0]  %s2, 8192, %s48, [#allocation5], 128, 128, 8
    $region13: #{tpu_custom_call.1} parent=1 // pred_fallthru
      _
    // Predicated region
    $region14: #{tpu_custom_call.1} parent=1 // pred_check
      _
    $region15: #{tpu_custom_call.1} parent=1 // pred_check_branch
      %55 = sbr.rel (0) target = $region17
    $region16: #{tpu_custom_call.1} parent=1 // pred_region
      %s57 = ssub.s32 32, 32
      %58 = vsyncadd [#allocation8], %s57
      %s60 = sshll.u32 [#allocation7], 4
      %s61 = int_to_ptr.vmem [resolvable:$true] %s60
      %63 = dma.hbm_to_vmem [thread:$0]  %s3, 32, %s61, [#allocation8]
    $region17: #{tpu_custom_call.1} parent=1 // pred_fallthru
      _
    // Predicated region
    $region18: #{tpu_custom_call.1} parent=1 // pred_check
      _
    $region19: #{tpu_custom_call.1} parent=1 // pred_check_branch
      %65 = sbr.rel (0) target = $region21
    $region20: #{tpu_custom_call.1} parent=1 // pred_region
      _
    $region21: #{tpu_custom_call.1} parent=1 // pred_fallthru
      _
    // Predicated region
    $region22: #{tpu_custom_call.1} parent=1 // pred_check
      _
    $region23: #{tpu_custom_call.1} parent=1 // pred_check_branch
      %67 = sbr.rel (0) target = $region25
    $region24: #{tpu_custom_call.1} parent=1 // pred_region
      %s69 = ssub.s32 16, 16
      %70 = vsyncadd [#allocation8], %s69
      %s72 = sshll.u32 [#allocation9], 4
      %s73 = int_to_ptr.vmem [resolvable:$true] %s72
      %75 = dma.hbm_to_vmem [thread:$0]  %s5, 16, %s73, [#allocation8]
    $region25: #{tpu_custom_call.1} parent=1 // pred_fallthru
      _
    // Predicated region
    $region26: #{tpu_custom_call.1} parent=1 // pred_check
      _
    $region27: #{tpu_custom_call.1} parent=1 // pred_check_branch
      %77 = sbr.rel (0) target = $region29
    $region28: #{tpu_custom_call.1} parent=1 // pred_region
      %s79 = ssub.s32 256, 256
      %80 = vsyncadd [#allocation11], %s79
      %s81 = sshll.u32 [#allocation10], 4
      %s82 = int_to_ptr.vmem [resolvable:$true] %s81
      %87 = dma.hbm_to_vmem [thread:$0]  %s6, 256, %s82, [#allocation11], 128, 128, 8
    $region29: #{tpu_custom_call.1} parent=1 // pred_fallthru
      _
    // Predicated region
    $region30: #{tpu_custom_call.1} parent=1 // pred_check
      _
    $region31: #{tpu_custom_call.1} parent=1 // pred_check_branch
      %89 = sbr.rel (0) target = $region33
    $region32: #{tpu_custom_call.1} parent=1 // pred_region
      %s91 = ssub.s32 32, 32
      %92 = vsyncadd [#allocation11], %s91
      %s94 = sshll.u32 [#allocation12], 4
      %s95 = int_to_ptr.vmem [resolvable:$true] %s94
      %97 = dma.hbm_to_vmem [thread:$0]  %s7, 32, %s95, [#allocation11]
    $region33: #{tpu_custom_call.1} parent=1 // pred_fallthru
      _
    // Predicated region
    $region34: #{tpu_custom_call.1} parent=1 // pred_check
      _
    $region35: #{tpu_custom_call.1} parent=1 // pred_check_branch
      %99 = sbr.rel (0) target = $region37
    $region36: #{tpu_custom_call.1} parent=1 // pred_region
      _
    $region37: #{tpu_custom_call.1} parent=1 // pred_fallthru
      _
    // Predicated region
    $region38: #{tpu_custom_call.1} parent=1 // pred_check
      _
    $region39: #{tpu_custom_call.1} parent=1 // pred_check_branch
      %101 = sbr.rel (0) target = $region41
    $region40: #{tpu_custom_call.1} parent=1 // pred_region
      %s103 = ssub.s32 16, 16
      %104 = vsyncadd [#allocation14], %s103
      %s106 = sshll.u32 [#allocation13], 4
      %s107 = int_to_ptr.vmem [resolvable:$true] %s106
      %109 = dma.hbm_to_vmem [thread:$0]  %s9, 16, %s107, [#allocation14]
    $region41: #{tpu_custom_call.1} parent=1 // pred_fallthru
      _
    // Predicated region
    $region42: #{tpu_custom_call.1} parent=1 // pred_check
      _
    $region43: #{tpu_custom_call.1} parent=1 // pred_check_branch
      %111 = sbr.rel (0) target = $region45
    $region44: #{tpu_custom_call.1} parent=1 // pred_region
      %112 = dma.done [#allocation3], 1536
    $region45: #{tpu_custom_call.1} parent=1 // pred_fallthru
      _
    // Predicated region
    $region46: #{tpu_custom_call.1} parent=1 // pred_check
      _
    $region47: #{tpu_custom_call.1} parent=1 // pred_check_branch
      %114 = sbr.rel (0) target = $region49
    $region48: #{tpu_custom_call.1} parent=1 // pred_region
      %115 = dma.done [#allocation5], 98304
    $region49: #{tpu_custom_call.1} parent=1 // pred_fallthru
      _
    // Predicated region
    $region50: #{tpu_custom_call.1} parent=1 // pred_check
      _
    $region51: #{tpu_custom_call.1} parent=1 // pred_check_branch
      %117 = sbr.rel (0) target = $region53
    $region52: #{tpu_custom_call.1} parent=1 // pred_region
      %118 = dma.done [#allocation5], 8192
    $region53: #{tpu_custom_call.1} parent=1 // pred_fallthru
      _
    // Predicated region
    $region54: #{tpu_custom_call.1} parent=1 // pred_check
      _
    $region55: #{tpu_custom_call.1} parent=1 // pred_check_branch
      %120 = sbr.rel (0) target = $region57
    $region56: #{tpu_custom_call.1} parent=1 // pred_region
      %121 = dma.done [#allocation8], 32
    $region57: #{tpu_custom_call.1} parent=1 // pred_fallthru
      _
    // Predicated region
    $region58: #{tpu_custom_call.1} parent=1 // pred_check
      _
    $region59: #{tpu_custom_call.1} parent=1 // pred_check_branch
      %123 = sbr.rel (0) target = $region61
    $region60: #{tpu_custom_call.1} parent=1 // pred_region
      %124 = dma.done [#allocation8], 16
    $region61: #{tpu_custom_call.1} parent=1 // pred_fallthru
      _
    // Predicated region
    $region62: #{tpu_custom_call.1} parent=1 // pred_check
      _
    $region63: #{tpu_custom_call.1} parent=1 // pred_check_branch
      %126 = sbr.rel (0) target = $region65
    $region64: #{tpu_custom_call.1} parent=1 // pred_region
      %127 = dma.done [#allocation11], 256
    $region65: #{tpu_custom_call.1} parent=1 // pred_fallthru
      _
    // Predicated region
    $region66: #{tpu_custom_call.1} parent=1 // pred_check
      _
    $region67: #{tpu_custom_call.1} parent=1 // pred_check_branch
      %129 = sbr.rel (0) target = $region69
    $region68: #{tpu_custom_call.1} parent=1 // pred_region
      %130 = dma.done [#allocation11], 32
    $region69: #{tpu_custom_call.1} parent=1 // pred_fallthru
      _
    // Predicated region
    $region70: #{tpu_custom_call.1} parent=1 // pred_check
      _
    $region71: #{tpu_custom_call.1} parent=1 // pred_check_branch
      %132 = sbr.rel (0) target = $region73
    $region72: #{tpu_custom_call.1} parent=1 // pred_region
      %133 = dma.done [#allocation14], 16
    $region73: #{tpu_custom_call.1} parent=1 // pred_fallthru
      _
    %v135 = vld [vmem:[#allocation2] sm:$0xff]
    %v136 = vld [vmem:[#allocation2 + $0x8] sm:$0xff]
    %v137 = vld [vmem:[#allocation2 + $0x10] sm:$0xff]
    %v138 = vld [vmem:[#allocation2 + $0x18] sm:$0xff]
    %v139 = vld [vmem:[#allocation2 + $0x20] sm:$0xff]
    %v140 = vld [vmem:[#allocation2 + $0x28] sm:$0xff]
    %v141 = vld [vmem:[#allocation2 + $0x30] sm:$0xff]
    %v142 = vld [vmem:[#allocation2 + $0x38] sm:$0xff]
    %v143 = vld [vmem:[#allocation2 + $0x40] sm:$0xff]
    %v144 = vld [vmem:[#allocation2 + $0x48] sm:$0xff]
    %v145 = vld [vmem:[#allocation2 + $0x50] sm:$0xff]
    %v146 = vld [vmem:[#allocation2 + $0x58] sm:$0xff]
    %v147 = vld [vmem:[#allocation4] sm:$0xff]
    %v148 = vld [vmem:[#allocation4 + $0x8] sm:$0xff]
    %v149 = vld [vmem:[#allocation4 + $0x10] sm:$0xff]
    %v150 = vld [vmem:[#allocation4 + $0x18] sm:$0xff]
    %v151 = vld [vmem:[#allocation4 + $0x20] sm:$0xff]
    %v152 = vld [vmem:[#allocation4 + $0x28] sm:$0xff]
    %v153 = vld [vmem:[#allocation4 + $0x30] sm:$0xff]
    %v154 = vld [vmem:[#allocation4 + $0x38] sm:$0xff]
    %v155 = vld [vmem:[#allocation4 + $0x40] sm:$0xff]
    %v156 = vld [vmem:[#allocation4 + $0x48] sm:$0xff]
    %v157 = vld [vmem:[#allocation4 + $0x50] sm:$0xff]
    %v158 = vld [vmem:[#allocation4 + $0x58] sm:$0xff]
    %v159 = vld [vmem:[#allocation4 + $0x60] sm:$0xff]
    %v160 = vld [vmem:[#allocation4 + $0x68] sm:$0xff]
    %v161 = vld [vmem:[#allocation4 + $0x70] sm:$0xff]
    %v162 = vld [vmem:[#allocation4 + $0x78] sm:$0xff]
    %v163 = vld [vmem:[#allocation4 + $0x80] sm:$0xff]
    %v164 = vld [vmem:[#allocation4 + $0x88] sm:$0xff]
    %v165 = vld [vmem:[#allocation4 + $0x90] sm:$0xff]
    %v166 = vld [vmem:[#allocation4 + $0x98] sm:$0xff]
    %v167 = vld [vmem:[#allocation4 + $0xa0] sm:$0xff]
    %v168 = vld [vmem:[#allocation4 + $0xa8] sm:$0xff]
    %v169 = vld [vmem:[#allocation4 + $0xb0] sm:$0xff]
    %v170 = vld [vmem:[#allocation4 + $0xb8] sm:$0xff]
    %v171 = vld [vmem:[#allocation4 + $0xc0] sm:$0xff]
    %v172 = vld [vmem:[#allocation4 + $0xc8] sm:$0xff]
    %v173 = vld [vmem:[#allocation4 + $0xd0] sm:$0xff]
    %v174 = vld [vmem:[#allocation4 + $0xd8] sm:$0xff]
    %v175 = vld [vmem:[#allocation4 + $0xe0] sm:$0xff]
    %v176 = vld [vmem:[#allocation4 + $0xe8] sm:$0xff]
    %v177 = vld [vmem:[#allocation4 + $0xf0] sm:$0xff]
    %v178 = vld [vmem:[#allocation4 + $0xf8] sm:$0xff]
    %v179 = vld [vmem:[#allocation4 + $0x100] sm:$0xff]
    %v180 = vld [vmem:[#allocation4 + $0x108] sm:$0xff]
    %v181 = vld [vmem:[#allocation4 + $0x110] sm:$0xff]
    %v182 = vld [vmem:[#allocation4 + $0x118] sm:$0xff]
    %v183 = vld [vmem:[#allocation4 + $0x120] sm:$0xff]
    %v184 = vld [vmem:[#allocation4 + $0x128] sm:$0xff]
    %v185 = vld [vmem:[#allocation4 + $0x130] sm:$0xff]
    %v186 = vld [vmem:[#allocation4 + $0x138] sm:$0xff]
    %v187 = vld [vmem:[#allocation4 + $0x140] sm:$0xff]
    %v188 = vld [vmem:[#allocation4 + $0x148] sm:$0xff]
    %v189 = vld [vmem:[#allocation4 + $0x150] sm:$0xff]
    %v190 = vld [vmem:[#allocation4 + $0x158] sm:$0xff]
    %v191 = vld [vmem:[#allocation4 + $0x160] sm:$0xff]
    %v192 = vld [vmem:[#allocation4 + $0x168] sm:$0xff]
    %v193 = vld [vmem:[#allocation4 + $0x170] sm:$0xff]
    %v194 = vld [vmem:[#allocation4 + $0x178] sm:$0xff]
    %v195 = vld [vmem:[#allocation4 + $0x180] sm:$0xff]
    %v196 = vld [vmem:[#allocation4 + $0x188] sm:$0xff]
    %v197 = vld [vmem:[#allocation4 + $0x190] sm:$0xff]
    %v198 = vld [vmem:[#allocation4 + $0x198] sm:$0xff]
    %v199 = vld [vmem:[#allocation4 + $0x1a0] sm:$0xff]
    %v200 = vld [vmem:[#allocation4 + $0x1a8] sm:$0xff]
    %v201 = vld [vmem:[#allocation4 + $0x1b0] sm:$0xff]
    %v202 = vld [vmem:[#allocation4 + $0x1b8] sm:$0xff]
    %v203 = vld [vmem:[#allocation4 + $0x1c0] sm:$0xff]
    %v204 = vld [vmem:[#allocation4 + $0x1c8] sm:$0xff]
    %v205 = vld [vmem:[#allocation4 + $0x1d0] sm:$0xff]
    %v206 = vld [vmem:[#allocation4 + $0x1d8] sm:$0xff]
    %v207 = vld [vmem:[#allocation4 + $0x1e0] sm:$0xff]
    %v208 = vld [vmem:[#allocation4 + $0x1e8] sm:$0xff]
    %v209 = vld [vmem:[#allocation4 + $0x1f0] sm:$0xff]
    %v210 = vld [vmem:[#allocation4 + $0x1f8] sm:$0xff]
    %v211 = vld [vmem:[#allocation4 + $0x200] sm:$0xff]
    %v212 = vld [vmem:[#allocation4 + $0x208] sm:$0xff]
    %v213 = vld [vmem:[#allocation4 + $0x210] sm:$0xff]
    %v214 = vld [vmem:[#allocation4 + $0x218] sm:$0xff]
    %v215 = vld [vmem:[#allocation4 + $0x220] sm:$0xff]
    %v216 = vld [vmem:[#allocation4 + $0x228] sm:$0xff]
    %v217 = vld [vmem:[#allocation4 + $0x230] sm:$0xff]
    %v218 = vld [vmem:[#allocation4 + $0x238] sm:$0xff]
    %v219 = vld [vmem:[#allocation4 + $0x240] sm:$0xff]
    %v220 = vld [vmem:[#allocation4 + $0x248] sm:$0xff]
    %v221 = vld [vmem:[#allocation4 + $0x250] sm:$0xff]
    %v222 = vld [vmem:[#allocation4 + $0x258] sm:$0xff]
    %v223 = vld [vmem:[#allocation4 + $0x260] sm:$0xff]
    %v224 = vld [vmem:[#allocation4 + $0x268] sm:$0xff]
    %v225 = vld [vmem:[#allocation4 + $0x270] sm:$0xff]
    %v226 = vld [vmem:[#allocation4 + $0x278] sm:$0xff]
    %v227 = vld [vmem:[#allocation4 + $0x280] sm:$0xff]
    %v228 = vld [vmem:[#allocation4 + $0x288] sm:$0xff]
    %v229 = vld [vmem:[#allocation4 + $0x290] sm:$0xff]
    %v230 = vld [vmem:[#allocation4 + $0x298] sm:$0xff]
    %v231 = vld [vmem:[#allocation4 + $0x2a0] sm:$0xff]
    %v232 = vld [vmem:[#allocation4 + $0x2a8] sm:$0xff]
    %v233 = vld [vmem:[#allocation4 + $0x2b0] sm:$0xff]
    %v234 = vld [vmem:[#allocation4 + $0x2b8] sm:$0xff]
    %v235 = vld [vmem:[#allocation4 + $0x2c0] sm:$0xff]
    %v236 = vld [vmem:[#allocation4 + $0x2c8] sm:$0xff]
    %v237 = vld [vmem:[#allocation4 + $0x2d0] sm:$0xff]
    %v238 = vld [vmem:[#allocation4 + $0x2d8] sm:$0xff]
    %v239 = vld [vmem:[#allocation4 + $0x2e0] sm:$0xff]
    %v240 = vld [vmem:[#allocation4 + $0x2e8] sm:$0xff]
    %v241 = vld [vmem:[#allocation4 + $0x2f0] sm:$0xff]
    %v242 = vld [vmem:[#allocation4 + $0x2f8] sm:$0xff]
    %v243 = vld [vmem:[#allocation4 + $0x300] sm:$0xff]
    %v244 = vld [vmem:[#allocation4 + $0x308] sm:$0xff]
    %v245 = vld [vmem:[#allocation4 + $0x310] sm:$0xff]
    %v246 = vld [vmem:[#allocation4 + $0x318] sm:$0xff]
    %v247 = vld [vmem:[#allocation4 + $0x320] sm:$0xff]
    %v248 = vld [vmem:[#allocation4 + $0x328] sm:$0xff]
    %v249 = vld [vmem:[#allocation4 + $0x330] sm:$0xff]
    %v250 = vld [vmem:[#allocation4 + $0x338] sm:$0xff]
    %v251 = vld [vmem:[#allocation4 + $0x340] sm:$0xff]
    %v252 = vld [vmem:[#allocation4 + $0x348] sm:$0xff]
    %v253 = vld [vmem:[#allocation4 + $0x350] sm:$0xff]
    %v254 = vld [vmem:[#allocation4 + $0x358] sm:$0xff]
    %v255 = vld [vmem:[#allocation4 + $0x360] sm:$0xff]
    %v256 = vld [vmem:[#allocation4 + $0x368] sm:$0xff]
    %v257 = vld [vmem:[#allocation4 + $0x370] sm:$0xff]
    %v258 = vld [vmem:[#allocation4 + $0x378] sm:$0xff]
    %v259 = vld [vmem:[#allocation4 + $0x380] sm:$0xff]
    %v260 = vld [vmem:[#allocation4 + $0x388] sm:$0xff]
    %v261 = vld [vmem:[#allocation4 + $0x390] sm:$0xff]
    %v262 = vld [vmem:[#allocation4 + $0x398] sm:$0xff]
    %v263 = vld [vmem:[#allocation4 + $0x3a0] sm:$0xff]
    %v264 = vld [vmem:[#allocation4 + $0x3a8] sm:$0xff]
    %v265 = vld [vmem:[#allocation4 + $0x3b0] sm:$0xff]
    %v266 = vld [vmem:[#allocation4 + $0x3b8] sm:$0xff]
    %v267 = vld [vmem:[#allocation4 + $0x3c0] sm:$0xff]
    %v268 = vld [vmem:[#allocation4 + $0x3c8] sm:$0xff]
    %v269 = vld [vmem:[#allocation4 + $0x3d0] sm:$0xff]
    %v270 = vld [vmem:[#allocation4 + $0x3d8] sm:$0xff]
    %v271 = vld [vmem:[#allocation4 + $0x3e0] sm:$0xff]
    %v272 = vld [vmem:[#allocation4 + $0x3e8] sm:$0xff]
    %v273 = vld [vmem:[#allocation4 + $0x3f0] sm:$0xff]
    %v274 = vld [vmem:[#allocation4 + $0x3f8] sm:$0xff]
    %v275 = vld [vmem:[#allocation4 + $0x400] sm:$0xff]
    %v276 = vld [vmem:[#allocation4 + $0x408] sm:$0xff]
    %v277 = vld [vmem:[#allocation4 + $0x410] sm:$0xff]
    %v278 = vld [vmem:[#allocation4 + $0x418] sm:$0xff]
    %v279 = vld [vmem:[#allocation4 + $0x420] sm:$0xff]
    %v280 = vld [vmem:[#allocation4 + $0x428] sm:$0xff]
    %v281 = vld [vmem:[#allocation4 + $0x430] sm:$0xff]
    %v282 = vld [vmem:[#allocation4 + $0x438] sm:$0xff]
    %v283 = vld [vmem:[#allocation4 + $0x440] sm:$0xff]
    %v284 = vld [vmem:[#allocation4 + $0x448] sm:$0xff]
    %v285 = vld [vmem:[#allocation4 + $0x450] sm:$0xff]
    %v286 = vld [vmem:[#allocation4 + $0x458] sm:$0xff]
    %v287 = vld [vmem:[#allocation4 + $0x460] sm:$0xff]
    %v288 = vld [vmem:[#allocation4 + $0x468] sm:$0xff]
    %v289 = vld [vmem:[#allocation4 + $0x470] sm:$0xff]
    %v290 = vld [vmem:[#allocation4 + $0x478] sm:$0xff]
    %v291 = vld [vmem:[#allocation4 + $0x480] sm:$0xff]
    %v292 = vld [vmem:[#allocation4 + $0x488] sm:$0xff]
    %v293 = vld [vmem:[#allocation4 + $0x490] sm:$0xff]
    %v294 = vld [vmem:[#allocation4 + $0x498] sm:$0xff]
    %v295 = vld [vmem:[#allocation4 + $0x4a0] sm:$0xff]
    %v296 = vld [vmem:[#allocation4 + $0x4a8] sm:$0xff]
    %v297 = vld [vmem:[#allocation4 + $0x4b0] sm:$0xff]
    %v298 = vld [vmem:[#allocation4 + $0x4b8] sm:$0xff]
    %v299 = vld [vmem:[#allocation4 + $0x4c0] sm:$0xff]
    %v300 = vld [vmem:[#allocation4 + $0x4c8] sm:$0xff]
    %v301 = vld [vmem:[#allocation4 + $0x4d0] sm:$0xff]
    %v302 = vld [vmem:[#allocation4 + $0x4d8] sm:$0xff]
    %v303 = vld [vmem:[#allocation4 + $0x4e0] sm:$0xff]
    %v304 = vld [vmem:[#allocation4 + $0x4e8] sm:$0xff]
    %v305 = vld [vmem:[#allocation4 + $0x4f0] sm:$0xff]
    %v306 = vld [vmem:[#allocation4 + $0x4f8] sm:$0xff]
    %v307 = vld [vmem:[#allocation4 + $0x500] sm:$0xff]
    %v308 = vld [vmem:[#allocation4 + $0x508] sm:$0xff]
    %v309 = vld [vmem:[#allocation4 + $0x510] sm:$0xff]
    %v310 = vld [vmem:[#allocation4 + $0x518] sm:$0xff]
    %v311 = vld [vmem:[#allocation4 + $0x520] sm:$0xff]
    %v312 = vld [vmem:[#allocation4 + $0x528] sm:$0xff]
    %v313 = vld [vmem:[#allocation4 + $0x530] sm:$0xff]
    %v314 = vld [vmem:[#allocation4 + $0x538] sm:$0xff]
    %v315 = vld [vmem:[#allocation4 + $0x540] sm:$0xff]
    %v316 = vld [vmem:[#allocation4 + $0x548] sm:$0xff]
    %v317 = vld [vmem:[#allocation4 + $0x550] sm:$0xff]
    %v318 = vld [vmem:[#allocation4 + $0x558] sm:$0xff]
    %v319 = vld [vmem:[#allocation4 + $0x560] sm:$0xff]
    %v320 = vld [vmem:[#allocation4 + $0x568] sm:$0xff]
    %v321 = vld [vmem:[#allocation4 + $0x570] sm:$0xff]
    %v322 = vld [vmem:[#allocation4 + $0x578] sm:$0xff]
    %v323 = vld [vmem:[#allocation4 + $0x580] sm:$0xff]
    %v324 = vld [vmem:[#allocation4 + $0x588] sm:$0xff]
    %v325 = vld [vmem:[#allocation4 + $0x590] sm:$0xff]
    %v326 = vld [vmem:[#allocation4 + $0x598] sm:$0xff]
    %v327 = vld [vmem:[#allocation4 + $0x5a0] sm:$0xff]
    %v328 = vld [vmem:[#allocation4 + $0x5a8] sm:$0xff]
    %v329 = vld [vmem:[#allocation4 + $0x5b0] sm:$0xff]
    %v330 = vld [vmem:[#allocation4 + $0x5b8] sm:$0xff]
    %v331 = vld [vmem:[#allocation4 + $0x5c0] sm:$0xff]
    %v332 = vld [vmem:[#allocation4 + $0x5c8] sm:$0xff]
    %v333 = vld [vmem:[#allocation4 + $0x5d0] sm:$0xff]
    %v334 = vld [vmem:[#allocation4 + $0x5d8] sm:$0xff]
    %v335 = vld [vmem:[#allocation4 + $0x5e0] sm:$0xff]
    %v336 = vld [vmem:[#allocation4 + $0x5e8] sm:$0xff]
    %v337 = vld [vmem:[#allocation4 + $0x5f0] sm:$0xff]
    %v338 = vld [vmem:[#allocation4 + $0x5f8] sm:$0xff]
    %v339 = vld [vmem:[#allocation4 + $0x600] sm:$0xff]
    %v340 = vld [vmem:[#allocation4 + $0x608] sm:$0xff]
    %v341 = vld [vmem:[#allocation4 + $0x610] sm:$0xff]
    %v342 = vld [vmem:[#allocation4 + $0x618] sm:$0xff]
    %v343 = vld [vmem:[#allocation4 + $0x620] sm:$0xff]
    %v344 = vld [vmem:[#allocation4 + $0x628] sm:$0xff]
    %v345 = vld [vmem:[#allocation4 + $0x630] sm:$0xff]
    %v346 = vld [vmem:[#allocation4 + $0x638] sm:$0xff]
    %v347 = vld [vmem:[#allocation4 + $0x640] sm:$0xff]
    %v348 = vld [vmem:[#allocation4 + $0x648] sm:$0xff]
    %v349 = vld [vmem:[#allocation4 + $0x650] sm:$0xff]
    %v350 = vld [vmem:[#allocation4 + $0x658] sm:$0xff]
    %v351 = vld [vmem:[#allocation4 + $0x660] sm:$0xff]
    %v352 = vld [vmem:[#allocation4 + $0x668] sm:$0xff]
    %v353 = vld [vmem:[#allocation4 + $0x670] sm:$0xff]
    %v354 = vld [vmem:[#allocation4 + $0x678] sm:$0xff]
    %v355 = vld [vmem:[#allocation4 + $0x680] sm:$0xff]
    %v356 = vld [vmem:[#allocation4 + $0x688] sm:$0xff]
    %v357 = vld [vmem:[#allocation4 + $0x690] sm:$0xff]
    %v358 = vld [vmem:[#allocation4 + $0x698] sm:$0xff]
    %v359 = vld [vmem:[#allocation4 + $0x6a0] sm:$0xff]
    %v360 = vld [vmem:[#allocation4 + $0x6a8] sm:$0xff]
    %v361 = vld [vmem:[#allocation4 + $0x6b0] sm:$0xff]
    %v362 = vld [vmem:[#allocation4 + $0x6b8] sm:$0xff]
    %v363 = vld [vmem:[#allocation4 + $0x6c0] sm:$0xff]
    %v364 = vld [vmem:[#allocation4 + $0x6c8] sm:$0xff]
    %v365 = vld [vmem:[#allocation4 + $0x6d0] sm:$0xff]
    %v366 = vld [vmem:[#allocation4 + $0x6d8] sm:$0xff]
    %v367 = vld [vmem:[#allocation4 + $0x6e0] sm:$0xff]
    %v368 = vld [vmem:[#allocation4 + $0x6e8] sm:$0xff]
    %v369 = vld [vmem:[#allocation4 + $0x6f0] sm:$0xff]
    %v370 = vld [vmem:[#allocation4 + $0x6f8] sm:$0xff]
    %v371 = vld [vmem:[#allocation4 + $0x700] sm:$0xff]
    %v372 = vld [vmem:[#allocation4 + $0x708] sm:$0xff]
    %v373 = vld [vmem:[#allocation4 + $0x710] sm:$0xff]
    %v374 = vld [vmem:[#allocation4 + $0x718] sm:$0xff]
    %v375 = vld [vmem:[#allocation4 + $0x720] sm:$0xff]
    %v376 = vld [vmem:[#allocation4 + $0x728] sm:$0xff]
    %v377 = vld [vmem:[#allocation4 + $0x730] sm:$0xff]
    %v378 = vld [vmem:[#allocation4 + $0x738] sm:$0xff]
    %v379 = vld [vmem:[#allocation4 + $0x740] sm:$0xff]
    %v380 = vld [vmem:[#allocation4 + $0x748] sm:$0xff]
    %v381 = vld [vmem:[#allocation4 + $0x750] sm:$0xff]
    %v382 = vld [vmem:[#allocation4 + $0x758] sm:$0xff]
    %v383 = vld [vmem:[#allocation4 + $0x760] sm:$0xff]
    %v384 = vld [vmem:[#allocation4 + $0x768] sm:$0xff]
    %v385 = vld [vmem:[#allocation4 + $0x770] sm:$0xff]
    %v386 = vld [vmem:[#allocation4 + $0x778] sm:$0xff]
    %v387 = vld [vmem:[#allocation4 + $0x780] sm:$0xff]
    %v388 = vld [vmem:[#allocation4 + $0x788] sm:$0xff]
    %v389 = vld [vmem:[#allocation4 + $0x790] sm:$0xff]
    %v390 = vld [vmem:[#allocation4 + $0x798] sm:$0xff]
    %v391 = vld [vmem:[#allocation4 + $0x7a0] sm:$0xff]
    %v392 = vld [vmem:[#allocation4 + $0x7a8] sm:$0xff]
    %v393 = vld [vmem:[#allocation4 + $0x7b0] sm:$0xff]
    %v394 = vld [vmem:[#allocation4 + $0x7b8] sm:$0xff]
    %v395 = vld [vmem:[#allocation4 + $0x7c0] sm:$0xff]
    %v396 = vld [vmem:[#allocation4 + $0x7c8] sm:$0xff]
    %v397 = vld [vmem:[#allocation4 + $0x7d0] sm:$0xff]
    %v398 = vld [vmem:[#allocation4 + $0x7d8] sm:$0xff]
    %v399 = vld [vmem:[#allocation4 + $0x7e0] sm:$0xff]
    %v400 = vld [vmem:[#allocation4 + $0x7e8] sm:$0xff]
    %v401 = vld [vmem:[#allocation4 + $0x7f0] sm:$0xff]
    %v402 = vld [vmem:[#allocation4 + $0x7f8] sm:$0xff]
    %v403 = vld [vmem:[#allocation4 + $0x800] sm:$0xff]
    %v404 = vld [vmem:[#allocation4 + $0x808] sm:$0xff]
    %v405 = vld [vmem:[#allocation4 + $0x810] sm:$0xff]
    %v406 = vld [vmem:[#allocation4 + $0x818] sm:$0xff]
    %v407 = vld [vmem:[#allocation4 + $0x820] sm:$0xff]
    %v408 = vld [vmem:[#allocation4 + $0x828] sm:$0xff]
    %v409 = vld [vmem:[#allocation4 + $0x830] sm:$0xff]
    %v410 = vld [vmem:[#allocation4 + $0x838] sm:$0xff]
    %v411 = vld [vmem:[#allocation4 + $0x840] sm:$0xff]
    %v412 = vld [vmem:[#allocation4 + $0x848] sm:$0xff]
    %v413 = vld [vmem:[#allocation4 + $0x850] sm:$0xff]
    %v414 = vld [vmem:[#allocation4 + $0x858] sm:$0xff]
    %v415 = vld [vmem:[#allocation4 + $0x860] sm:$0xff]
    %v416 = vld [vmem:[#allocation4 + $0x868] sm:$0xff]
    %v417 = vld [vmem:[#allocation4 + $0x870] sm:$0xff]
    %v418 = vld [vmem:[#allocation4 + $0x878] sm:$0xff]
    %v419 = vld [vmem:[#allocation4 + $0x880] sm:$0xff]
    %v420 = vld [vmem:[#allocation4 + $0x888] sm:$0xff]
    %v421 = vld [vmem:[#allocation4 + $0x890] sm:$0xff]
    %v422 = vld [vmem:[#allocation4 + $0x898] sm:$0xff]
    %v423 = vld [vmem:[#allocation4 + $0x8a0] sm:$0xff]
    %v424 = vld [vmem:[#allocation4 + $0x8a8] sm:$0xff]
    %v425 = vld [vmem:[#allocation4 + $0x8b0] sm:$0xff]
    %v426 = vld [vmem:[#allocation4 + $0x8b8] sm:$0xff]
    %v427 = vld [vmem:[#allocation4 + $0x8c0] sm:$0xff]
    %v428 = vld [vmem:[#allocation4 + $0x8c8] sm:$0xff]
    %v429 = vld [vmem:[#allocation4 + $0x8d0] sm:$0xff]
    %v430 = vld [vmem:[#allocation4 + $0x8d8] sm:$0xff]
    %v431 = vld [vmem:[#allocation4 + $0x8e0] sm:$0xff]
    %v432 = vld [vmem:[#allocation4 + $0x8e8] sm:$0xff]
    %v433 = vld [vmem:[#allocation4 + $0x8f0] sm:$0xff]
    %v434 = vld [vmem:[#allocation4 + $0x8f8] sm:$0xff]
    %v435 = vld [vmem:[#allocation4 + $0x900] sm:$0xff]
    %v436 = vld [vmem:[#allocation4 + $0x908] sm:$0xff]
    %v437 = vld [vmem:[#allocation4 + $0x910] sm:$0xff]
    %v438 = vld [vmem:[#allocation4 + $0x918] sm:$0xff]
    %v439 = vld [vmem:[#allocation4 + $0x920] sm:$0xff]
    %v440 = vld [vmem:[#allocation4 + $0x928] sm:$0xff]
    %v441 = vld [vmem:[#allocation4 + $0x930] sm:$0xff]
    %v442 = vld [vmem:[#allocation4 + $0x938] sm:$0xff]
    %v443 = vld [vmem:[#allocation4 + $0x940] sm:$0xff]
    %v444 = vld [vmem:[#allocation4 + $0x948] sm:$0xff]
    %v445 = vld [vmem:[#allocation4 + $0x950] sm:$0xff]
    %v446 = vld [vmem:[#allocation4 + $0x958] sm:$0xff]
    %v447 = vld [vmem:[#allocation4 + $0x960] sm:$0xff]
    %v448 = vld [vmem:[#allocation4 + $0x968] sm:$0xff]
    %v449 = vld [vmem:[#allocation4 + $0x970] sm:$0xff]
    %v450 = vld [vmem:[#allocation4 + $0x978] sm:$0xff]
    %v451 = vld [vmem:[#allocation4 + $0x980] sm:$0xff]
    %v452 = vld [vmem:[#allocation4 + $0x988] sm:$0xff]
    %v453 = vld [vmem:[#allocation4 + $0x990] sm:$0xff]
    %v454 = vld [vmem:[#allocation4 + $0x998] sm:$0xff]
    %v455 = vld [vmem:[#allocation4 + $0x9a0] sm:$0xff]
    %v456 = vld [vmem:[#allocation4 + $0x9a8] sm:$0xff]
    %v457 = vld [vmem:[#allocation4 + $0x9b0] sm:$0xff]
    %v458 = vld [vmem:[#allocation4 + $0x9b8] sm:$0xff]
    %v459 = vld [vmem:[#allocation4 + $0x9c0] sm:$0xff]
    %v460 = vld [vmem:[#allocation4 + $0x9c8] sm:$0xff]
    %v461 = vld [vmem:[#allocation4 + $0x9d0] sm:$0xff]
    %v462 = vld [vmem:[#allocation4 + $0x9d8] sm:$0xff]
    %v463 = vld [vmem:[#allocation4 + $0x9e0] sm:$0xff]
    %v464 = vld [vmem:[#allocation4 + $0x9e8] sm:$0xff]
    %v465 = vld [vmem:[#allocation4 + $0x9f0] sm:$0xff]
    %v466 = vld [vmem:[#allocation4 + $0x9f8] sm:$0xff]
    %v467 = vld [vmem:[#allocation4 + $0xa00] sm:$0xff]
    %v468 = vld [vmem:[#allocation4 + $0xa08] sm:$0xff]
    %v469 = vld [vmem:[#allocation4 + $0xa10] sm:$0xff]
    %v470 = vld [vmem:[#allocation4 + $0xa18] sm:$0xff]
    %v471 = vld [vmem:[#allocation4 + $0xa20] sm:$0xff]
    %v472 = vld [vmem:[#allocation4 + $0xa28] sm:$0xff]
    %v473 = vld [vmem:[#allocation4 + $0xa30] sm:$0xff]
    %v474 = vld [vmem:[#allocation4 + $0xa38] sm:$0xff]
    %v475 = vld [vmem:[#allocation4 + $0xa40] sm:$0xff]
    %v476 = vld [vmem:[#allocation4 + $0xa48] sm:$0xff]
    %v477 = vld [vmem:[#allocation4 + $0xa50] sm:$0xff]
    %v478 = vld [vmem:[#allocation4 + $0xa58] sm:$0xff]
    %v479 = vld [vmem:[#allocation4 + $0xa60] sm:$0xff]
    %v480 = vld [vmem:[#allocation4 + $0xa68] sm:$0xff]
    %v481 = vld [vmem:[#allocation4 + $0xa70] sm:$0xff]
    %v482 = vld [vmem:[#allocation4 + $0xa78] sm:$0xff]
    %v483 = vld [vmem:[#allocation4 + $0xa80] sm:$0xff]
    %v484 = vld [vmem:[#allocation4 + $0xa88] sm:$0xff]
    %v485 = vld [vmem:[#allocation4 + $0xa90] sm:$0xff]
    %v486 = vld [vmem:[#allocation4 + $0xa98] sm:$0xff]
    %v487 = vld [vmem:[#allocation4 + $0xaa0] sm:$0xff]
    %v488 = vld [vmem:[#allocation4 + $0xaa8] sm:$0xff]
    %v489 = vld [vmem:[#allocation4 + $0xab0] sm:$0xff]
    %v490 = vld [vmem:[#allocation4 + $0xab8] sm:$0xff]
    %v491 = vld [vmem:[#allocation4 + $0xac0] sm:$0xff]
    %v492 = vld [vmem:[#allocation4 + $0xac8] sm:$0xff]
    %v493 = vld [vmem:[#allocation4 + $0xad0] sm:$0xff]
    %v494 = vld [vmem:[#allocation4 + $0xad8] sm:$0xff]
    %v495 = vld [vmem:[#allocation4 + $0xae0] sm:$0xff]
    %v496 = vld [vmem:[#allocation4 + $0xae8] sm:$0xff]
    %v497 = vld [vmem:[#allocation4 + $0xaf0] sm:$0xff]
    %v498 = vld [vmem:[#allocation4 + $0xaf8] sm:$0xff]
    %v499 = vld [vmem:[#allocation4 + $0xb00] sm:$0xff]
    %v500 = vld [vmem:[#allocation4 + $0xb08] sm:$0xff]
    %v501 = vld [vmem:[#allocation4 + $0xb10] sm:$0xff]
    %v502 = vld [vmem:[#allocation4 + $0xb18] sm:$0xff]
    %v503 = vld [vmem:[#allocation4 + $0xb20] sm:$0xff]
    %v504 = vld [vmem:[#allocation4 + $0xb28] sm:$0xff]
    %v505 = vld [vmem:[#allocation4 + $0xb30] sm:$0xff]
    %v506 = vld [vmem:[#allocation4 + $0xb38] sm:$0xff]
    %v507 = vld [vmem:[#allocation4 + $0xb40] sm:$0xff]
    %v508 = vld [vmem:[#allocation4 + $0xb48] sm:$0xff]
    %v509 = vld [vmem:[#allocation4 + $0xb50] sm:$0xff]
    %v510 = vld [vmem:[#allocation4 + $0xb58] sm:$0xff]
    %v511 = vld [vmem:[#allocation4 + $0xb60] sm:$0xff]
    %v512 = vld [vmem:[#allocation4 + $0xb68] sm:$0xff]
    %v513 = vld [vmem:[#allocation4 + $0xb70] sm:$0xff]
    %v514 = vld [vmem:[#allocation4 + $0xb78] sm:$0xff]
    %v515 = vld [vmem:[#allocation4 + $0xb80] sm:$0xff]
    %v516 = vld [vmem:[#allocation4 + $0xb88] sm:$0xff]
    %v517 = vld [vmem:[#allocation4 + $0xb90] sm:$0xff]
    %v518 = vld [vmem:[#allocation4 + $0xb98] sm:$0xff]
    %v519 = vld [vmem:[#allocation4 + $0xba0] sm:$0xff]
    %v520 = vld [vmem:[#allocation4 + $0xba8] sm:$0xff]
    %v521 = vld [vmem:[#allocation4 + $0xbb0] sm:$0xff]
    %v522 = vld [vmem:[#allocation4 + $0xbb8] sm:$0xff]
    %v523 = vld [vmem:[#allocation4 + $0xbc0] sm:$0xff]
    %v524 = vld [vmem:[#allocation4 + $0xbc8] sm:$0xff]
    %v525 = vld [vmem:[#allocation4 + $0xbd0] sm:$0xff]
    %v526 = vld [vmem:[#allocation4 + $0xbd8] sm:$0xff]
    %v527 = vld [vmem:[#allocation4 + $0xbe0] sm:$0xff]
    %v528 = vld [vmem:[#allocation4 + $0xbe8] sm:$0xff]
    %v529 = vld [vmem:[#allocation4 + $0xbf0] sm:$0xff]
    %v530 = vld [vmem:[#allocation4 + $0xbf8] sm:$0xff]
    %v531 = vld [vmem:[#allocation4 + $0xc00] sm:$0xff]
    %v532 = vld [vmem:[#allocation4 + $0xc08] sm:$0xff]
    %v533 = vld [vmem:[#allocation4 + $0xc10] sm:$0xff]
    %v534 = vld [vmem:[#allocation4 + $0xc18] sm:$0xff]
    %v535 = vld [vmem:[#allocation4 + $0xc20] sm:$0xff]
    %v536 = vld [vmem:[#allocation4 + $0xc28] sm:$0xff]
    %v537 = vld [vmem:[#allocation4 + $0xc30] sm:$0xff]
    %v538 = vld [vmem:[#allocation4 + $0xc38] sm:$0xff]
    %v539 = vld [vmem:[#allocation4 + $0xc40] sm:$0xff]
    %v540 = vld [vmem:[#allocation4 + $0xc48] sm:$0xff]
    %v541 = vld [vmem:[#allocation4 + $0xc50] sm:$0xff]
    %v542 = vld [vmem:[#allocation4 + $0xc58] sm:$0xff]
    %v543 = vld [vmem:[#allocation4 + $0xc60] sm:$0xff]
    %v544 = vld [vmem:[#allocation4 + $0xc68] sm:$0xff]
    %v545 = vld [vmem:[#allocation4 + $0xc70] sm:$0xff]
    %v546 = vld [vmem:[#allocation4 + $0xc78] sm:$0xff]
    %v547 = vld [vmem:[#allocation4 + $0xc80] sm:$0xff]
    %v548 = vld [vmem:[#allocation4 + $0xc88] sm:$0xff]
    %v549 = vld [vmem:[#allocation4 + $0xc90] sm:$0xff]
    %v550 = vld [vmem:[#allocation4 + $0xc98] sm:$0xff]
    %v551 = vld [vmem:[#allocation4 + $0xca0] sm:$0xff]
    %v552 = vld [vmem:[#allocation4 + $0xca8] sm:$0xff]
    %v553 = vld [vmem:[#allocation4 + $0xcb0] sm:$0xff]
    %v554 = vld [vmem:[#allocation4 + $0xcb8] sm:$0xff]
    %v555 = vld [vmem:[#allocation4 + $0xcc0] sm:$0xff]
    %v556 = vld [vmem:[#allocation4 + $0xcc8] sm:$0xff]
    %v557 = vld [vmem:[#allocation4 + $0xcd0] sm:$0xff]
    %v558 = vld [vmem:[#allocation4 + $0xcd8] sm:$0xff]
    %v559 = vld [vmem:[#allocation4 + $0xce0] sm:$0xff]
    %v560 = vld [vmem:[#allocation4 + $0xce8] sm:$0xff]
    %v561 = vld [vmem:[#allocation4 + $0xcf0] sm:$0xff]
    %v562 = vld [vmem:[#allocation4 + $0xcf8] sm:$0xff]
    %v563 = vld [vmem:[#allocation4 + $0xd00] sm:$0xff]
    %v564 = vld [vmem:[#allocation4 + $0xd08] sm:$0xff]
    %v565 = vld [vmem:[#allocation4 + $0xd10] sm:$0xff]
    %v566 = vld [vmem:[#allocation4 + $0xd18] sm:$0xff]
    %v567 = vld [vmem:[#allocation4 + $0xd20] sm:$0xff]
    %v568 = vld [vmem:[#allocation4 + $0xd28] sm:$0xff]
    %v569 = vld [vmem:[#allocation4 + $0xd30] sm:$0xff]
    %v570 = vld [vmem:[#allocation4 + $0xd38] sm:$0xff]
    %v571 = vld [vmem:[#allocation4 + $0xd40] sm:$0xff]
    %v572 = vld [vmem:[#allocation4 + $0xd48] sm:$0xff]
    %v573 = vld [vmem:[#allocation4 + $0xd50] sm:$0xff]
    %v574 = vld [vmem:[#allocation4 + $0xd58] sm:$0xff]
    %v575 = vld [vmem:[#allocation4 + $0xd60] sm:$0xff]
    %v576 = vld [vmem:[#allocation4 + $0xd68] sm:$0xff]
    %v577 = vld [vmem:[#allocation4 + $0xd70] sm:$0xff]
    %v578 = vld [vmem:[#allocation4 + $0xd78] sm:$0xff]
    %v579 = vld [vmem:[#allocation4 + $0xd80] sm:$0xff]
    %v580 = vld [vmem:[#allocation4 + $0xd88] sm:$0xff]
    %v581 = vld [vmem:[#allocation4 + $0xd90] sm:$0xff]
    %v582 = vld [vmem:[#allocation4 + $0xd98] sm:$0xff]
    %v583 = vld [vmem:[#allocation4 + $0xda0] sm:$0xff]
    %v584 = vld [vmem:[#allocation4 + $0xda8] sm:$0xff]
    %v585 = vld [vmem:[#allocation4 + $0xdb0] sm:$0xff]
    %v586 = vld [vmem:[#allocation4 + $0xdb8] sm:$0xff]
    %v587 = vld [vmem:[#allocation4 + $0xdc0] sm:$0xff]
    %v588 = vld [vmem:[#allocation4 + $0xdc8] sm:$0xff]
    %v589 = vld [vmem:[#allocation4 + $0xdd0] sm:$0xff]
    %v590 = vld [vmem:[#allocation4 + $0xdd8] sm:$0xff]
    %v591 = vld [vmem:[#allocation4 + $0xde0] sm:$0xff]
    %v592 = vld [vmem:[#allocation4 + $0xde8] sm:$0xff]
    %v593 = vld [vmem:[#allocation4 + $0xdf0] sm:$0xff]
    %v594 = vld [vmem:[#allocation4 + $0xdf8] sm:$0xff]
    %v595 = vld [vmem:[#allocation4 + $0xe00] sm:$0xff]
    %v596 = vld [vmem:[#allocation4 + $0xe08] sm:$0xff]
    %v597 = vld [vmem:[#allocation4 + $0xe10] sm:$0xff]
    %v598 = vld [vmem:[#allocation4 + $0xe18] sm:$0xff]
    %v599 = vld [vmem:[#allocation4 + $0xe20] sm:$0xff]
    %v600 = vld [vmem:[#allocation4 + $0xe28] sm:$0xff]
    %v601 = vld [vmem:[#allocation4 + $0xe30] sm:$0xff]
    %v602 = vld [vmem:[#allocation4 + $0xe38] sm:$0xff]
    %v603 = vld [vmem:[#allocation4 + $0xe40] sm:$0xff]
    %v604 = vld [vmem:[#allocation4 + $0xe48] sm:$0xff]
    %v605 = vld [vmem:[#allocation4 + $0xe50] sm:$0xff]
    %v606 = vld [vmem:[#allocation4 + $0xe58] sm:$0xff]
    %v607 = vld [vmem:[#allocation4 + $0xe60] sm:$0xff]
    %v608 = vld [vmem:[#allocation4 + $0xe68] sm:$0xff]
    %v609 = vld [vmem:[#allocation4 + $0xe70] sm:$0xff]
    %v610 = vld [vmem:[#allocation4 + $0xe78] sm:$0xff]
    %v611 = vld [vmem:[#allocation4 + $0xe80] sm:$0xff]
    %v612 = vld [vmem:[#allocation4 + $0xe88] sm:$0xff]
    %v613 = vld [vmem:[#allocation4 + $0xe90] sm:$0xff]
    %v614 = vld [vmem:[#allocation4 + $0xe98] sm:$0xff]
    %v615 = vld [vmem:[#allocation4 + $0xea0] sm:$0xff]
    %v616 = vld [vmem:[#allocation4 + $0xea8] sm:$0xff]
    %v617 = vld [vmem:[#allocation4 + $0xeb0] sm:$0xff]
    %v618 = vld [vmem:[#allocation4 + $0xeb8] sm:$0xff]
    %v619 = vld [vmem:[#allocation4 + $0xec0] sm:$0xff]
    %v620 = vld [vmem:[#allocation4 + $0xec8] sm:$0xff]
    %v621 = vld [vmem:[#allocation4 + $0xed0] sm:$0xff]
    %v622 = vld [vmem:[#allocation4 + $0xed8] sm:$0xff]
    %v623 = vld [vmem:[#allocation4 + $0xee0] sm:$0xff]
    %v624 = vld [vmem:[#allocation4 + $0xee8] sm:$0xff]
    %v625 = vld [vmem:[#allocation4 + $0xef0] sm:$0xff]
    %v626 = vld [vmem:[#allocation4 + $0xef8] sm:$0xff]
    %v627 = vld [vmem:[#allocation4 + $0xf00] sm:$0xff]
    %v628 = vld [vmem:[#allocation4 + $0xf08] sm:$0xff]
    %v629 = vld [vmem:[#allocation4 + $0xf10] sm:$0xff]
    %v630 = vld [vmem:[#allocation4 + $0xf18] sm:$0xff]
    %v631 = vld [vmem:[#allocation4 + $0xf20] sm:$0xff]
    %v632 = vld [vmem:[#allocation4 + $0xf28] sm:$0xff]
    %v633 = vld [vmem:[#allocation4 + $0xf30] sm:$0xff]
    %v634 = vld [vmem:[#allocation4 + $0xf38] sm:$0xff]
    %v635 = vld [vmem:[#allocation4 + $0xf40] sm:$0xff]
    %v636 = vld [vmem:[#allocation4 + $0xf48] sm:$0xff]
    %v637 = vld [vmem:[#allocation4 + $0xf50] sm:$0xff]
    %v638 = vld [vmem:[#allocation4 + $0xf58] sm:$0xff]
    %v639 = vld [vmem:[#allocation4 + $0xf60] sm:$0xff]
    %v640 = vld [vmem:[#allocation4 + $0xf68] sm:$0xff]
    %v641 = vld [vmem:[#allocation4 + $0xf70] sm:$0xff]
    %v642 = vld [vmem:[#allocation4 + $0xf78] sm:$0xff]
    %v643 = vld [vmem:[#allocation4 + $0xf80] sm:$0xff]
    %v644 = vld [vmem:[#allocation4 + $0xf88] sm:$0xff]
    %v645 = vld [vmem:[#allocation4 + $0xf90] sm:$0xff]
    %v646 = vld [vmem:[#allocation4 + $0xf98] sm:$0xff]
    %v647 = vld [vmem:[#allocation4 + $0xfa0] sm:$0xff]
    %v648 = vld [vmem:[#allocation4 + $0xfa8] sm:$0xff]
    %v649 = vld [vmem:[#allocation4 + $0xfb0] sm:$0xff]
    %v650 = vld [vmem:[#allocation4 + $0xfb8] sm:$0xff]
    %v651 = vld [vmem:[#allocation4 + $0xfc0] sm:$0xff]
    %v652 = vld [vmem:[#allocation4 + $0xfc8] sm:$0xff]
    %v653 = vld [vmem:[#allocation4 + $0xfd0] sm:$0xff]
    %v654 = vld [vmem:[#allocation4 + $0xfd8] sm:$0xff]
    %v655 = vld [vmem:[#allocation4 + $0xfe0] sm:$0xff]
    %v656 = vld [vmem:[#allocation4 + $0xfe8] sm:$0xff]
    %v657 = vld [vmem:[#allocation4 + $0xff0] sm:$0xff]
    %v658 = vld [vmem:[#allocation4 + $0xff8] sm:$0xff]
    %v659 = vld [vmem:[#allocation4 + $0x1000] sm:$0xff]
    %v660 = vld [vmem:[#allocation4 + $0x1008] sm:$0xff]
    %v661 = vld [vmem:[#allocation4 + $0x1010] sm:$0xff]
    %v662 = vld [vmem:[#allocation4 + $0x1018] sm:$0xff]
    %v663 = vld [vmem:[#allocation4 + $0x1020] sm:$0xff]
    %v664 = vld [vmem:[#allocation4 + $0x1028] sm:$0xff]
    %v665 = vld [vmem:[#allocation4 + $0x1030] sm:$0xff]
    %v666 = vld [vmem:[#allocation4 + $0x1038] sm:$0xff]
    %v667 = vld [vmem:[#allocation4 + $0x1040] sm:$0xff]
    %v668 = vld [vmem:[#allocation4 + $0x1048] sm:$0xff]
    %v669 = vld [vmem:[#allocation4 + $0x1050] sm:$0xff]
    %v670 = vld [vmem:[#allocation4 + $0x1058] sm:$0xff]
    %v671 = vld [vmem:[#allocation4 + $0x1060] sm:$0xff]
    %v672 = vld [vmem:[#allocation4 + $0x1068] sm:$0xff]
    %v673 = vld [vmem:[#allocation4 + $0x1070] sm:$0xff]
    %v674 = vld [vmem:[#allocation4 + $0x1078] sm:$0xff]
    %v675 = vld [vmem:[#allocation4 + $0x1080] sm:$0xff]
    %v676 = vld [vmem:[#allocation4 + $0x1088] sm:$0xff]
    %v677 = vld [vmem:[#allocation4 + $0x1090] sm:$0xff]
    %v678 = vld [vmem:[#allocation4 + $0x1098] sm:$0xff]
    %v679 = vld [vmem:[#allocation4 + $0x10a0] sm:$0xff]
    %v680 = vld [vmem:[#allocation4 + $0x10a8] sm:$0xff]
    %v681 = vld [vmem:[#allocation4 + $0x10b0] sm:$0xff]
    %v682 = vld [vmem:[#allocation4 + $0x10b8] sm:$0xff]
    %v683 = vld [vmem:[#allocation4 + $0x10c0] sm:$0xff]
    %v684 = vld [vmem:[#allocation4 + $0x10c8] sm:$0xff]
    %v685 = vld [vmem:[#allocation4 + $0x10d0] sm:$0xff]
    %v686 = vld [vmem:[#allocation4 + $0x10d8] sm:$0xff]
    %v687 = vld [vmem:[#allocation4 + $0x10e0] sm:$0xff]
    %v688 = vld [vmem:[#allocation4 + $0x10e8] sm:$0xff]
    %v689 = vld [vmem:[#allocation4 + $0x10f0] sm:$0xff]
    %v690 = vld [vmem:[#allocation4 + $0x10f8] sm:$0xff]
    %v691 = vld [vmem:[#allocation4 + $0x1100] sm:$0xff]
    %v692 = vld [vmem:[#allocation4 + $0x1108] sm:$0xff]
    %v693 = vld [vmem:[#allocation4 + $0x1110] sm:$0xff]
    %v694 = vld [vmem:[#allocation4 + $0x1118] sm:$0xff]
    %v695 = vld [vmem:[#allocation4 + $0x1120] sm:$0xff]
    %v696 = vld [vmem:[#allocation4 + $0x1128] sm:$0xff]
    %v697 = vld [vmem:[#allocation4 + $0x1130] sm:$0xff]
    %v698 = vld [vmem:[#allocation4 + $0x1138] sm:$0xff]
    %v699 = vld [vmem:[#allocation4 + $0x1140] sm:$0xff]
    %v700 = vld [vmem:[#allocation4 + $0x1148] sm:$0xff]
    %v701 = vld [vmem:[#allocation4 + $0x1150] sm:$0xff]
    %v702 = vld [vmem:[#allocation4 + $0x1158] sm:$0xff]
    %v703 = vld [vmem:[#allocation4 + $0x1160] sm:$0xff]
    %v704 = vld [vmem:[#allocation4 + $0x1168] sm:$0xff]
    %v705 = vld [vmem:[#allocation4 + $0x1170] sm:$0xff]
    %v706 = vld [vmem:[#allocation4 + $0x1178] sm:$0xff]
    %v707 = vld [vmem:[#allocation4 + $0x1180] sm:$0xff]
    %v708 = vld [vmem:[#allocation4 + $0x1188] sm:$0xff]
    %v709 = vld [vmem:[#allocation4 + $0x1190] sm:$0xff]
    %v710 = vld [vmem:[#allocation4 + $0x1198] sm:$0xff]
    %v711 = vld [vmem:[#allocation4 + $0x11a0] sm:$0xff]
    %v712 = vld [vmem:[#allocation4 + $0x11a8] sm:$0xff]
    %v713 = vld [vmem:[#allocation4 + $0x11b0] sm:$0xff]
    %v714 = vld [vmem:[#allocation4 + $0x11b8] sm:$0xff]
    %v715 = vld [vmem:[#allocation4 + $0x11c0] sm:$0xff]
    %v716 = vld [vmem:[#allocation4 + $0x11c8] sm:$0xff]
    %v717 = vld [vmem:[#allocation4 + $0x11d0] sm:$0xff]
    %v718 = vld [vmem:[#allocation4 + $0x11d8] sm:$0xff]
    %v719 = vld [vmem:[#allocation4 + $0x11e0] sm:$0xff]
    %v720 = vld [vmem:[#allocation4 + $0x11e8] sm:$0xff]
    %v721 = vld [vmem:[#allocation4 + $0x11f0] sm:$0xff]
    %v722 = vld [vmem:[#allocation4 + $0x11f8] sm:$0xff]
    %v723 = vld [vmem:[#allocation4 + $0x1200] sm:$0xff]
    %v724 = vld [vmem:[#allocation4 + $0x1208] sm:$0xff]
    %v725 = vld [vmem:[#allocation4 + $0x1210] sm:$0xff]
    %v726 = vld [vmem:[#allocation4 + $0x1218] sm:$0xff]
    %v727 = vld [vmem:[#allocation4 + $0x1220] sm:$0xff]
    %v728 = vld [vmem:[#allocation4 + $0x1228] sm:$0xff]
    %v729 = vld [vmem:[#allocation4 + $0x1230] sm:$0xff]
    %v730 = vld [vmem:[#allocation4 + $0x1238] sm:$0xff]
    %v731 = vld [vmem:[#allocation4 + $0x1240] sm:$0xff]
    %v732 = vld [vmem:[#allocation4 + $0x1248] sm:$0xff]
    %v733 = vld [vmem:[#allocation4 + $0x1250] sm:$0xff]
    %v734 = vld [vmem:[#allocation4 + $0x1258] sm:$0xff]
    %v735 = vld [vmem:[#allocation4 + $0x1260] sm:$0xff]
    %v736 = vld [vmem:[#allocation4 + $0x1268] sm:$0xff]
    %v737 = vld [vmem:[#allocation4 + $0x1270] sm:$0xff]
    %v738 = vld [vmem:[#allocation4 + $0x1278] sm:$0xff]
    %v739 = vld [vmem:[#allocation4 + $0x1280] sm:$0xff]
    %v740 = vld [vmem:[#allocation4 + $0x1288] sm:$0xff]
    %v741 = vld [vmem:[#allocation4 + $0x1290] sm:$0xff]
    %v742 = vld [vmem:[#allocation4 + $0x1298] sm:$0xff]
    %v743 = vld [vmem:[#allocation4 + $0x12a0] sm:$0xff]
    %v744 = vld [vmem:[#allocation4 + $0x12a8] sm:$0xff]
    %v745 = vld [vmem:[#allocation4 + $0x12b0] sm:$0xff]
    %v746 = vld [vmem:[#allocation4 + $0x12b8] sm:$0xff]
    %v747 = vld [vmem:[#allocation4 + $0x12c0] sm:$0xff]
    %v748 = vld [vmem:[#allocation4 + $0x12c8] sm:$0xff]
    %v749 = vld [vmem:[#allocation4 + $0x12d0] sm:$0xff]
    %v750 = vld [vmem:[#allocation4 + $0x12d8] sm:$0xff]
    %v751 = vld [vmem:[#allocation4 + $0x12e0] sm:$0xff]
    %v752 = vld [vmem:[#allocation4 + $0x12e8] sm:$0xff]
    %v753 = vld [vmem:[#allocation4 + $0x12f0] sm:$0xff]
    %v754 = vld [vmem:[#allocation4 + $0x12f8] sm:$0xff]
    %v755 = vld [vmem:[#allocation4 + $0x1300] sm:$0xff]
    %v756 = vld [vmem:[#allocation4 + $0x1308] sm:$0xff]
    %v757 = vld [vmem:[#allocation4 + $0x1310] sm:$0xff]
    %v758 = vld [vmem:[#allocation4 + $0x1318] sm:$0xff]
    %v759 = vld [vmem:[#allocation4 + $0x1320] sm:$0xff]
    %v760 = vld [vmem:[#allocation4 + $0x1328] sm:$0xff]
    %v761 = vld [vmem:[#allocation4 + $0x1330] sm:$0xff]
    %v762 = vld [vmem:[#allocation4 + $0x1338] sm:$0xff]
    %v763 = vld [vmem:[#allocation4 + $0x1340] sm:$0xff]
    %v764 = vld [vmem:[#allocation4 + $0x1348] sm:$0xff]
    %v765 = vld [vmem:[#allocation4 + $0x1350] sm:$0xff]
    %v766 = vld [vmem:[#allocation4 + $0x1358] sm:$0xff]
    %v767 = vld [vmem:[#allocation4 + $0x1360] sm:$0xff]
    %v768 = vld [vmem:[#allocation4 + $0x1368] sm:$0xff]
    %v769 = vld [vmem:[#allocation4 + $0x1370] sm:$0xff]
    %v770 = vld [vmem:[#allocation4 + $0x1378] sm:$0xff]
    %v771 = vld [vmem:[#allocation4 + $0x1380] sm:$0xff]
    %v772 = vld [vmem:[#allocation4 + $0x1388] sm:$0xff]
    %v773 = vld [vmem:[#allocation4 + $0x1390] sm:$0xff]
    %v774 = vld [vmem:[#allocation4 + $0x1398] sm:$0xff]
    %v775 = vld [vmem:[#allocation4 + $0x13a0] sm:$0xff]
    %v776 = vld [vmem:[#allocation4 + $0x13a8] sm:$0xff]
    %v777 = vld [vmem:[#allocation4 + $0x13b0] sm:$0xff]
    %v778 = vld [vmem:[#allocation4 + $0x13b8] sm:$0xff]
    %v779 = vld [vmem:[#allocation4 + $0x13c0] sm:$0xff]
    %v780 = vld [vmem:[#allocation4 + $0x13c8] sm:$0xff]
    %v781 = vld [vmem:[#allocation4 + $0x13d0] sm:$0xff]
    %v782 = vld [vmem:[#allocation4 + $0x13d8] sm:$0xff]
    %v783 = vld [vmem:[#allocation4 + $0x13e0] sm:$0xff]
    %v784 = vld [vmem:[#allocation4 + $0x13e8] sm:$0xff]
    %v785 = vld [vmem:[#allocation4 + $0x13f0] sm:$0xff]
    %v786 = vld [vmem:[#allocation4 + $0x13f8] sm:$0xff]
    %v787 = vld [vmem:[#allocation4 + $0x1400] sm:$0xff]
    %v788 = vld [vmem:[#allocation4 + $0x1408] sm:$0xff]
    %v789 = vld [vmem:[#allocation4 + $0x1410] sm:$0xff]
    %v790 = vld [vmem:[#allocation4 + $0x1418] sm:$0xff]
    %v791 = vld [vmem:[#allocation4 + $0x1420] sm:$0xff]
    %v792 = vld [vmem:[#allocation4 + $0x1428] sm:$0xff]
    %v793 = vld [vmem:[#allocation4 + $0x1430] sm:$0xff]
    %v794 = vld [vmem:[#allocation4 + $0x1438] sm:$0xff]
    %v795 = vld [vmem:[#allocation4 + $0x1440] sm:$0xff]
    %v796 = vld [vmem:[#allocation4 + $0x1448] sm:$0xff]
    %v797 = vld [vmem:[#allocation4 + $0x1450] sm:$0xff]
    %v798 = vld [vmem:[#allocation4 + $0x1458] sm:$0xff]
    %v799 = vld [vmem:[#allocation4 + $0x1460] sm:$0xff]
    %v800 = vld [vmem:[#allocation4 + $0x1468] sm:$0xff]
    %v801 = vld [vmem:[#allocation4 + $0x1470] sm:$0xff]
    %v802 = vld [vmem:[#allocation4 + $0x1478] sm:$0xff]
    %v803 = vld [vmem:[#allocation4 + $0x1480] sm:$0xff]
    %v804 = vld [vmem:[#allocation4 + $0x1488] sm:$0xff]
    %v805 = vld [vmem:[#allocation4 + $0x1490] sm:$0xff]
    %v806 = vld [vmem:[#allocation4 + $0x1498] sm:$0xff]
    %v807 = vld [vmem:[#allocation4 + $0x14a0] sm:$0xff]
    %v808 = vld [vmem:[#allocation4 + $0x14a8] sm:$0xff]
    %v809 = vld [vmem:[#allocation4 + $0x14b0] sm:$0xff]
    %v810 = vld [vmem:[#allocation4 + $0x14b8] sm:$0xff]
    %v811 = vld [vmem:[#allocation4 + $0x14c0] sm:$0xff]
    %v812 = vld [vmem:[#allocation4 + $0x14c8] sm:$0xff]
    %v813 = vld [vmem:[#allocation4 + $0x14d0] sm:$0xff]
    %v814 = vld [vmem:[#allocation4 + $0x14d8] sm:$0xff]
    %v815 = vld [vmem:[#allocation4 + $0x14e0] sm:$0xff]
    %v816 = vld [vmem:[#allocation4 + $0x14e8] sm:$0xff]
    %v817 = vld [vmem:[#allocation4 + $0x14f0] sm:$0xff]
    %v818 = vld [vmem:[#allocation4 + $0x14f8] sm:$0xff]
    %v819 = vld [vmem:[#allocation4 + $0x1500] sm:$0xff]
    %v820 = vld [vmem:[#allocation4 + $0x1508] sm:$0xff]
    %v821 = vld [vmem:[#allocation4 + $0x1510] sm:$0xff]
    %v822 = vld [vmem:[#allocation4 + $0x1518] sm:$0xff]
    %v823 = vld [vmem:[#allocation4 + $0x1520] sm:$0xff]
    %v824 = vld [vmem:[#allocation4 + $0x1528] sm:$0xff]
    %v825 = vld [vmem:[#allocation4 + $0x1530] sm:$0xff]
    %v826 = vld [vmem:[#allocation4 + $0x1538] sm:$0xff]
    %v827 = vld [vmem:[#allocation4 + $0x1540] sm:$0xff]
    %v828 = vld [vmem:[#allocation4 + $0x1548] sm:$0xff]
    %v829 = vld [vmem:[#allocation4 + $0x1550] sm:$0xff]
    %v830 = vld [vmem:[#allocation4 + $0x1558] sm:$0xff]
    %v831 = vld [vmem:[#allocation4 + $0x1560] sm:$0xff]
    %v832 = vld [vmem:[#allocation4 + $0x1568] sm:$0xff]
    %v833 = vld [vmem:[#allocation4 + $0x1570] sm:$0xff]
    %v834 = vld [vmem:[#allocation4 + $0x1578] sm:$0xff]
    %v835 = vld [vmem:[#allocation4 + $0x1580] sm:$0xff]
    %v836 = vld [vmem:[#allocation4 + $0x1588] sm:$0xff]
    %v837 = vld [vmem:[#allocation4 + $0x1590] sm:$0xff]
    %v838 = vld [vmem:[#allocation4 + $0x1598] sm:$0xff]
    %v839 = vld [vmem:[#allocation4 + $0x15a0] sm:$0xff]
    %v840 = vld [vmem:[#allocation4 + $0x15a8] sm:$0xff]
    %v841 = vld [vmem:[#allocation4 + $0x15b0] sm:$0xff]
    %v842 = vld [vmem:[#allocation4 + $0x15b8] sm:$0xff]
    %v843 = vld [vmem:[#allocation4 + $0x15c0] sm:$0xff]
    %v844 = vld [vmem:[#allocation4 + $0x15c8] sm:$0xff]
    %v845 = vld [vmem:[#allocation4 + $0x15d0] sm:$0xff]
    %v846 = vld [vmem:[#allocation4 + $0x15d8] sm:$0xff]
    %v847 = vld [vmem:[#allocation4 + $0x15e0] sm:$0xff]
    %v848 = vld [vmem:[#allocation4 + $0x15e8] sm:$0xff]
    %v849 = vld [vmem:[#allocation4 + $0x15f0] sm:$0xff]
    %v850 = vld [vmem:[#allocation4 + $0x15f8] sm:$0xff]
    %v851 = vld [vmem:[#allocation4 + $0x1600] sm:$0xff]
    %v852 = vld [vmem:[#allocation4 + $0x1608] sm:$0xff]
    %v853 = vld [vmem:[#allocation4 + $0x1610] sm:$0xff]
    %v854 = vld [vmem:[#allocation4 + $0x1618] sm:$0xff]
    %v855 = vld [vmem:[#allocation4 + $0x1620] sm:$0xff]
    %v856 = vld [vmem:[#allocation4 + $0x1628] sm:$0xff]
    %v857 = vld [vmem:[#allocation4 + $0x1630] sm:$0xff]
    %v858 = vld [vmem:[#allocation4 + $0x1638] sm:$0xff]
    %v859 = vld [vmem:[#allocation4 + $0x1640] sm:$0xff]
    %v860 = vld [vmem:[#allocation4 + $0x1648] sm:$0xff]
    %v861 = vld [vmem:[#allocation4 + $0x1650] sm:$0xff]
    %v862 = vld [vmem:[#allocation4 + $0x1658] sm:$0xff]
    %v863 = vld [vmem:[#allocation4 + $0x1660] sm:$0xff]
    %v864 = vld [vmem:[#allocation4 + $0x1668] sm:$0xff]
    %v865 = vld [vmem:[#allocation4 + $0x1670] sm:$0xff]
    %v866 = vld [vmem:[#allocation4 + $0x1678] sm:$0xff]
    %v867 = vld [vmem:[#allocation4 + $0x1680] sm:$0xff]
    %v868 = vld [vmem:[#allocation4 + $0x1688] sm:$0xff]
    %v869 = vld [vmem:[#allocation4 + $0x1690] sm:$0xff]
    %v870 = vld [vmem:[#allocation4 + $0x1698] sm:$0xff]
    %v871 = vld [vmem:[#allocation4 + $0x16a0] sm:$0xff]
    %v872 = vld [vmem:[#allocation4 + $0x16a8] sm:$0xff]
    %v873 = vld [vmem:[#allocation4 + $0x16b0] sm:$0xff]
    %v874 = vld [vmem:[#allocation4 + $0x16b8] sm:$0xff]
    %v875 = vld [vmem:[#allocation4 + $0x16c0] sm:$0xff]
    %v876 = vld [vmem:[#allocation4 + $0x16c8] sm:$0xff]
    %v877 = vld [vmem:[#allocation4 + $0x16d0] sm:$0xff]
    %v878 = vld [vmem:[#allocation4 + $0x16d8] sm:$0xff]
    %v879 = vld [vmem:[#allocation4 + $0x16e0] sm:$0xff]
    %v880 = vld [vmem:[#allocation4 + $0x16e8] sm:$0xff]
    %v881 = vld [vmem:[#allocation4 + $0x16f0] sm:$0xff]
    %v882 = vld [vmem:[#allocation4 + $0x16f8] sm:$0xff]
    %v883 = vld [vmem:[#allocation4 + $0x1700] sm:$0xff]
    %v884 = vld [vmem:[#allocation4 + $0x1708] sm:$0xff]
    %v885 = vld [vmem:[#allocation4 + $0x1710] sm:$0xff]
    %v886 = vld [vmem:[#allocation4 + $0x1718] sm:$0xff]
    %v887 = vld [vmem:[#allocation4 + $0x1720] sm:$0xff]
    %v888 = vld [vmem:[#allocation4 + $0x1728] sm:$0xff]
    %v889 = vld [vmem:[#allocation4 + $0x1730] sm:$0xff]
    %v890 = vld [vmem:[#allocation4 + $0x1738] sm:$0xff]
    %v891 = vld [vmem:[#allocation4 + $0x1740] sm:$0xff]
    %v892 = vld [vmem:[#allocation4 + $0x1748] sm:$0xff]
    %v893 = vld [vmem:[#allocation4 + $0x1750] sm:$0xff]
    %v894 = vld [vmem:[#allocation4 + $0x1758] sm:$0xff]
    %v895 = vld [vmem:[#allocation4 + $0x1760] sm:$0xff]
    %v896 = vld [vmem:[#allocation4 + $0x1768] sm:$0xff]
    %v897 = vld [vmem:[#allocation4 + $0x1770] sm:$0xff]
    %v898 = vld [vmem:[#allocation4 + $0x1778] sm:$0xff]
    %v899 = vld [vmem:[#allocation4 + $0x1780] sm:$0xff]
    %v900 = vld [vmem:[#allocation4 + $0x1788] sm:$0xff]
    %v901 = vld [vmem:[#allocation4 + $0x1790] sm:$0xff]
    %v902 = vld [vmem:[#allocation4 + $0x1798] sm:$0xff]
    %v903 = vld [vmem:[#allocation4 + $0x17a0] sm:$0xff]
    %v904 = vld [vmem:[#allocation4 + $0x17a8] sm:$0xff]
    %v905 = vld [vmem:[#allocation4 + $0x17b0] sm:$0xff]
    %v906 = vld [vmem:[#allocation4 + $0x17b8] sm:$0xff]
    %v907 = vld [vmem:[#allocation4 + $0x17c0] sm:$0xff]
    %v908 = vld [vmem:[#allocation4 + $0x17c8] sm:$0xff]
    %v909 = vld [vmem:[#allocation4 + $0x17d0] sm:$0xff]
    %v910 = vld [vmem:[#allocation4 + $0x17d8] sm:$0xff]
    %v911 = vld [vmem:[#allocation4 + $0x17e0] sm:$0xff]
    %v912 = vld [vmem:[#allocation4 + $0x17e8] sm:$0xff]
    %v913 = vld [vmem:[#allocation4 + $0x17f0] sm:$0xff]
    %v914 = vld [vmem:[#allocation4 + $0x17f8] sm:$0xff]
    %v927 = vunpack.c.l.b16 %v135
    %v928 = vunpack.c.h.b16 %v135
    %v929 = vunpack.c.l.b16 %v136
    %v930 = vunpack.c.h.b16 %v136
    %v931 = vunpack.c.l.b16 %v137
    %v932 = vunpack.c.h.b16 %v137
    %v933 = vunpack.c.l.b16 %v138
    %v934 = vunpack.c.h.b16 %v138
    %v935 = vunpack.c.l.b16 %v139
    %v936 = vunpack.c.h.b16 %v139
    %v937 = vunpack.c.l.b16 %v140
    %v938 = vunpack.c.h.b16 %v140
    %v939 = vunpack.c.l.b16 %v141
    %v940 = vunpack.c.h.b16 %v141
    %v941 = vunpack.c.l.b16 %v142
    %v942 = vunpack.c.h.b16 %v142
    %v943 = vunpack.c.l.b16 %v143
    %v944 = vunpack.c.h.b16 %v143
    %v945 = vunpack.c.l.b16 %v144
    %v946 = vunpack.c.h.b16 %v144
    %v947 = vunpack.c.l.b16 %v145
    %v948 = vunpack.c.h.b16 %v145
    %v949 = vunpack.c.l.b16 %v146
    %v950 = vunpack.c.h.b16 %v146
    %v951 = vpack.c.b16 %v927, %v927
    %v952 = vpack.c.b16 %v928, %v928
    %v953 = vpack.c.b16 %v929, %v929
    %v954 = vpack.c.b16 %v930, %v930
    %v955 = vpack.c.b16 %v931, %v931
    %v956 = vpack.c.b16 %v932, %v932
    %v957 = vpack.c.b16 %v933, %v933
    %v958 = vpack.c.b16 %v934, %v934
    %v959 = vpack.c.b16 %v935, %v935
    %v960 = vpack.c.b16 %v936, %v936
    %v961 = vpack.c.b16 %v937, %v937
    %v962 = vpack.c.b16 %v938, %v938
    %v963 = vpack.c.b16 %v939, %v939
    %v964 = vpack.c.b16 %v940, %v940
    %v965 = vpack.c.b16 %v941, %v941
    %v966 = vpack.c.b16 %v942, %v942
    %v967 = vpack.c.b16 %v943, %v943
    %v968 = vpack.c.b16 %v944, %v944
    %v969 = vpack.c.b16 %v945, %v945
    %v970 = vpack.c.b16 %v946, %v946
    %v971 = vpack.c.b16 %v947, %v947
    %v972 = vpack.c.b16 %v948, %v948
    %v973 = vpack.c.b16 %v949, %v949
    %v974 = vpack.c.b16 %v950, %v950
    %v1767 = vunpack.c.l.b16 %v147
    %v1768 = vunpack.c.h.b16 %v147
    %v1769 = vunpack.c.l.b16 %v148
    %v1770 = vunpack.c.h.b16 %v148
    %v1771 = vunpack.c.l.b16 %v149
    %v1772 = vunpack.c.h.b16 %v149
    %v1773 = vunpack.c.l.b16 %v150
    %v1774 = vunpack.c.h.b16 %v150
    %v1775 = vunpack.c.l.b16 %v151
    %v1776 = vunpack.c.h.b16 %v151
    %v1777 = vunpack.c.l.b16 %v152
    %v1778 = vunpack.c.h.b16 %v152
    %v1779 = vunpack.c.l.b16 %v153
    %v1780 = vunpack.c.h.b16 %v153
    %v1781 = vunpack.c.l.b16 %v154
    %v1782 = vunpack.c.h.b16 %v154
    %v1783 = vunpack.c.l.b16 %v155
    %v1784 = vunpack.c.h.b16 %v155
    %v1785 = vunpack.c.l.b16 %v156
    %v1786 = vunpack.c.h.b16 %v156
    %v1787 = vunpack.c.l.b16 %v157
    %v1788 = vunpack.c.h.b16 %v157
    %v1789 = vunpack.c.l.b16 %v158
    %v1790 = vunpack.c.h.b16 %v158
    %v1791 = vunpack.c.l.b16 %v159
    %v1792 = vunpack.c.h.b16 %v159
    %v1793 = vunpack.c.l.b16 %v160
    %v1794 = vunpack.c.h.b16 %v160
    %v1795 = vunpack.c.l.b16 %v161
    %v1796 = vunpack.c.h.b16 %v161
    %v1797 = vunpack.c.l.b16 %v162
    %v1798 = vunpack.c.h.b16 %v162
    %v1799 = vunpack.c.l.b16 %v163
    %v1800 = vunpack.c.h.b16 %v163
    %v1801 = vunpack.c.l.b16 %v164
    %v1802 = vunpack.c.h.b16 %v164
    %v1803 = vunpack.c.l.b16 %v165
    %v1804 = vunpack.c.h.b16 %v165
    %v1805 = vunpack.c.l.b16 %v166
    %v1806 = vunpack.c.h.b16 %v166
    %v1807 = vunpack.c.l.b16 %v167
    %v1808 = vunpack.c.h.b16 %v167
    %v1809 = vunpack.c.l.b16 %v168
    %v1810 = vunpack.c.h.b16 %v168
    %v1811 = vunpack.c.l.b16 %v169
    %v1812 = vunpack.c.h.b16 %v169
    %v1813 = vunpack.c.l.b16 %v170
    %v1814 = vunpack.c.h.b16 %v170
    %v1815 = vunpack.c.l.b16 %v171
    %v1816 = vunpack.c.h.b16 %v171
    %v1817 = vunpack.c.l.b16 %v172
    %v1818 = vunpack.c.h.b16 %v172
    %v1819 = vunpack.c.l.b16 %v173
    %v1820 = vunpack.c.h.b16 %v173
    %v1821 = vunpack.c.l.b16 %v174
    %v1822 = vunpack.c.h.b16 %v174
    %v1823 = vunpack.c.l.b16 %v175
    %v1824 = vunpack.c.h.b16 %v175
    %v1825 = vunpack.c.l.b16 %v176
    %v1826 = vunpack.c.h.b16 %v176
    %v1827 = vunpack.c.l.b16 %v177
    %v1828 = vunpack.c.h.b16 %v177
    %v1829 = vunpack.c.l.b16 %v178
    %v1830 = vunpack.c.h.b16 %v178
    %v1831 = vunpack.c.l.b16 %v179
    %v1832 = vunpack.c.h.b16 %v179
    %v1833 = vunpack.c.l.b16 %v180
    %v1834 = vunpack.c.h.b16 %v180
    %v1835 = vunpack.c.l.b16 %v181
    %v1836 = vunpack.c.h.b16 %v181
    %v1837 = vunpack.c.l.b16 %v182
    %v1838 = vunpack.c.h.b16 %v182
    %v1839 = vunpack.c.l.b16 %v183
    %v1840 = vunpack.c.h.b16 %v183
    %v1841 = vunpack.c.l.b16 %v184
    %v1842 = vunpack.c.h.b16 %v184
    %v1843 = vunpack.c.l.b16 %v185
    %v1844 = vunpack.c.h.b16 %v185
    %v1845 = vunpack.c.l.b16 %v186
    %v1846 = vunpack.c.h.b16 %v186
    %v1847 = vunpack.c.l.b16 %v187
    %v1848 = vunpack.c.h.b16 %v187
    %v1849 = vunpack.c.l.b16 %v188
    %v1850 = vunpack.c.h.b16 %v188
    %v1851 = vunpack.c.l.b16 %v189
    %v1852 = vunpack.c.h.b16 %v189
    %v1853 = vunpack.c.l.b16 %v190
    %v1854 = vunpack.c.h.b16 %v190
    %v1855 = vunpack.c.l.b16 %v191
    %v1856 = vunpack.c.h.b16 %v191
    %v1857 = vunpack.c.l.b16 %v192
    %v1858 = vunpack.c.h.b16 %v192
    %v1859 = vunpack.c.l.b16 %v193
    %v1860 = vunpack.c.h.b16 %v193
    %v1861 = vunpack.c.l.b16 %v194
    %v1862 = vunpack.c.h.b16 %v194
    %v1863 = vunpack.c.l.b16 %v195
    %v1864 = vunpack.c.h.b16 %v195
    %v1865 = vunpack.c.l.b16 %v196
    %v1866 = vunpack.c.h.b16 %v196
    %v1867 = vunpack.c.l.b16 %v197
    %v1868 = vunpack.c.h.b16 %v197
    %v1869 = vunpack.c.l.b16 %v198
    %v1870 = vunpack.c.h.b16 %v198
    %v1871 = vunpack.c.l.b16 %v199
    %v1872 = vunpack.c.h.b16 %v199
    %v1873 = vunpack.c.l.b16 %v200
    %v1874 = vunpack.c.h.b16 %v200
    %v1875 = vunpack.c.l.b16 %v201
    %v1876 = vunpack.c.h.b16 %v201
    %v1877 = vunpack.c.l.b16 %v202
    %v1878 = vunpack.c.h.b16 %v202
    %v1879 = vunpack.c.l.b16 %v203
    %v1880 = vunpack.c.h.b16 %v203
    %v1881 = vunpack.c.l.b16 %v204
    %v1882 = vunpack.c.h.b16 %v204
    %v1883 = vunpack.c.l.b16 %v205
    %v1884 = vunpack.c.h.b16 %v205
    %v1885 = vunpack.c.l.b16 %v206
    %v1886 = vunpack.c.h.b16 %v206
    %v1887 = vunpack.c.l.b16 %v207
    %v1888 = vunpack.c.h.b16 %v207
    %v1889 = vunpack.c.l.b16 %v208
    %v1890 = vunpack.c.h.b16 %v208
    %v1891 = vunpack.c.l.b16 %v209
    %v1892 = vunpack.c.h.b16 %v209
    %v1893 = vunpack.c.l.b16 %v210
    %v1894 = vunpack.c.h.b16 %v210
    %v1895 = vunpack.c.l.b16 %v211
    %v1896 = vunpack.c.h.b16 %v211
    %v1897 = vunpack.c.l.b16 %v212
    %v1898 = vunpack.c.h.b16 %v212
    %v1899 = vunpack.c.l.b16 %v213
    %v1900 = vunpack.c.h.b16 %v213
    %v1901 = vunpack.c.l.b16 %v214
    %v1902 = vunpack.c.h.b16 %v214
    %v1903 = vunpack.c.l.b16 %v215
    %v1904 = vunpack.c.h.b16 %v215
    %v1905 = vunpack.c.l.b16 %v216
    %v1906 = vunpack.c.h.b16 %v216
    %v1907 = vunpack.c.l.b16 %v217
    %v1908 = vunpack.c.h.b16 %v217
    %v1909 = vunpack.c.l.b16 %v218
    %v1910 = vunpack.c.h.b16 %v218
    %v1911 = vunpack.c.l.b16 %v219
    %v1912 = vunpack.c.h.b16 %v219
    %v1913 = vunpack.c.l.b16 %v220
    %v1914 = vunpack.c.h.b16 %v220
    %v1915 = vunpack.c.l.b16 %v221
    %v1916 = vunpack.c.h.b16 %v221
    %v1917 = vunpack.c.l.b16 %v222
    %v1918 = vunpack.c.h.b16 %v222
    %v1919 = vunpack.c.l.b16 %v223
    %v1920 = vunpack.c.h.b16 %v223
    %v1921 = vunpack.c.l.b16 %v224
    %v1922 = vunpack.c.h.b16 %v224
    %v1923 = vunpack.c.l.b16 %v225
    %v1924 = vunpack.c.h.b16 %v225
    %v1925 = vunpack.c.l.b16 %v226
    %v1926 = vunpack.c.h.b16 %v226
    %v1927 = vunpack.c.l.b16 %v227
    %v1928 = vunpack.c.h.b16 %v227
    %v1929 = vunpack.c.l.b16 %v228
    %v1930 = vunpack.c.h.b16 %v228
    %v1931 = vunpack.c.l.b16 %v229
    %v1932 = vunpack.c.h.b16 %v229
    %v1933 = vunpack.c.l.b16 %v230
    %v1934 = vunpack.c.h.b16 %v230
    %v1935 = vunpack.c.l.b16 %v231
    %v1936 = vunpack.c.h.b16 %v231
    %v1937 = vunpack.c.l.b16 %v232
    %v1938 = vunpack.c.h.b16 %v232
    %v1939 = vunpack.c.l.b16 %v233
    %v1940 = vunpack.c.h.b16 %v233
    %v1941 = vunpack.c.l.b16 %v234
    %v1942 = vunpack.c.h.b16 %v234
    %v1943 = vunpack.c.l.b16 %v235
    %v1944 = vunpack.c.h.b16 %v235
    %v1945 = vunpack.c.l.b16 %v236
    %v1946 = vunpack.c.h.b16 %v236
    %v1947 = vunpack.c.l.b16 %v237
    %v1948 = vunpack.c.h.b16 %v237
    %v1949 = vunpack.c.l.b16 %v238
    %v1950 = vunpack.c.h.b16 %v238
    %v1951 = vunpack.c.l.b16 %v239
    %v1952 = vunpack.c.h.b16 %v239
    %v1953 = vunpack.c.l.b16 %v240
    %v1954 = vunpack.c.h.b16 %v240
    %v1955 = vunpack.c.l.b16 %v241
    %v1956 = vunpack.c.h.b16 %v241
    %v1957 = vunpack.c.l.b16 %v242
    %v1958 = vunpack.c.h.b16 %v242
    %v1959 = vunpack.c.l.b16 %v243
    %v1960 = vunpack.c.h.b16 %v243
    %v1961 = vunpack.c.l.b16 %v244
    %v1962 = vunpack.c.h.b16 %v244
    %v1963 = vunpack.c.l.b16 %v245
    %v1964 = vunpack.c.h.b16 %v245
    %v1965 = vunpack.c.l.b16 %v246
    %v1966 = vunpack.c.h.b16 %v246
    %v1967 = vunpack.c.l.b16 %v247
    %v1968 = vunpack.c.h.b16 %v247
    %v1969 = vunpack.c.l.b16 %v248
    %v1970 = vunpack.c.h.b16 %v248
    %v1971 = vunpack.c.l.b16 %v249
    %v1972 = vunpack.c.h.b16 %v249
    %v1973 = vunpack.c.l.b16 %v250
    %v1974 = vunpack.c.h.b16 %v250
    %v1975 = vunpack.c.l.b16 %v251
    %v1976 = vunpack.c.h.b16 %v251
    %v1977 = vunpack.c.l.b16 %v252
    %v1978 = vunpack.c.h.b16 %v252
    %v1979 = vunpack.c.l.b16 %v253
    %v1980 = vunpack.c.h.b16 %v253
    %v1981 = vunpack.c.l.b16 %v254
    %v1982 = vunpack.c.h.b16 %v254
    %v1983 = vunpack.c.l.b16 %v255
    %v1984 = vunpack.c.h.b16 %v255
    %v1985 = vunpack.c.l.b16 %v256
    %v1986 = vunpack.c.h.b16 %v256
    %v1987 = vunpack.c.l.b16 %v257
    %v1988 = vunpack.c.h.b16 %v257
    %v1989 = vunpack.c.l.b16 %v258
    %v1990 = vunpack.c.h.b16 %v258
    %v1991 = vunpack.c.l.b16 %v259
    %v1992 = vunpack.c.h.b16 %v259
    %v1993 = vunpack.c.l.b16 %v260
    %v1994 = vunpack.c.h.b16 %v260
    %v1995 = vunpack.c.l.b16 %v261
    %v1996 = vunpack.c.h.b16 %v261
    %v1997 = vunpack.c.l.b16 %v262
    %v1998 = vunpack.c.h.b16 %v262
    %v1999 = vunpack.c.l.b16 %v263
    %v2000 = vunpack.c.h.b16 %v263
    %v2001 = vunpack.c.l.b16 %v264
    %v2002 = vunpack.c.h.b16 %v264
    %v2003 = vunpack.c.l.b16 %v265
    %v2004 = vunpack.c.h.b16 %v265
    %v2005 = vunpack.c.l.b16 %v266
    %v2006 = vunpack.c.h.b16 %v266
    %v2007 = vunpack.c.l.b16 %v267
    %v2008 = vunpack.c.h.b16 %v267
    %v2009 = vunpack.c.l.b16 %v268
    %v2010 = vunpack.c.h.b16 %v268
    %v2011 = vunpack.c.l.b16 %v269
    %v2012 = vunpack.c.h.b16 %v269
    %v2013 = vunpack.c.l.b16 %v270
    %v2014 = vunpack.c.h.b16 %v270
    %v2015 = vunpack.c.l.b16 %v271
    %v2016 = vunpack.c.h.b16 %v271
    %v2017 = vunpack.c.l.b16 %v272
    %v2018 = vunpack.c.h.b16 %v272
    %v2019 = vunpack.c.l.b16 %v273
    %v2020 = vunpack.c.h.b16 %v273
    %v2021 = vunpack.c.l.b16 %v274
    %v2022 = vunpack.c.h.b16 %v274
    %v2023 = vunpack.c.l.b16 %v275
    %v2024 = vunpack.c.h.b16 %v275
    %v2025 = vunpack.c.l.b16 %v276
    %v2026 = vunpack.c.h.b16 %v276
    %v2027 = vunpack.c.l.b16 %v277
    %v2028 = vunpack.c.h.b16 %v277
    %v2029 = vunpack.c.l.b16 %v278
    %v2030 = vunpack.c.h.b16 %v278
    %v2031 = vunpack.c.l.b16 %v279
    %v2032 = vunpack.c.h.b16 %v279
    %v2033 = vunpack.c.l.b16 %v280
    %v2034 = vunpack.c.h.b16 %v280
    %v2035 = vunpack.c.l.b16 %v281
    %v2036 = vunpack.c.h.b16 %v281
    %v2037 = vunpack.c.l.b16 %v282
    %v2038 = vunpack.c.h.b16 %v282
    %v2039 = vunpack.c.l.b16 %v283
    %v2040 = vunpack.c.h.b16 %v283
    %v2041 = vunpack.c.l.b16 %v284
    %v2042 = vunpack.c.h.b16 %v284
    %v2043 = vunpack.c.l.b16 %v285
    %v2044 = vunpack.c.h.b16 %v285
    %v2045 = vunpack.c.l.b16 %v286
    %v2046 = vunpack.c.h.b16 %v286
    %v2047 = vunpack.c.l.b16 %v287
    %v2048 = vunpack.c.h.b16 %v287
    %v2049 = vunpack.c.l.b16 %v288
    %v2050 = vunpack.c.h.b16 %v288
    %v2051 = vunpack.c.l.b16 %v289
    %v2052 = vunpack.c.h.b16 %v289
    %v2053 = vunpack.c.l.b16 %v290
    %v2054 = vunpack.c.h.b16 %v290
    %v2055 = vunpack.c.l.b16 %v291
    %v2056 = vunpack.c.h.b16 %v291
    %v2057 = vunpack.c.l.b16 %v292
    %v2058 = vunpack.c.h.b16 %v292
    %v2059 = vunpack.c.l.b16 %v293
    %v2060 = vunpack.c.h.b16 %v293
    %v2061 = vunpack.c.l.b16 %v294
    %v2062 = vunpack.c.h.b16 %v294
    %v2063 = vunpack.c.l.b16 %v295
    %v2064 = vunpack.c.h.b16 %v295
    %v2065 = vunpack.c.l.b16 %v296
    %v2066 = vunpack.c.h.b16 %v296
    %v2067 = vunpack.c.l.b16 %v297
    %v2068 = vunpack.c.h.b16 %v297
    %v2069 = vunpack.c.l.b16 %v298
    %v2070 = vunpack.c.h.b16 %v298
    %v2071 = vunpack.c.l.b16 %v299
    %v2072 = vunpack.c.h.b16 %v299
    %v2073 = vunpack.c.l.b16 %v300
    %v2074 = vunpack.c.h.b16 %v300
    %v2075 = vunpack.c.l.b16 %v301
    %v2076 = vunpack.c.h.b16 %v301
    %v2077 = vunpack.c.l.b16 %v302
    %v2078 = vunpack.c.h.b16 %v302
    %v2079 = vunpack.c.l.b16 %v303
    %v2080 = vunpack.c.h.b16 %v303
    %v2081 = vunpack.c.l.b16 %v304
    %v2082 = vunpack.c.h.b16 %v304
    %v2083 = vunpack.c.l.b16 %v305
    %v2084 = vunpack.c.h.b16 %v305
    %v2085 = vunpack.c.l.b16 %v306
    %v2086 = vunpack.c.h.b16 %v306
    %v2087 = vunpack.c.l.b16 %v307
    %v2088 = vunpack.c.h.b16 %v307
    %v2089 = vunpack.c.l.b16 %v308
    %v2090 = vunpack.c.h.b16 %v308
    %v2091 = vunpack.c.l.b16 %v309
    %v2092 = vunpack.c.h.b16 %v309
    %v2093 = vunpack.c.l.b16 %v310
    %v2094 = vunpack.c.h.b16 %v310
    %v2095 = vunpack.c.l.b16 %v311
    %v2096 = vunpack.c.h.b16 %v311
    %v2097 = vunpack.c.l.b16 %v312
    %v2098 = vunpack.c.h.b16 %v312
    %v2099 = vunpack.c.l.b16 %v313
    %v2100 = vunpack.c.h.b16 %v313
    %v2101 = vunpack.c.l.b16 %v314
    %v2102 = vunpack.c.h.b16 %v314
    %v2103 = vunpack.c.l.b16 %v315
    %v2104 = vunpack.c.h.b16 %v315
    %v2105 = vunpack.c.l.b16 %v316
    %v2106 = vunpack.c.h.b16 %v316
    %v2107 = vunpack.c.l.b16 %v317
    %v2108 = vunpack.c.h.b16 %v317
    %v2109 = vunpack.c.l.b16 %v318
    %v2110 = vunpack.c.h.b16 %v318
    %v2111 = vunpack.c.l.b16 %v319
    %v2112 = vunpack.c.h.b16 %v319
    %v2113 = vunpack.c.l.b16 %v320
    %v2114 = vunpack.c.h.b16 %v320
    %v2115 = vunpack.c.l.b16 %v321
    %v2116 = vunpack.c.h.b16 %v321
    %v2117 = vunpack.c.l.b16 %v322
    %v2118 = vunpack.c.h.b16 %v322
    %v2119 = vunpack.c.l.b16 %v323
    %v2120 = vunpack.c.h.b16 %v323
    %v2121 = vunpack.c.l.b16 %v324
    %v2122 = vunpack.c.h.b16 %v324
    %v2123 = vunpack.c.l.b16 %v325
    %v2124 = vunpack.c.h.b16 %v325
    %v2125 = vunpack.c.l.b16 %v326
    %v2126 = vunpack.c.h.b16 %v326
    %v2127 = vunpack.c.l.b16 %v327
    %v2128 = vunpack.c.h.b16 %v327
    %v2129 = vunpack.c.l.b16 %v328
    %v2130 = vunpack.c.h.b16 %v328
    %v2131 = vunpack.c.l.b16 %v329
    %v2132 = vunpack.c.h.b16 %v329
    %v2133 = vunpack.c.l.b16 %v330
    %v2134 = vunpack.c.h.b16 %v330
    %v2135 = vunpack.c.l.b16 %v331
    %v2136 = vunpack.c.h.b16 %v331
    %v2137 = vunpack.c.l.b16 %v332
    %v2138 = vunpack.c.h.b16 %v332
    %v2139 = vunpack.c.l.b16 %v333
    %v2140 = vunpack.c.h.b16 %v333
    %v2141 = vunpack.c.l.b16 %v334
    %v2142 = vunpack.c.h.b16 %v334
    %v2143 = vunpack.c.l.b16 %v335
    %v2144 = vunpack.c.h.b16 %v335
    %v2145 = vunpack.c.l.b16 %v336
    %v2146 = vunpack.c.h.b16 %v336
    %v2147 = vunpack.c.l.b16 %v337
    %v2148 = vunpack.c.h.b16 %v337
    %v2149 = vunpack.c.l.b16 %v338
    %v2150 = vunpack.c.h.b16 %v338
    %v2151 = vunpack.c.l.b16 %v339
    %v2152 = vunpack.c.h.b16 %v339
    %v2153 = vunpack.c.l.b16 %v340
    %v2154 = vunpack.c.h.b16 %v340
    %v2155 = vunpack.c.l.b16 %v341
    %v2156 = vunpack.c.h.b16 %v341
    %v2157 = vunpack.c.l.b16 %v342
    %v2158 = vunpack.c.h.b16 %v342
    %v2159 = vunpack.c.l.b16 %v343
    %v2160 = vunpack.c.h.b16 %v343
    %v2161 = vunpack.c.l.b16 %v344
    %v2162 = vunpack.c.h.b16 %v344
    %v2163 = vunpack.c.l.b16 %v345
    %v2164 = vunpack.c.h.b16 %v345
    %v2165 = vunpack.c.l.b16 %v346
    %v2166 = vunpack.c.h.b16 %v346
    %v2167 = vunpack.c.l.b16 %v347
    %v2168 = vunpack.c.h.b16 %v347
    %v2169 = vunpack.c.l.b16 %v348
    %v2170 = vunpack.c.h.b16 %v348
    %v2171 = vunpack.c.l.b16 %v349
    %v2172 = vunpack.c.h.b16 %v349
    %v2173 = vunpack.c.l.b16 %v350
    %v2174 = vunpack.c.h.b16 %v350
    %v2175 = vunpack.c.l.b16 %v351
    %v2176 = vunpack.c.h.b16 %v351
    %v2177 = vunpack.c.l.b16 %v352
    %v2178 = vunpack.c.h.b16 %v352
    %v2179 = vunpack.c.l.b16 %v353
    %v2180 = vunpack.c.h.b16 %v353
    %v2181 = vunpack.c.l.b16 %v354
    %v2182 = vunpack.c.h.b16 %v354
    %v2183 = vunpack.c.l.b16 %v355
    %v2184 = vunpack.c.h.b16 %v355
    %v2185 = vunpack.c.l.b16 %v356
    %v2186 = vunpack.c.h.b16 %v356
    %v2187 = vunpack.c.l.b16 %v357
    %v2188 = vunpack.c.h.b16 %v357
    %v2189 = vunpack.c.l.b16 %v358
    %v2190 = vunpack.c.h.b16 %v358
    %v2191 = vunpack.c.l.b16 %v359
    %v2192 = vunpack.c.h.b16 %v359
    %v2193 = vunpack.c.l.b16 %v360
    %v2194 = vunpack.c.h.b16 %v360
    %v2195 = vunpack.c.l.b16 %v361
    %v2196 = vunpack.c.h.b16 %v361
    %v2197 = vunpack.c.l.b16 %v362
    %v2198 = vunpack.c.h.b16 %v362
    %v2199 = vunpack.c.l.b16 %v363
    %v2200 = vunpack.c.h.b16 %v363
    %v2201 = vunpack.c.l.b16 %v364
    %v2202 = vunpack.c.h.b16 %v364
    %v2203 = vunpack.c.l.b16 %v365
    %v2204 = vunpack.c.h.b16 %v365
    %v2205 = vunpack.c.l.b16 %v366
    %v2206 = vunpack.c.h.b16 %v366
    %v2207 = vunpack.c.l.b16 %v367
    %v2208 = vunpack.c.h.b16 %v367
    %v2209 = vunpack.c.l.b16 %v368
    %v2210 = vunpack.c.h.b16 %v368
    %v2211 = vunpack.c.l.b16 %v369
    %v2212 = vunpack.c.h.b16 %v369
    %v2213 = vunpack.c.l.b16 %v370
    %v2214 = vunpack.c.h.b16 %v370
    %v2215 = vunpack.c.l.b16 %v371
    %v2216 = vunpack.c.h.b16 %v371
    %v2217 = vunpack.c.l.b16 %v372
    %v2218 = vunpack.c.h.b16 %v372
    %v2219 = vunpack.c.l.b16 %v373
    %v2220 = vunpack.c.h.b16 %v373
    %v2221 = vunpack.c.l.b16 %v374
    %v2222 = vunpack.c.h.b16 %v374
    %v2223 = vunpack.c.l.b16 %v375
    %v2224 = vunpack.c.h.b16 %v375
    %v2225 = vunpack.c.l.b16 %v376
    %v2226 = vunpack.c.h.b16 %v376
    %v2227 = vunpack.c.l.b16 %v377
    %v2228 = vunpack.c.h.b16 %v377
    %v2229 = vunpack.c.l.b16 %v378
    %v2230 = vunpack.c.h.b16 %v378
    %v2231 = vunpack.c.l.b16 %v379
    %v2232 = vunpack.c.h.b16 %v379
    %v2233 = vunpack.c.l.b16 %v380
    %v2234 = vunpack.c.h.b16 %v380
    %v2235 = vunpack.c.l.b16 %v381
    %v2236 = vunpack.c.h.b16 %v381
    %v2237 = vunpack.c.l.b16 %v382
    %v2238 = vunpack.c.h.b16 %v382
    %v2239 = vunpack.c.l.b16 %v383
    %v2240 = vunpack.c.h.b16 %v383
    %v2241 = vunpack.c.l.b16 %v384
    %v2242 = vunpack.c.h.b16 %v384
    %v2243 = vunpack.c.l.b16 %v385
    %v2244 = vunpack.c.h.b16 %v385
    %v2245 = vunpack.c.l.b16 %v386
    %v2246 = vunpack.c.h.b16 %v386
    %v2247 = vunpack.c.l.b16 %v387
    %v2248 = vunpack.c.h.b16 %v387
    %v2249 = vunpack.c.l.b16 %v388
    %v2250 = vunpack.c.h.b16 %v388
    %v2251 = vunpack.c.l.b16 %v389
    %v2252 = vunpack.c.h.b16 %v389
    %v2253 = vunpack.c.l.b16 %v390
    %v2254 = vunpack.c.h.b16 %v390
    %v2255 = vunpack.c.l.b16 %v391
    %v2256 = vunpack.c.h.b16 %v391
    %v2257 = vunpack.c.l.b16 %v392
    %v2258 = vunpack.c.h.b16 %v392
    %v2259 = vunpack.c.l.b16 %v393
    %v2260 = vunpack.c.h.b16 %v393
    %v2261 = vunpack.c.l.b16 %v394
    %v2262 = vunpack.c.h.b16 %v394
    %v2263 = vunpack.c.l.b16 %v395
    %v2264 = vunpack.c.h.b16 %v395
    %v2265 = vunpack.c.l.b16 %v396
    %v2266 = vunpack.c.h.b16 %v396
    %v2267 = vunpack.c.l.b16 %v397
    %v2268 = vunpack.c.h.b16 %v397
    %v2269 = vunpack.c.l.b16 %v398
    %v2270 = vunpack.c.h.b16 %v398
    %v2271 = vunpack.c.l.b16 %v399
    %v2272 = vunpack.c.h.b16 %v399
    %v2273 = vunpack.c.l.b16 %v400
    %v2274 = vunpack.c.h.b16 %v400
    %v2275 = vunpack.c.l.b16 %v401
    %v2276 = vunpack.c.h.b16 %v401
    %v2277 = vunpack.c.l.b16 %v402
    %v2278 = vunpack.c.h.b16 %v402
    %v2279 = vunpack.c.l.b16 %v403
    %v2280 = vunpack.c.h.b16 %v403
    %v2281 = vunpack.c.l.b16 %v404
    %v2282 = vunpack.c.h.b16 %v404
    %v2283 = vunpack.c.l.b16 %v405
    %v2284 = vunpack.c.h.b16 %v405
    %v2285 = vunpack.c.l.b16 %v406
    %v2286 = vunpack.c.h.b16 %v406
    %v2287 = vunpack.c.l.b16 %v407
    %v2288 = vunpack.c.h.b16 %v407
    %v2289 = vunpack.c.l.b16 %v408
    %v2290 = vunpack.c.h.b16 %v408
    %v2291 = vunpack.c.l.b16 %v409
    %v2292 = vunpack.c.h.b16 %v409
    %v2293 = vunpack.c.l.b16 %v410
    %v2294 = vunpack.c.h.b16 %v410
    %v2295 = vunpack.c.l.b16 %v411
    %v2296 = vunpack.c.h.b16 %v411
    %v2297 = vunpack.c.l.b16 %v412
    %v2298 = vunpack.c.h.b16 %v412
    %v2299 = vunpack.c.l.b16 %v413
    %v2300 = vunpack.c.h.b16 %v413
    %v2301 = vunpack.c.l.b16 %v414
    %v2302 = vunpack.c.h.b16 %v414
    %v2303 = vunpack.c.l.b16 %v415
    %v2304 = vunpack.c.h.b16 %v415
    %v2305 = vunpack.c.l.b16 %v416
    %v2306 = vunpack.c.h.b16 %v416
    %v2307 = vunpack.c.l.b16 %v417
    %v2308 = vunpack.c.h.b16 %v417
    %v2309 = vunpack.c.l.b16 %v418
    %v2310 = vunpack.c.h.b16 %v418
    %v2311 = vunpack.c.l.b16 %v419
    %v2312 = vunpack.c.h.b16 %v419
    %v2313 = vunpack.c.l.b16 %v420
    %v2314 = vunpack.c.h.b16 %v420
    %v2315 = vunpack.c.l.b16 %v421
    %v2316 = vunpack.c.h.b16 %v421
    %v2317 = vunpack.c.l.b16 %v422
    %v2318 = vunpack.c.h.b16 %v422
    %v2319 = vunpack.c.l.b16 %v423
    %v2320 = vunpack.c.h.b16 %v423
    %v2321 = vunpack.c.l.b16 %v424
    %v2322 = vunpack.c.h.b16 %v424
    %v2323 = vunpack.c.l.b16 %v425
    %v2324 = vunpack.c.h.b16 %v425
    %v2325 = vunpack.c.l.b16 %v426
    %v2326 = vunpack.c.h.b16 %v426
    %v2327 = vunpack.c.l.b16 %v427
    %v2328 = vunpack.c.h.b16 %v427
    %v2329 = vunpack.c.l.b16 %v428
    %v2330 = vunpack.c.h.b16 %v428
    %v2331 = vunpack.c.l.b16 %v429
    %v2332 = vunpack.c.h.b16 %v429
    %v2333 = vunpack.c.l.b16 %v430
    %v2334 = vunpack.c.h.b16 %v430
    %v2335 = vunpack.c.l.b16 %v431
    %v2336 = vunpack.c.h.b16 %v431
    %v2337 = vunpack.c.l.b16 %v432
    %v2338 = vunpack.c.h.b16 %v432
    %v2339 = vunpack.c.l.b16 %v433
    %v2340 = vunpack.c.h.b16 %v433
    %v2341 = vunpack.c.l.b16 %v434
    %v2342 = vunpack.c.h.b16 %v434
    %v2343 = vunpack.c.l.b16 %v435
    %v2344 = vunpack.c.h.b16 %v435
    %v2345 = vunpack.c.l.b16 %v436
    %v2346 = vunpack.c.h.b16 %v436
    %v2347 = vunpack.c.l.b16 %v437
    %v2348 = vunpack.c.h.b16 %v437
    %v2349 = vunpack.c.l.b16 %v438
    %v2350 = vunpack.c.h.b16 %v438
    %v2351 = vunpack.c.l.b16 %v439
    %v2352 = vunpack.c.h.b16 %v439
    %v2353 = vunpack.c.l.b16 %v440
    %v2354 = vunpack.c.h.b16 %v440
    %v2355 = vunpack.c.l.b16 %v441
    %v2356 = vunpack.c.h.b16 %v441
    %v2357 = vunpack.c.l.b16 %v442
    %v2358 = vunpack.c.h.b16 %v442
    %v2359 = vunpack.c.l.b16 %v443
    %v2360 = vunpack.c.h.b16 %v443
    %v2361 = vunpack.c.l.b16 %v444
    %v2362 = vunpack.c.h.b16 %v444
    %v2363 = vunpack.c.l.b16 %v445
    %v2364 = vunpack.c.h.b16 %v445
    %v2365 = vunpack.c.l.b16 %v446
    %v2366 = vunpack.c.h.b16 %v446
    %v2367 = vunpack.c.l.b16 %v447
    %v2368 = vunpack.c.h.b16 %v447
    %v2369 = vunpack.c.l.b16 %v448
    %v2370 = vunpack.c.h.b16 %v448
    %v2371 = vunpack.c.l.b16 %v449
    %v2372 = vunpack.c.h.b16 %v449
    %v2373 = vunpack.c.l.b16 %v450
    %v2374 = vunpack.c.h.b16 %v450
    %v2375 = vunpack.c.l.b16 %v451
    %v2376 = vunpack.c.h.b16 %v451
    %v2377 = vunpack.c.l.b16 %v452
    %v2378 = vunpack.c.h.b16 %v452
    %v2379 = vunpack.c.l.b16 %v453
    %v2380 = vunpack.c.h.b16 %v453
    %v2381 = vunpack.c.l.b16 %v454
    %v2382 = vunpack.c.h.b16 %v454
    %v2383 = vunpack.c.l.b16 %v455
    %v2384 = vunpack.c.h.b16 %v455
    %v2385 = vunpack.c.l.b16 %v456
    %v2386 = vunpack.c.h.b16 %v456
    %v2387 = vunpack.c.l.b16 %v457
    %v2388 = vunpack.c.h.b16 %v457
    %v2389 = vunpack.c.l.b16 %v458
    %v2390 = vunpack.c.h.b16 %v458
    %v2391 = vunpack.c.l.b16 %v459
    %v2392 = vunpack.c.h.b16 %v459
    %v2393 = vunpack.c.l.b16 %v460
    %v2394 = vunpack.c.h.b16 %v460
    %v2395 = vunpack.c.l.b16 %v461
    %v2396 = vunpack.c.h.b16 %v461
    %v2397 = vunpack.c.l.b16 %v462
    %v2398 = vunpack.c.h.b16 %v462
    %v2399 = vunpack.c.l.b16 %v463
    %v2400 = vunpack.c.h.b16 %v463
    %v2401 = vunpack.c.l.b16 %v464
    %v2402 = vunpack.c.h.b16 %v464
    %v2403 = vunpack.c.l.b16 %v465
    %v2404 = vunpack.c.h.b16 %v465
    %v2405 = vunpack.c.l.b16 %v466
    %v2406 = vunpack.c.h.b16 %v466
    %v2407 = vunpack.c.l.b16 %v467
    %v2408 = vunpack.c.h.b16 %v467
    %v2409 = vunpack.c.l.b16 %v468
    %v2410 = vunpack.c.h.b16 %v468
    %v2411 = vunpack.c.l.b16 %v469
    %v2412 = vunpack.c.h.b16 %v469
    %v2413 = vunpack.c.l.b16 %v470
    %v2414 = vunpack.c.h.b16 %v470
    %v2415 = vunpack.c.l.b16 %v471
    %v2416 = vunpack.c.h.b16 %v471
    %v2417 = vunpack.c.l.b16 %v472
    %v2418 = vunpack.c.h.b16 %v472
    %v2419 = vunpack.c.l.b16 %v473
    %v2420 = vunpack.c.h.b16 %v473
    %v2421 = vunpack.c.l.b16 %v474
    %v2422 = vunpack.c.h.b16 %v474
    %v2423 = vunpack.c.l.b16 %v475
    %v2424 = vunpack.c.h.b16 %v475
    %v2425 = vunpack.c.l.b16 %v476
    %v2426 = vunpack.c.h.b16 %v476
    %v2427 = vunpack.c.l.b16 %v477
    %v2428 = vunpack.c.h.b16 %v477
    %v2429 = vunpack.c.l.b16 %v478
    %v2430 = vunpack.c.h.b16 %v478
    %v2431 = vunpack.c.l.b16 %v479
    %v2432 = vunpack.c.h.b16 %v479
    %v2433 = vunpack.c.l.b16 %v480
    %v2434 = vunpack.c.h.b16 %v480
    %v2435 = vunpack.c.l.b16 %v481
    %v2436 = vunpack.c.h.b16 %v481
    %v2437 = vunpack.c.l.b16 %v482
    %v2438 = vunpack.c.h.b16 %v482
    %v2439 = vunpack.c.l.b16 %v483
    %v2440 = vunpack.c.h.b16 %v483
    %v2441 = vunpack.c.l.b16 %v484
    %v2442 = vunpack.c.h.b16 %v484
    %v2443 = vunpack.c.l.b16 %v485
    %v2444 = vunpack.c.h.b16 %v485
    %v2445 = vunpack.c.l.b16 %v486
    %v2446 = vunpack.c.h.b16 %v486
    %v2447 = vunpack.c.l.b16 %v487
    %v2448 = vunpack.c.h.b16 %v487
    %v2449 = vunpack.c.l.b16 %v488
    %v2450 = vunpack.c.h.b16 %v488
    %v2451 = vunpack.c.l.b16 %v489
    %v2452 = vunpack.c.h.b16 %v489
    %v2453 = vunpack.c.l.b16 %v490
    %v2454 = vunpack.c.h.b16 %v490
    %v2455 = vunpack.c.l.b16 %v491
    %v2456 = vunpack.c.h.b16 %v491
    %v2457 = vunpack.c.l.b16 %v492
    %v2458 = vunpack.c.h.b16 %v492
    %v2459 = vunpack.c.l.b16 %v493
    %v2460 = vunpack.c.h.b16 %v493
    %v2461 = vunpack.c.l.b16 %v494
    %v2462 = vunpack.c.h.b16 %v494
    %v2463 = vunpack.c.l.b16 %v495
    %v2464 = vunpack.c.h.b16 %v495
    %v2465 = vunpack.c.l.b16 %v496
    %v2466 = vunpack.c.h.b16 %v496
    %v2467 = vunpack.c.l.b16 %v497
    %v2468 = vunpack.c.h.b16 %v497
    %v2469 = vunpack.c.l.b16 %v498
    %v2470 = vunpack.c.h.b16 %v498
    %v2471 = vunpack.c.l.b16 %v499
    %v2472 = vunpack.c.h.b16 %v499
    %v2473 = vunpack.c.l.b16 %v500
    %v2474 = vunpack.c.h.b16 %v500
    %v2475 = vunpack.c.l.b16 %v501
    %v2476 = vunpack.c.h.b16 %v501
    %v2477 = vunpack.c.l.b16 %v502
    %v2478 = vunpack.c.h.b16 %v502
    %v2479 = vunpack.c.l.b16 %v503
    %v2480 = vunpack.c.h.b16 %v503
    %v2481 = vunpack.c.l.b16 %v504
    %v2482 = vunpack.c.h.b16 %v504
    %v2483 = vunpack.c.l.b16 %v505
    %v2484 = vunpack.c.h.b16 %v505
    %v2485 = vunpack.c.l.b16 %v506
    %v2486 = vunpack.c.h.b16 %v506
    %v2487 = vunpack.c.l.b16 %v507
    %v2488 = vunpack.c.h.b16 %v507
    %v2489 = vunpack.c.l.b16 %v508
    %v2490 = vunpack.c.h.b16 %v508
    %v2491 = vunpack.c.l.b16 %v509
    %v2492 = vunpack.c.h.b16 %v509
    %v2493 = vunpack.c.l.b16 %v510
    %v2494 = vunpack.c.h.b16 %v510
    %v2495 = vunpack.c.l.b16 %v511
    %v2496 = vunpack.c.h.b16 %v511
    %v2497 = vunpack.c.l.b16 %v512
    %v2498 = vunpack.c.h.b16 %v512
    %v2499 = vunpack.c.l.b16 %v513
    %v2500 = vunpack.c.h.b16 %v513
    %v2501 = vunpack.c.l.b16 %v514
    %v2502 = vunpack.c.h.b16 %v514
    %v2503 = vunpack.c.l.b16 %v515
    %v2504 = vunpack.c.h.b16 %v515
    %v2505 = vunpack.c.l.b16 %v516
    %v2506 = vunpack.c.h.b16 %v516
    %v2507 = vunpack.c.l.b16 %v517
    %v2508 = vunpack.c.h.b16 %v517
    %v2509 = vunpack.c.l.b16 %v518
    %v2510 = vunpack.c.h.b16 %v518
    %v2511 = vunpack.c.l.b16 %v519
    %v2512 = vunpack.c.h.b16 %v519
    %v2513 = vunpack.c.l.b16 %v520
    %v2514 = vunpack.c.h.b16 %v520
    %v2515 = vunpack.c.l.b16 %v521
    %v2516 = vunpack.c.h.b16 %v521
    %v2517 = vunpack.c.l.b16 %v522
    %v2518 = vunpack.c.h.b16 %v522
    %v2519 = vunpack.c.l.b16 %v523
    %v2520 = vunpack.c.h.b16 %v523
    %v2521 = vunpack.c.l.b16 %v524
    %v2522 = vunpack.c.h.b16 %v524
    %v2523 = vunpack.c.l.b16 %v525
    %v2524 = vunpack.c.h.b16 %v525
    %v2525 = vunpack.c.l.b16 %v526
    %v2526 = vunpack.c.h.b16 %v526
    %v2527 = vunpack.c.l.b16 %v527
    %v2528 = vunpack.c.h.b16 %v527
    %v2529 = vunpack.c.l.b16 %v528
    %v2530 = vunpack.c.h.b16 %v528
    %v2531 = vunpack.c.l.b16 %v529
    %v2532 = vunpack.c.h.b16 %v529
    %v2533 = vunpack.c.l.b16 %v530
    %v2534 = vunpack.c.h.b16 %v530
    %v2535 = vunpack.c.l.b16 %v531
    %v2536 = vunpack.c.h.b16 %v531
    %v2537 = vunpack.c.l.b16 %v532
    %v2538 = vunpack.c.h.b16 %v532
    %v2539 = vunpack.c.l.b16 %v533
    %v2540 = vunpack.c.h.b16 %v533
    %v2541 = vunpack.c.l.b16 %v534
    %v2542 = vunpack.c.h.b16 %v534
    %v2543 = vunpack.c.l.b16 %v535
    %v2544 = vunpack.c.h.b16 %v535
    %v2545 = vunpack.c.l.b16 %v536
    %v2546 = vunpack.c.h.b16 %v536
    %v2547 = vunpack.c.l.b16 %v537
    %v2548 = vunpack.c.h.b16 %v537
    %v2549 = vunpack.c.l.b16 %v538
    %v2550 = vunpack.c.h.b16 %v538
    %v2551 = vunpack.c.l.b16 %v539
    %v2552 = vunpack.c.h.b16 %v539
    %v2553 = vunpack.c.l.b16 %v540
    %v2554 = vunpack.c.h.b16 %v540
    %v2555 = vunpack.c.l.b16 %v541
    %v2556 = vunpack.c.h.b16 %v541
    %v2557 = vunpack.c.l.b16 %v542
    %v2558 = vunpack.c.h.b16 %v542
    %v2559 = vunpack.c.l.b16 %v543
    %v2560 = vunpack.c.h.b16 %v543
    %v2561 = vunpack.c.l.b16 %v544
    %v2562 = vunpack.c.h.b16 %v544
    %v2563 = vunpack.c.l.b16 %v545
    %v2564 = vunpack.c.h.b16 %v545
    %v2565 = vunpack.c.l.b16 %v546
    %v2566 = vunpack.c.h.b16 %v546
    %v2567 = vunpack.c.l.b16 %v547
    %v2568 = vunpack.c.h.b16 %v547
    %v2569 = vunpack.c.l.b16 %v548
    %v2570 = vunpack.c.h.b16 %v548
    %v2571 = vunpack.c.l.b16 %v549
    %v2572 = vunpack.c.h.b16 %v549
    %v2573 = vunpack.c.l.b16 %v550
    %v2574 = vunpack.c.h.b16 %v550
    %v2575 = vunpack.c.l.b16 %v551
    %v2576 = vunpack.c.h.b16 %v551
    %v2577 = vunpack.c.l.b16 %v552
    %v2578 = vunpack.c.h.b16 %v552
    %v2579 = vunpack.c.l.b16 %v553
    %v2580 = vunpack.c.h.b16 %v553
    %v2581 = vunpack.c.l.b16 %v554
    %v2582 = vunpack.c.h.b16 %v554
    %v2583 = vunpack.c.l.b16 %v555
    %v2584 = vunpack.c.h.b16 %v555
    %v2585 = vunpack.c.l.b16 %v556
    %v2586 = vunpack.c.h.b16 %v556
    %v2587 = vunpack.c.l.b16 %v557
    %v2588 = vunpack.c.h.b16 %v557
    %v2589 = vunpack.c.l.b16 %v558
    %v2590 = vunpack.c.h.b16 %v558
    %v2591 = vunpack.c.l.b16 %v559
    %v2592 = vunpack.c.h.b16 %v559
    %v2593 = vunpack.c.l.b16 %v560
    %v2594 = vunpack.c.h.b16 %v560
    %v2595 = vunpack.c.l.b16 %v561
    %v2596 = vunpack.c.h.b16 %v561
    %v2597 = vunpack.c.l.b16 %v562
    %v2598 = vunpack.c.h.b16 %v562
    %v2599 = vunpack.c.l.b16 %v563
    %v2600 = vunpack.c.h.b16 %v563
    %v2601 = vunpack.c.l.b16 %v564
    %v2602 = vunpack.c.h.b16 %v564
    %v2603 = vunpack.c.l.b16 %v565
    %v2604 = vunpack.c.h.b16 %v565
    %v2605 = vunpack.c.l.b16 %v566
    %v2606 = vunpack.c.h.b16 %v566
    %v2607 = vunpack.c.l.b16 %v567
    %v2608 = vunpack.c.h.b16 %v567
    %v2609 = vunpack.c.l.b16 %v568
    %v2610 = vunpack.c.h.b16 %v568
    %v2611 = vunpack.c.l.b16 %v569
    %v2612 = vunpack.c.h.b16 %v569
    %v2613 = vunpack.c.l.b16 %v570
    %v2614 = vunpack.c.h.b16 %v570
    %v2615 = vunpack.c.l.b16 %v571
    %v2616 = vunpack.c.h.b16 %v571
    %v2617 = vunpack.c.l.b16 %v572
    %v2618 = vunpack.c.h.b16 %v572
    %v2619 = vunpack.c.l.b16 %v573
    %v2620 = vunpack.c.h.b16 %v573
    %v2621 = vunpack.c.l.b16 %v574
    %v2622 = vunpack.c.h.b16 %v574
    %v2623 = vunpack.c.l.b16 %v575
    %v2624 = vunpack.c.h.b16 %v575
    %v2625 = vunpack.c.l.b16 %v576
    %v2626 = vunpack.c.h.b16 %v576
    %v2627 = vunpack.c.l.b16 %v577
    %v2628 = vunpack.c.h.b16 %v577
    %v2629 = vunpack.c.l.b16 %v578
    %v2630 = vunpack.c.h.b16 %v578
    %v2631 = vunpack.c.l.b16 %v579
    %v2632 = vunpack.c.h.b16 %v579
    %v2633 = vunpack.c.l.b16 %v580
    %v2634 = vunpack.c.h.b16 %v580
    %v2635 = vunpack.c.l.b16 %v581
    %v2636 = vunpack.c.h.b16 %v581
    %v2637 = vunpack.c.l.b16 %v582
    %v2638 = vunpack.c.h.b16 %v582
    %v2639 = vunpack.c.l.b16 %v583
    %v2640 = vunpack.c.h.b16 %v583
    %v2641 = vunpack.c.l.b16 %v584
    %v2642 = vunpack.c.h.b16 %v584
    %v2643 = vunpack.c.l.b16 %v585
    %v2644 = vunpack.c.h.b16 %v585
    %v2645 = vunpack.c.l.b16 %v586
    %v2646 = vunpack.c.h.b16 %v586
    %v2647 = vunpack.c.l.b16 %v587
    %v2648 = vunpack.c.h.b16 %v587
    %v2649 = vunpack.c.l.b16 %v588
    %v2650 = vunpack.c.h.b16 %v588
    %v2651 = vunpack.c.l.b16 %v589
    %v2652 = vunpack.c.h.b16 %v589
    %v2653 = vunpack.c.l.b16 %v590
    %v2654 = vunpack.c.h.b16 %v590
    %v2655 = vunpack.c.l.b16 %v591
    %v2656 = vunpack.c.h.b16 %v591
    %v2657 = vunpack.c.l.b16 %v592
    %v2658 = vunpack.c.h.b16 %v592
    %v2659 = vunpack.c.l.b16 %v593
    %v2660 = vunpack.c.h.b16 %v593
    %v2661 = vunpack.c.l.b16 %v594
    %v2662 = vunpack.c.h.b16 %v594
    %v2663 = vunpack.c.l.b16 %v595
    %v2664 = vunpack.c.h.b16 %v595
    %v2665 = vunpack.c.l.b16 %v596
    %v2666 = vunpack.c.h.b16 %v596
    %v2667 = vunpack.c.l.b16 %v597
    %v2668 = vunpack.c.h.b16 %v597
    %v2669 = vunpack.c.l.b16 %v598
    %v2670 = vunpack.c.h.b16 %v598
    %v2671 = vunpack.c.l.b16 %v599
    %v2672 = vunpack.c.h.b16 %v599
    %v2673 = vunpack.c.l.b16 %v600
    %v2674 = vunpack.c.h.b16 %v600
    %v2675 = vunpack.c.l.b16 %v601
    %v2676 = vunpack.c.h.b16 %v601
    %v2677 = vunpack.c.l.b16 %v602
    %v2678 = vunpack.c.h.b16 %v602
    %v2679 = vunpack.c.l.b16 %v603
    %v2680 = vunpack.c.h.b16 %v603
    %v2681 = vunpack.c.l.b16 %v604
    %v2682 = vunpack.c.h.b16 %v604
    %v2683 = vunpack.c.l.b16 %v605
    %v2684 = vunpack.c.h.b16 %v605
    %v2685 = vunpack.c.l.b16 %v606
    %v2686 = vunpack.c.h.b16 %v606
    %v2687 = vunpack.c.l.b16 %v607
    %v2688 = vunpack.c.h.b16 %v607
    %v2689 = vunpack.c.l.b16 %v608
    %v2690 = vunpack.c.h.b16 %v608
    %v2691 = vunpack.c.l.b16 %v609
    %v2692 = vunpack.c.h.b16 %v609
    %v2693 = vunpack.c.l.b16 %v610
    %v2694 = vunpack.c.h.b16 %v610
    %v2695 = vunpack.c.l.b16 %v611
    %v2696 = vunpack.c.h.b16 %v611
    %v2697 = vunpack.c.l.b16 %v612
    %v2698 = vunpack.c.h.b16 %v612
    %v2699 = vunpack.c.l.b16 %v613
    %v2700 = vunpack.c.h.b16 %v613
    %v2701 = vunpack.c.l.b16 %v614
    %v2702 = vunpack.c.h.b16 %v614
    %v2703 = vunpack.c.l.b16 %v615
    %v2704 = vunpack.c.h.b16 %v615
    %v2705 = vunpack.c.l.b16 %v616
    %v2706 = vunpack.c.h.b16 %v616
    %v2707 = vunpack.c.l.b16 %v617
    %v2708 = vunpack.c.h.b16 %v617
    %v2709 = vunpack.c.l.b16 %v618
    %v2710 = vunpack.c.h.b16 %v618
    %v2711 = vunpack.c.l.b16 %v619
    %v2712 = vunpack.c.h.b16 %v619
    %v2713 = vunpack.c.l.b16 %v620
    %v2714 = vunpack.c.h.b16 %v620
    %v2715 = vunpack.c.l.b16 %v621
    %v2716 = vunpack.c.h.b16 %v621
    %v2717 = vunpack.c.l.b16 %v622
    %v2718 = vunpack.c.h.b16 %v622
    %v2719 = vunpack.c.l.b16 %v623
    %v2720 = vunpack.c.h.b16 %v623
    %v2721 = vunpack.c.l.b16 %v624
    %v2722 = vunpack.c.h.b16 %v624
    %v2723 = vunpack.c.l.b16 %v625
    %v2724 = vunpack.c.h.b16 %v625
    %v2725 = vunpack.c.l.b16 %v626
    %v2726 = vunpack.c.h.b16 %v626
    %v2727 = vunpack.c.l.b16 %v627
    %v2728 = vunpack.c.h.b16 %v627
    %v2729 = vunpack.c.l.b16 %v628
    %v2730 = vunpack.c.h.b16 %v628
    %v2731 = vunpack.c.l.b16 %v629
    %v2732 = vunpack.c.h.b16 %v629
    %v2733 = vunpack.c.l.b16 %v630
    %v2734 = vunpack.c.h.b16 %v630
    %v2735 = vunpack.c.l.b16 %v631
    %v2736 = vunpack.c.h.b16 %v631
    %v2737 = vunpack.c.l.b16 %v632
    %v2738 = vunpack.c.h.b16 %v632
    %v2739 = vunpack.c.l.b16 %v633
    %v2740 = vunpack.c.h.b16 %v633
    %v2741 = vunpack.c.l.b16 %v634
    %v2742 = vunpack.c.h.b16 %v634
    %v2743 = vunpack.c.l.b16 %v635
    %v2744 = vunpack.c.h.b16 %v635
    %v2745 = vunpack.c.l.b16 %v636
    %v2746 = vunpack.c.h.b16 %v636
    %v2747 = vunpack.c.l.b16 %v637
    %v2748 = vunpack.c.h.b16 %v637
    %v2749 = vunpack.c.l.b16 %v638
    %v2750 = vunpack.c.h.b16 %v638
    %v2751 = vunpack.c.l.b16 %v639
    %v2752 = vunpack.c.h.b16 %v639
    %v2753 = vunpack.c.l.b16 %v640
    %v2754 = vunpack.c.h.b16 %v640
    %v2755 = vunpack.c.l.b16 %v641
    %v2756 = vunpack.c.h.b16 %v641
    %v2757 = vunpack.c.l.b16 %v642
    %v2758 = vunpack.c.h.b16 %v642
    %v2759 = vunpack.c.l.b16 %v643
    %v2760 = vunpack.c.h.b16 %v643
    %v2761 = vunpack.c.l.b16 %v644
    %v2762 = vunpack.c.h.b16 %v644
    %v2763 = vunpack.c.l.b16 %v645
    %v2764 = vunpack.c.h.b16 %v645
    %v2765 = vunpack.c.l.b16 %v646
    %v2766 = vunpack.c.h.b16 %v646
    %v2767 = vunpack.c.l.b16 %v647
    %v2768 = vunpack.c.h.b16 %v647
    %v2769 = vunpack.c.l.b16 %v648
    %v2770 = vunpack.c.h.b16 %v648
    %v2771 = vunpack.c.l.b16 %v649
    %v2772 = vunpack.c.h.b16 %v649
    %v2773 = vunpack.c.l.b16 %v650
    %v2774 = vunpack.c.h.b16 %v650
    %v2775 = vunpack.c.l.b16 %v651
    %v2776 = vunpack.c.h.b16 %v651
    %v2777 = vunpack.c.l.b16 %v652
    %v2778 = vunpack.c.h.b16 %v652
    %v2779 = vunpack.c.l.b16 %v653
    %v2780 = vunpack.c.h.b16 %v653
    %v2781 = vunpack.c.l.b16 %v654
    %v2782 = vunpack.c.h.b16 %v654
    %v2783 = vunpack.c.l.b16 %v655
    %v2784 = vunpack.c.h.b16 %v655
    %v2785 = vunpack.c.l.b16 %v656
    %v2786 = vunpack.c.h.b16 %v656
    %v2787 = vunpack.c.l.b16 %v657
    %v2788 = vunpack.c.h.b16 %v657
    %v2789 = vunpack.c.l.b16 %v658
    %v2790 = vunpack.c.h.b16 %v658
    %v2791 = vunpack.c.l.b16 %v659
    %v2792 = vunpack.c.h.b16 %v659
    %v2793 = vunpack.c.l.b16 %v660
    %v2794 = vunpack.c.h.b16 %v660
    %v2795 = vunpack.c.l.b16 %v661
    %v2796 = vunpack.c.h.b16 %v661
    %v2797 = vunpack.c.l.b16 %v662
    %v2798 = vunpack.c.h.b16 %v662
    %v2799 = vunpack.c.l.b16 %v663
    %v2800 = vunpack.c.h.b16 %v663
    %v2801 = vunpack.c.l.b16 %v664
    %v2802 = vunpack.c.h.b16 %v664
    %v2803 = vunpack.c.l.b16 %v665
    %v2804 = vunpack.c.h.b16 %v665
    %v2805 = vunpack.c.l.b16 %v666
    %v2806 = vunpack.c.h.b16 %v666
    %v2807 = vunpack.c.l.b16 %v667
    %v2808 = vunpack.c.h.b16 %v667
    %v2809 = vunpack.c.l.b16 %v668
    %v2810 = vunpack.c.h.b16 %v668
    %v2811 = vunpack.c.l.b16 %v669
    %v2812 = vunpack.c.h.b16 %v669
    %v2813 = vunpack.c.l.b16 %v670
    %v2814 = vunpack.c.h.b16 %v670
    %v2815 = vunpack.c.l.b16 %v671
    %v2816 = vunpack.c.h.b16 %v671
    %v2817 = vunpack.c.l.b16 %v672
    %v2818 = vunpack.c.h.b16 %v672
    %v2819 = vunpack.c.l.b16 %v673
    %v2820 = vunpack.c.h.b16 %v673
    %v2821 = vunpack.c.l.b16 %v674
    %v2822 = vunpack.c.h.b16 %v674
    %v2823 = vunpack.c.l.b16 %v675
    %v2824 = vunpack.c.h.b16 %v675
    %v2825 = vunpack.c.l.b16 %v676
    %v2826 = vunpack.c.h.b16 %v676
    %v2827 = vunpack.c.l.b16 %v677
    %v2828 = vunpack.c.h.b16 %v677
    %v2829 = vunpack.c.l.b16 %v678
    %v2830 = vunpack.c.h.b16 %v678
    %v2831 = vunpack.c.l.b16 %v679
    %v2832 = vunpack.c.h.b16 %v679
    %v2833 = vunpack.c.l.b16 %v680
    %v2834 = vunpack.c.h.b16 %v680
    %v2835 = vunpack.c.l.b16 %v681
    %v2836 = vunpack.c.h.b16 %v681
    %v2837 = vunpack.c.l.b16 %v682
    %v2838 = vunpack.c.h.b16 %v682
    %v2839 = vunpack.c.l.b16 %v683
    %v2840 = vunpack.c.h.b16 %v683
    %v2841 = vunpack.c.l.b16 %v684
    %v2842 = vunpack.c.h.b16 %v684
    %v2843 = vunpack.c.l.b16 %v685
    %v2844 = vunpack.c.h.b16 %v685
    %v2845 = vunpack.c.l.b16 %v686
    %v2846 = vunpack.c.h.b16 %v686
    %v2847 = vunpack.c.l.b16 %v687
    %v2848 = vunpack.c.h.b16 %v687
    %v2849 = vunpack.c.l.b16 %v688
    %v2850 = vunpack.c.h.b16 %v688
    %v2851 = vunpack.c.l.b16 %v689
    %v2852 = vunpack.c.h.b16 %v689
    %v2853 = vunpack.c.l.b16 %v690
    %v2854 = vunpack.c.h.b16 %v690
    %v2855 = vunpack.c.l.b16 %v691
    %v2856 = vunpack.c.h.b16 %v691
    %v2857 = vunpack.c.l.b16 %v692
    %v2858 = vunpack.c.h.b16 %v692
    %v2859 = vunpack.c.l.b16 %v693
    %v2860 = vunpack.c.h.b16 %v693
    %v2861 = vunpack.c.l.b16 %v694
    %v2862 = vunpack.c.h.b16 %v694
    %v2863 = vunpack.c.l.b16 %v695
    %v2864 = vunpack.c.h.b16 %v695
    %v2865 = vunpack.c.l.b16 %v696
    %v2866 = vunpack.c.h.b16 %v696
    %v2867 = vunpack.c.l.b16 %v697
    %v2868 = vunpack.c.h.b16 %v697
    %v2869 = vunpack.c.l.b16 %v698
    %v2870 = vunpack.c.h.b16 %v698
    %v2871 = vunpack.c.l.b16 %v699
    %v2872 = vunpack.c.h.b16 %v699
    %v2873 = vunpack.c.l.b16 %v700
    %v2874 = vunpack.c.h.b16 %v700
    %v2875 = vunpack.c.l.b16 %v701
    %v2876 = vunpack.c.h.b16 %v701
    %v2877 = vunpack.c.l.b16 %v702
    %v2878 = vunpack.c.h.b16 %v702
    %v2879 = vunpack.c.l.b16 %v703
    %v2880 = vunpack.c.h.b16 %v703
    %v2881 = vunpack.c.l.b16 %v704
    %v2882 = vunpack.c.h.b16 %v704
    %v2883 = vunpack.c.l.b16 %v705
    %v2884 = vunpack.c.h.b16 %v705
    %v2885 = vunpack.c.l.b16 %v706
    %v2886 = vunpack.c.h.b16 %v706
    %v2887 = vunpack.c.l.b16 %v707
    %v2888 = vunpack.c.h.b16 %v707
    %v2889 = vunpack.c.l.b16 %v708
    %v2890 = vunpack.c.h.b16 %v708
    %v2891 = vunpack.c.l.b16 %v709
    %v2892 = vunpack.c.h.b16 %v709
    %v2893 = vunpack.c.l.b16 %v710
    %v2894 = vunpack.c.h.b16 %v710
    %v2895 = vunpack.c.l.b16 %v711
    %v2896 = vunpack.c.h.b16 %v711
    %v2897 = vunpack.c.l.b16 %v712
    %v2898 = vunpack.c.h.b16 %v712
    %v2899 = vunpack.c.l.b16 %v713
    %v2900 = vunpack.c.h.b16 %v713
    %v2901 = vunpack.c.l.b16 %v714
    %v2902 = vunpack.c.h.b16 %v714
    %v2903 = vunpack.c.l.b16 %v715
    %v2904 = vunpack.c.h.b16 %v715
    %v2905 = vunpack.c.l.b16 %v716
    %v2906 = vunpack.c.h.b16 %v716
    %v2907 = vunpack.c.l.b16 %v717
    %v2908 = vunpack.c.h.b16 %v717
    %v2909 = vunpack.c.l.b16 %v718
    %v2910 = vunpack.c.h.b16 %v718
    %v2911 = vunpack.c.l.b16 %v719
    %v2912 = vunpack.c.h.b16 %v719
    %v2913 = vunpack.c.l.b16 %v720
    %v2914 = vunpack.c.h.b16 %v720
    %v2915 = vunpack.c.l.b16 %v721
    %v2916 = vunpack.c.h.b16 %v721
    %v2917 = vunpack.c.l.b16 %v722
    %v2918 = vunpack.c.h.b16 %v722
    %v2919 = vunpack.c.l.b16 %v723
    %v2920 = vunpack.c.h.b16 %v723
    %v2921 = vunpack.c.l.b16 %v724
    %v2922 = vunpack.c.h.b16 %v724
    %v2923 = vunpack.c.l.b16 %v725
    %v2924 = vunpack.c.h.b16 %v725
    %v2925 = vunpack.c.l.b16 %v726
    %v2926 = vunpack.c.h.b16 %v726
    %v2927 = vunpack.c.l.b16 %v727
    %v2928 = vunpack.c.h.b16 %v727
    %v2929 = vunpack.c.l.b16 %v728
    %v2930 = vunpack.c.h.b16 %v728
    %v2931 = vunpack.c.l.b16 %v729
    %v2932 = vunpack.c.h.b16 %v729
    %v2933 = vunpack.c.l.b16 %v730
    %v2934 = vunpack.c.h.b16 %v730
    %v2935 = vunpack.c.l.b16 %v731
    %v2936 = vunpack.c.h.b16 %v731
    %v2937 = vunpack.c.l.b16 %v732
    %v2938 = vunpack.c.h.b16 %v732
    %v2939 = vunpack.c.l.b16 %v733
    %v2940 = vunpack.c.h.b16 %v733
    %v2941 = vunpack.c.l.b16 %v734
    %v2942 = vunpack.c.h.b16 %v734
    %v2943 = vunpack.c.l.b16 %v735
    %v2944 = vunpack.c.h.b16 %v735
    %v2945 = vunpack.c.l.b16 %v736
    %v2946 = vunpack.c.h.b16 %v736
    %v2947 = vunpack.c.l.b16 %v737
    %v2948 = vunpack.c.h.b16 %v737
    %v2949 = vunpack.c.l.b16 %v738
    %v2950 = vunpack.c.h.b16 %v738
    %v2951 = vunpack.c.l.b16 %v739
    %v2952 = vunpack.c.h.b16 %v739
    %v2953 = vunpack.c.l.b16 %v740
    %v2954 = vunpack.c.h.b16 %v740
    %v2955 = vunpack.c.l.b16 %v741
    %v2956 = vunpack.c.h.b16 %v741
    %v2957 = vunpack.c.l.b16 %v742
    %v2958 = vunpack.c.h.b16 %v742
    %v2959 = vunpack.c.l.b16 %v743
    %v2960 = vunpack.c.h.b16 %v743
    %v2961 = vunpack.c.l.b16 %v744
    %v2962 = vunpack.c.h.b16 %v744
    %v2963 = vunpack.c.l.b16 %v745
    %v2964 = vunpack.c.h.b16 %v745
    %v2965 = vunpack.c.l.b16 %v746
    %v2966 = vunpack.c.h.b16 %v746
    %v2967 = vunpack.c.l.b16 %v747
    %v2968 = vunpack.c.h.b16 %v747
    %v2969 = vunpack.c.l.b16 %v748
    %v2970 = vunpack.c.h.b16 %v748
    %v2971 = vunpack.c.l.b16 %v749
    %v2972 = vunpack.c.h.b16 %v749
    %v2973 = vunpack.c.l.b16 %v750
    %v2974 = vunpack.c.h.b16 %v750
    %v2975 = vunpack.c.l.b16 %v751
    %v2976 = vunpack.c.h.b16 %v751
    %v2977 = vunpack.c.l.b16 %v752
    %v2978 = vunpack.c.h.b16 %v752
    %v2979 = vunpack.c.l.b16 %v753
    %v2980 = vunpack.c.h.b16 %v753
    %v2981 = vunpack.c.l.b16 %v754
    %v2982 = vunpack.c.h.b16 %v754
    %v2983 = vunpack.c.l.b16 %v755
    %v2984 = vunpack.c.h.b16 %v755
    %v2985 = vunpack.c.l.b16 %v756
    %v2986 = vunpack.c.h.b16 %v756
    %v2987 = vunpack.c.l.b16 %v757
    %v2988 = vunpack.c.h.b16 %v757
    %v2989 = vunpack.c.l.b16 %v758
    %v2990 = vunpack.c.h.b16 %v758
    %v2991 = vunpack.c.l.b16 %v759
    %v2992 = vunpack.c.h.b16 %v759
    %v2993 = vunpack.c.l.b16 %v760
    %v2994 = vunpack.c.h.b16 %v760
    %v2995 = vunpack.c.l.b16 %v761
    %v2996 = vunpack.c.h.b16 %v761
    %v2997 = vunpack.c.l.b16 %v762
    %v2998 = vunpack.c.h.b16 %v762
    %v2999 = vunpack.c.l.b16 %v763
    %v3000 = vunpack.c.h.b16 %v763
    %v3001 = vunpack.c.l.b16 %v764
    %v3002 = vunpack.c.h.b16 %v764
    %v3003 = vunpack.c.l.b16 %v765
    %v3004 = vunpack.c.h.b16 %v765
    %v3005 = vunpack.c.l.b16 %v766
    %v3006 = vunpack.c.h.b16 %v766
    %v3007 = vunpack.c.l.b16 %v767
    %v3008 = vunpack.c.h.b16 %v767
    %v3009 = vunpack.c.l.b16 %v768
    %v3010 = vunpack.c.h.b16 %v768
    %v3011 = vunpack.c.l.b16 %v769
    %v3012 = vunpack.c.h.b16 %v769
    %v3013 = vunpack.c.l.b16 %v770
    %v3014 = vunpack.c.h.b16 %v770
    %v3015 = vunpack.c.l.b16 %v771
    %v3016 = vunpack.c.h.b16 %v771
    %v3017 = vunpack.c.l.b16 %v772
    %v3018 = vunpack.c.h.b16 %v772
    %v3019 = vunpack.c.l.b16 %v773
    %v3020 = vunpack.c.h.b16 %v773
    %v3021 = vunpack.c.l.b16 %v774
    %v3022 = vunpack.c.h.b16 %v774
    %v3023 = vunpack.c.l.b16 %v775
    %v3024 = vunpack.c.h.b16 %v775
    %v3025 = vunpack.c.l.b16 %v776
    %v3026 = vunpack.c.h.b16 %v776
    %v3027 = vunpack.c.l.b16 %v777
    %v3028 = vunpack.c.h.b16 %v777
    %v3029 = vunpack.c.l.b16 %v778
    %v3030 = vunpack.c.h.b16 %v778
    %v3031 = vunpack.c.l.b16 %v779
    %v3032 = vunpack.c.h.b16 %v779
    %v3033 = vunpack.c.l.b16 %v780
    %v3034 = vunpack.c.h.b16 %v780
    %v3035 = vunpack.c.l.b16 %v781
    %v3036 = vunpack.c.h.b16 %v781
    %v3037 = vunpack.c.l.b16 %v782
    %v3038 = vunpack.c.h.b16 %v782
    %v3039 = vunpack.c.l.b16 %v783
    %v3040 = vunpack.c.h.b16 %v783
    %v3041 = vunpack.c.l.b16 %v784
    %v3042 = vunpack.c.h.b16 %v784
    %v3043 = vunpack.c.l.b16 %v785
    %v3044 = vunpack.c.h.b16 %v785
    %v3045 = vunpack.c.l.b16 %v786
    %v3046 = vunpack.c.h.b16 %v786
    %v3047 = vunpack.c.l.b16 %v787
    %v3048 = vunpack.c.h.b16 %v787
    %v3049 = vunpack.c.l.b16 %v788
    %v3050 = vunpack.c.h.b16 %v788
    %v3051 = vunpack.c.l.b16 %v789
    %v3052 = vunpack.c.h.b16 %v789
    %v3053 = vunpack.c.l.b16 %v790
    %v3054 = vunpack.c.h.b16 %v790
    %v3055 = vunpack.c.l.b16 %v791
    %v3056 = vunpack.c.h.b16 %v791
    %v3057 = vunpack.c.l.b16 %v792
    %v3058 = vunpack.c.h.b16 %v792
    %v3059 = vunpack.c.l.b16 %v793
    %v3060 = vunpack.c.h.b16 %v793
    %v3061 = vunpack.c.l.b16 %v794
    %v3062 = vunpack.c.h.b16 %v794
    %v3063 = vunpack.c.l.b16 %v795
    %v3064 = vunpack.c.h.b16 %v795
    %v3065 = vunpack.c.l.b16 %v796
    %v3066 = vunpack.c.h.b16 %v796
    %v3067 = vunpack.c.l.b16 %v797
    %v3068 = vunpack.c.h.b16 %v797
    %v3069 = vunpack.c.l.b16 %v798
    %v3070 = vunpack.c.h.b16 %v798
    %v3071 = vunpack.c.l.b16 %v799
    %v3072 = vunpack.c.h.b16 %v799
    %v3073 = vunpack.c.l.b16 %v800
    %v3074 = vunpack.c.h.b16 %v800
    %v3075 = vunpack.c.l.b16 %v801
    %v3076 = vunpack.c.h.b16 %v801
    %v3077 = vunpack.c.l.b16 %v802
    %v3078 = vunpack.c.h.b16 %v802
    %v3079 = vunpack.c.l.b16 %v803
    %v3080 = vunpack.c.h.b16 %v803
    %v3081 = vunpack.c.l.b16 %v804
    %v3082 = vunpack.c.h.b16 %v804
    %v3083 = vunpack.c.l.b16 %v805
    %v3084 = vunpack.c.h.b16 %v805
    %v3085 = vunpack.c.l.b16 %v806
    %v3086 = vunpack.c.h.b16 %v806
    %v3087 = vunpack.c.l.b16 %v807
    %v3088 = vunpack.c.h.b16 %v807
    %v3089 = vunpack.c.l.b16 %v808
    %v3090 = vunpack.c.h.b16 %v808
    %v3091 = vunpack.c.l.b16 %v809
    %v3092 = vunpack.c.h.b16 %v809
    %v3093 = vunpack.c.l.b16 %v810
    %v3094 = vunpack.c.h.b16 %v810
    %v3095 = vunpack.c.l.b16 %v811
    %v3096 = vunpack.c.h.b16 %v811
    %v3097 = vunpack.c.l.b16 %v812
    %v3098 = vunpack.c.h.b16 %v812
    %v3099 = vunpack.c.l.b16 %v813
    %v3100 = vunpack.c.h.b16 %v813
    %v3101 = vunpack.c.l.b16 %v814
    %v3102 = vunpack.c.h.b16 %v814
    %v3103 = vunpack.c.l.b16 %v815
    %v3104 = vunpack.c.h.b16 %v815
    %v3105 = vunpack.c.l.b16 %v816
    %v3106 = vunpack.c.h.b16 %v816
    %v3107 = vunpack.c.l.b16 %v817
    %v3108 = vunpack.c.h.b16 %v817
    %v3109 = vunpack.c.l.b16 %v818
    %v3110 = vunpack.c.h.b16 %v818
    %v3111 = vunpack.c.l.b16 %v819
    %v3112 = vunpack.c.h.b16 %v819
    %v3113 = vunpack.c.l.b16 %v820
    %v3114 = vunpack.c.h.b16 %v820
    %v3115 = vunpack.c.l.b16 %v821
    %v3116 = vunpack.c.h.b16 %v821
    %v3117 = vunpack.c.l.b16 %v822
    %v3118 = vunpack.c.h.b16 %v822
    %v3119 = vunpack.c.l.b16 %v823
    %v3120 = vunpack.c.h.b16 %v823
    %v3121 = vunpack.c.l.b16 %v824
    %v3122 = vunpack.c.h.b16 %v824
    %v3123 = vunpack.c.l.b16 %v825
    %v3124 = vunpack.c.h.b16 %v825
    %v3125 = vunpack.c.l.b16 %v826
    %v3126 = vunpack.c.h.b16 %v826
    %v3127 = vunpack.c.l.b16 %v827
    %v3128 = vunpack.c.h.b16 %v827
    %v3129 = vunpack.c.l.b16 %v828
    %v3130 = vunpack.c.h.b16 %v828
    %v3131 = vunpack.c.l.b16 %v829
    %v3132 = vunpack.c.h.b16 %v829
    %v3133 = vunpack.c.l.b16 %v830
    %v3134 = vunpack.c.h.b16 %v830
    %v3135 = vunpack.c.l.b16 %v831
    %v3136 = vunpack.c.h.b16 %v831
    %v3137 = vunpack.c.l.b16 %v832
    %v3138 = vunpack.c.h.b16 %v832
    %v3139 = vunpack.c.l.b16 %v833
    %v3140 = vunpack.c.h.b16 %v833
    %v3141 = vunpack.c.l.b16 %v834
    %v3142 = vunpack.c.h.b16 %v834
    %v3143 = vunpack.c.l.b16 %v835
    %v3144 = vunpack.c.h.b16 %v835
    %v3145 = vunpack.c.l.b16 %v836
    %v3146 = vunpack.c.h.b16 %v836
    %v3147 = vunpack.c.l.b16 %v837
    %v3148 = vunpack.c.h.b16 %v837
    %v3149 = vunpack.c.l.b16 %v838
    %v3150 = vunpack.c.h.b16 %v838
    %v3151 = vunpack.c.l.b16 %v839
    %v3152 = vunpack.c.h.b16 %v839
    %v3153 = vunpack.c.l.b16 %v840
    %v3154 = vunpack.c.h.b16 %v840
    %v3155 = vunpack.c.l.b16 %v841
    %v3156 = vunpack.c.h.b16 %v841
    %v3157 = vunpack.c.l.b16 %v842
    %v3158 = vunpack.c.h.b16 %v842
    %v3159 = vunpack.c.l.b16 %v843
    %v3160 = vunpack.c.h.b16 %v843
    %v3161 = vunpack.c.l.b16 %v844
    %v3162 = vunpack.c.h.b16 %v844
    %v3163 = vunpack.c.l.b16 %v845
    %v3164 = vunpack.c.h.b16 %v845
    %v3165 = vunpack.c.l.b16 %v846
    %v3166 = vunpack.c.h.b16 %v846
    %v3167 = vunpack.c.l.b16 %v847
    %v3168 = vunpack.c.h.b16 %v847
    %v3169 = vunpack.c.l.b16 %v848
    %v3170 = vunpack.c.h.b16 %v848
    %v3171 = vunpack.c.l.b16 %v849
    %v3172 = vunpack.c.h.b16 %v849
    %v3173 = vunpack.c.l.b16 %v850
    %v3174 = vunpack.c.h.b16 %v850
    %v3175 = vunpack.c.l.b16 %v851
    %v3176 = vunpack.c.h.b16 %v851
    %v3177 = vunpack.c.l.b16 %v852
    %v3178 = vunpack.c.h.b16 %v852
    %v3179 = vunpack.c.l.b16 %v853
    %v3180 = vunpack.c.h.b16 %v853
    %v3181 = vunpack.c.l.b16 %v854
    %v3182 = vunpack.c.h.b16 %v854
    %v3183 = vunpack.c.l.b16 %v855
    %v3184 = vunpack.c.h.b16 %v855
    %v3185 = vunpack.c.l.b16 %v856
    %v3186 = vunpack.c.h.b16 %v856
    %v3187 = vunpack.c.l.b16 %v857
    %v3188 = vunpack.c.h.b16 %v857
    %v3189 = vunpack.c.l.b16 %v858
    %v3190 = vunpack.c.h.b16 %v858
    %v3191 = vunpack.c.l.b16 %v859
    %v3192 = vunpack.c.h.b16 %v859
    %v3193 = vunpack.c.l.b16 %v860
    %v3194 = vunpack.c.h.b16 %v860
    %v3195 = vunpack.c.l.b16 %v861
    %v3196 = vunpack.c.h.b16 %v861
    %v3197 = vunpack.c.l.b16 %v862
    %v3198 = vunpack.c.h.b16 %v862
    %v3199 = vunpack.c.l.b16 %v863
    %v3200 = vunpack.c.h.b16 %v863
    %v3201 = vunpack.c.l.b16 %v864
    %v3202 = vunpack.c.h.b16 %v864
    %v3203 = vunpack.c.l.b16 %v865
    %v3204 = vunpack.c.h.b16 %v865
    %v3205 = vunpack.c.l.b16 %v866
    %v3206 = vunpack.c.h.b16 %v866
    %v3207 = vunpack.c.l.b16 %v867
    %v3208 = vunpack.c.h.b16 %v867
    %v3209 = vunpack.c.l.b16 %v868
    %v3210 = vunpack.c.h.b16 %v868
    %v3211 = vunpack.c.l.b16 %v869
    %v3212 = vunpack.c.h.b16 %v869
    %v3213 = vunpack.c.l.b16 %v870
    %v3214 = vunpack.c.h.b16 %v870
    %v3215 = vunpack.c.l.b16 %v871
    %v3216 = vunpack.c.h.b16 %v871
    %v3217 = vunpack.c.l.b16 %v872
    %v3218 = vunpack.c.h.b16 %v872
    %v3219 = vunpack.c.l.b16 %v873
    %v3220 = vunpack.c.h.b16 %v873
    %v3221 = vunpack.c.l.b16 %v874
    %v3222 = vunpack.c.h.b16 %v874
    %v3223 = vunpack.c.l.b16 %v875
    %v3224 = vunpack.c.h.b16 %v875
    %v3225 = vunpack.c.l.b16 %v876
    %v3226 = vunpack.c.h.b16 %v876
    %v3227 = vunpack.c.l.b16 %v877
    %v3228 = vunpack.c.h.b16 %v877
    %v3229 = vunpack.c.l.b16 %v878
    %v3230 = vunpack.c.h.b16 %v878
    %v3231 = vunpack.c.l.b16 %v879
    %v3232 = vunpack.c.h.b16 %v879
    %v3233 = vunpack.c.l.b16 %v880
    %v3234 = vunpack.c.h.b16 %v880
    %v3235 = vunpack.c.l.b16 %v881
    %v3236 = vunpack.c.h.b16 %v881
    %v3237 = vunpack.c.l.b16 %v882
    %v3238 = vunpack.c.h.b16 %v882
    %v3239 = vunpack.c.l.b16 %v883
    %v3240 = vunpack.c.h.b16 %v883
    %v3241 = vunpack.c.l.b16 %v884
    %v3242 = vunpack.c.h.b16 %v884
    %v3243 = vunpack.c.l.b16 %v885
    %v3244 = vunpack.c.h.b16 %v885
    %v3245 = vunpack.c.l.b16 %v886
    %v3246 = vunpack.c.h.b16 %v886
    %v3247 = vunpack.c.l.b16 %v887
    %v3248 = vunpack.c.h.b16 %v887
    %v3249 = vunpack.c.l.b16 %v888
    %v3250 = vunpack.c.h.b16 %v888
    %v3251 = vunpack.c.l.b16 %v889
    %v3252 = vunpack.c.h.b16 %v889
    %v3253 = vunpack.c.l.b16 %v890
    %v3254 = vunpack.c.h.b16 %v890
    %v3255 = vunpack.c.l.b16 %v891
    %v3256 = vunpack.c.h.b16 %v891
    %v3257 = vunpack.c.l.b16 %v892
    %v3258 = vunpack.c.h.b16 %v892
    %v3259 = vunpack.c.l.b16 %v893
    %v3260 = vunpack.c.h.b16 %v893
    %v3261 = vunpack.c.l.b16 %v894
    %v3262 = vunpack.c.h.b16 %v894
    %v3263 = vunpack.c.l.b16 %v895
    %v3264 = vunpack.c.h.b16 %v895
    %v3265 = vunpack.c.l.b16 %v896
    %v3266 = vunpack.c.h.b16 %v896
    %v3267 = vunpack.c.l.b16 %v897
    %v3268 = vunpack.c.h.b16 %v897
    %v3269 = vunpack.c.l.b16 %v898
    %v3270 = vunpack.c.h.b16 %v898
    %v3271 = vunpack.c.l.b16 %v899
    %v3272 = vunpack.c.h.b16 %v899
    %v3273 = vunpack.c.l.b16 %v900
    %v3274 = vunpack.c.h.b16 %v900
    %v3275 = vunpack.c.l.b16 %v901
    %v3276 = vunpack.c.h.b16 %v901
    %v3277 = vunpack.c.l.b16 %v902
    %v3278 = vunpack.c.h.b16 %v902
    %v3279 = vunpack.c.l.b16 %v903
    %v3280 = vunpack.c.h.b16 %v903
    %v3281 = vunpack.c.l.b16 %v904
    %v3282 = vunpack.c.h.b16 %v904
    %v3283 = vunpack.c.l.b16 %v905
    %v3284 = vunpack.c.h.b16 %v905
    %v3285 = vunpack.c.l.b16 %v906
    %v3286 = vunpack.c.h.b16 %v906
    %v3287 = vunpack.c.l.b16 %v907
    %v3288 = vunpack.c.h.b16 %v907
    %v3289 = vunpack.c.l.b16 %v908
    %v3290 = vunpack.c.h.b16 %v908
    %v3291 = vunpack.c.l.b16 %v909
    %v3292 = vunpack.c.h.b16 %v909
    %v3293 = vunpack.c.l.b16 %v910
    %v3294 = vunpack.c.h.b16 %v910
    %v3295 = vunpack.c.l.b16 %v911
    %v3296 = vunpack.c.h.b16 %v911
    %v3297 = vunpack.c.l.b16 %v912
    %v3298 = vunpack.c.h.b16 %v912
    %v3299 = vunpack.c.l.b16 %v913
    %v3300 = vunpack.c.h.b16 %v913
    %v3301 = vunpack.c.l.b16 %v914
    %v3302 = vunpack.c.h.b16 %v914
    %v3303 = vpack.c.b16 %v1771, %v1767
    %v3304 = vpack.c.b16 %v1772, %v1768
    %v3305 = vpack.c.b16 %v1773, %v1769
    %v3306 = vpack.c.b16 %v1774, %v1770
    %v3307 = vpack.c.b16 %v1779, %v1775
    %v3308 = vpack.c.b16 %v1780, %v1776
    %v3309 = vpack.c.b16 %v1781, %v1777
    %v3310 = vpack.c.b16 %v1782, %v1778
    %v3311 = vpack.c.b16 %v1787, %v1783
    %v3312 = vpack.c.b16 %v1788, %v1784
    %v3313 = vpack.c.b16 %v1789, %v1785
    %v3314 = vpack.c.b16 %v1790, %v1786
    %v3315 = vpack.c.b16 %v1795, %v1791
    %v3316 = vpack.c.b16 %v1796, %v1792
    %v3317 = vpack.c.b16 %v1797, %v1793
    %v3318 = vpack.c.b16 %v1798, %v1794
    %v3319 = vpack.c.b16 %v1803, %v1799
    %v3320 = vpack.c.b16 %v1804, %v1800
    %v3321 = vpack.c.b16 %v1805, %v1801
    %v3322 = vpack.c.b16 %v1806, %v1802
    %v3323 = vpack.c.b16 %v1811, %v1807
    %v3324 = vpack.c.b16 %v1812, %v1808
    %v3325 = vpack.c.b16 %v1813, %v1809
    %v3326 = vpack.c.b16 %v1814, %v1810
    %v3327 = vpack.c.b16 %v1819, %v1815
    %v3328 = vpack.c.b16 %v1820, %v1816
    %v3329 = vpack.c.b16 %v1821, %v1817
    %v3330 = vpack.c.b16 %v1822, %v1818
    %v3331 = vpack.c.b16 %v1827, %v1823
    %v3332 = vpack.c.b16 %v1828, %v1824
    %v3333 = vpack.c.b16 %v1829, %v1825
    %v3334 = vpack.c.b16 %v1830, %v1826
    %v3335 = vpack.c.b16 %v1835, %v1831
    %v3336 = vpack.c.b16 %v1836, %v1832
    %v3337 = vpack.c.b16 %v1837, %v1833
    %v3338 = vpack.c.b16 %v1838, %v1834
    %v3339 = vpack.c.b16 %v1843, %v1839
    %v3340 = vpack.c.b16 %v1844, %v1840
    %v3341 = vpack.c.b16 %v1845, %v1841
    %v3342 = vpack.c.b16 %v1846, %v1842
    %v3343 = vpack.c.b16 %v1851, %v1847
    %v3344 = vpack.c.b16 %v1852, %v1848
    %v3345 = vpack.c.b16 %v1853, %v1849
    %v3346 = vpack.c.b16 %v1854, %v1850
    %v3347 = vpack.c.b16 %v1859, %v1855
    %v3348 = vpack.c.b16 %v1860, %v1856
    %v3349 = vpack.c.b16 %v1861, %v1857
    %v3350 = vpack.c.b16 %v1862, %v1858
    %v3351 = vpack.c.b16 %v1867, %v1863
    %v3352 = vpack.c.b16 %v1868, %v1864
    %v3353 = vpack.c.b16 %v1869, %v1865
    %v3354 = vpack.c.b16 %v1870, %v1866
    %v3355 = vpack.c.b16 %v1875, %v1871
    %v3356 = vpack.c.b16 %v1876, %v1872
    %v3357 = vpack.c.b16 %v1877, %v1873
    %v3358 = vpack.c.b16 %v1878, %v1874
    %v3359 = vpack.c.b16 %v1883, %v1879
    %v3360 = vpack.c.b16 %v1884, %v1880
    %v3361 = vpack.c.b16 %v1885, %v1881
    %v3362 = vpack.c.b16 %v1886, %v1882
    %v3363 = vpack.c.b16 %v1891, %v1887
    %v3364 = vpack.c.b16 %v1892, %v1888
    %v3365 = vpack.c.b16 %v1893, %v1889
    %v3366 = vpack.c.b16 %v1894, %v1890
    %v3367 = vpack.c.b16 %v1899, %v1895
    %v3368 = vpack.c.b16 %v1900, %v1896
    %v3369 = vpack.c.b16 %v1901, %v1897
    %v3370 = vpack.c.b16 %v1902, %v1898
    %v3371 = vpack.c.b16 %v1907, %v1903
    %v3372 = vpack.c.b16 %v1908, %v1904
    %v3373 = vpack.c.b16 %v1909, %v1905
    %v3374 = vpack.c.b16 %v1910, %v1906
    %v3375 = vpack.c.b16 %v1915, %v1911
    %v3376 = vpack.c.b16 %v1916, %v1912
    %v3377 = vpack.c.b16 %v1917, %v1913
    %v3378 = vpack.c.b16 %v1918, %v1914
    %v3379 = vpack.c.b16 %v1923, %v1919
    %v3380 = vpack.c.b16 %v1924, %v1920
    %v3381 = vpack.c.b16 %v1925, %v1921
    %v3382 = vpack.c.b16 %v1926, %v1922
    %v3383 = vpack.c.b16 %v1931, %v1927
    %v3384 = vpack.c.b16 %v1932, %v1928
    %v3385 = vpack.c.b16 %v1933, %v1929
    %v3386 = vpack.c.b16 %v1934, %v1930
    %v3387 = vpack.c.b16 %v1939, %v1935
    %v3388 = vpack.c.b16 %v1940, %v1936
    %v3389 = vpack.c.b16 %v1941, %v1937
    %v3390 = vpack.c.b16 %v1942, %v1938
    %v3391 = vpack.c.b16 %v1947, %v1943
    %v3392 = vpack.c.b16 %v1948, %v1944
    %v3393 = vpack.c.b16 %v1949, %v1945
    %v3394 = vpack.c.b16 %v1950, %v1946
    %v3395 = vpack.c.b16 %v1955, %v1951
    %v3396 = vpack.c.b16 %v1956, %v1952
    %v3397 = vpack.c.b16 %v1957, %v1953
    %v3398 = vpack.c.b16 %v1958, %v1954
    %v3399 = vpack.c.b16 %v1963, %v1959
    %v3400 = vpack.c.b16 %v1964, %v1960
    %v3401 = vpack.c.b16 %v1965, %v1961
    %v3402 = vpack.c.b16 %v1966, %v1962
    %v3403 = vpack.c.b16 %v1971, %v1967
    %v3404 = vpack.c.b16 %v1972, %v1968
    %v3405 = vpack.c.b16 %v1973, %v1969
    %v3406 = vpack.c.b16 %v1974, %v1970
    %v3407 = vpack.c.b16 %v1979, %v1975
    %v3408 = vpack.c.b16 %v1980, %v1976
    %v3409 = vpack.c.b16 %v1981, %v1977
    %v3410 = vpack.c.b16 %v1982, %v1978
    %v3411 = vpack.c.b16 %v1987, %v1983
    %v3412 = vpack.c.b16 %v1988, %v1984
    %v3413 = vpack.c.b16 %v1989, %v1985
    %v3414 = vpack.c.b16 %v1990, %v1986
    %v3415 = vpack.c.b16 %v1995, %v1991
    %v3416 = vpack.c.b16 %v1996, %v1992
    %v3417 = vpack.c.b16 %v1997, %v1993
    %v3418 = vpack.c.b16 %v1998, %v1994
    %v3419 = vpack.c.b16 %v2003, %v1999
    %v3420 = vpack.c.b16 %v2004, %v2000
    %v3421 = vpack.c.b16 %v2005, %v2001
    %v3422 = vpack.c.b16 %v2006, %v2002
    %v3423 = vpack.c.b16 %v2011, %v2007
    %v3424 = vpack.c.b16 %v2012, %v2008
    %v3425 = vpack.c.b16 %v2013, %v2009
    %v3426 = vpack.c.b16 %v2014, %v2010
    %v3427 = vpack.c.b16 %v2019, %v2015
    %v3428 = vpack.c.b16 %v2020, %v2016
    %v3429 = vpack.c.b16 %v2021, %v2017
    %v3430 = vpack.c.b16 %v2022, %v2018
    %v3431 = vpack.c.b16 %v2027, %v2023
    %v3432 = vpack.c.b16 %v2028, %v2024
    %v3433 = vpack.c.b16 %v2029, %v2025
    %v3434 = vpack.c.b16 %v2030, %v2026
    %v3435 = vpack.c.b16 %v2035, %v2031
    %v3436 = vpack.c.b16 %v2036, %v2032
    %v3437 = vpack.c.b16 %v2037, %v2033
    %v3438 = vpack.c.b16 %v2038, %v2034
    %v3439 = vpack.c.b16 %v2043, %v2039
    %v3440 = vpack.c.b16 %v2044, %v2040
    %v3441 = vpack.c.b16 %v2045, %v2041
    %v3442 = vpack.c.b16 %v2046, %v2042
    %v3443 = vpack.c.b16 %v2051, %v2047
    %v3444 = vpack.c.b16 %v2052, %v2048
    %v3445 = vpack.c.b16 %v2053, %v2049
    %v3446 = vpack.c.b16 %v2054, %v2050
    %v3447 = vpack.c.b16 %v2059, %v2055
    %v3448 = vpack.c.b16 %v2060, %v2056
    %v3449 = vpack.c.b16 %v2061, %v2057
    %v3450 = vpack.c.b16 %v2062, %v2058
    %v3451 = vpack.c.b16 %v2067, %v2063
    %v3452 = vpack.c.b16 %v2068, %v2064
    %v3453 = vpack.c.b16 %v2069, %v2065
    %v3454 = vpack.c.b16 %v2070, %v2066
    %v3455 = vpack.c.b16 %v2075, %v2071
    %v3456 = vpack.c.b16 %v2076, %v2072
    %v3457 = vpack.c.b16 %v2077, %v2073
    %v3458 = vpack.c.b16 %v2078, %v2074
    %v3459 = vpack.c.b16 %v2083, %v2079
    %v3460 = vpack.c.b16 %v2084, %v2080
    %v3461 = vpack.c.b16 %v2085, %v2081
    %v3462 = vpack.c.b16 %v2086, %v2082
    %v3463 = vpack.c.b16 %v2091, %v2087
    %v3464 = vpack.c.b16 %v2092, %v2088
    %v3465 = vpack.c.b16 %v2093, %v2089
    %v3466 = vpack.c.b16 %v2094, %v2090
    %v3467 = vpack.c.b16 %v2099, %v2095
    %v3468 = vpack.c.b16 %v2100, %v2096
    %v3469 = vpack.c.b16 %v2101, %v2097
    %v3470 = vpack.c.b16 %v2102, %v2098
    %v3471 = vpack.c.b16 %v2107, %v2103
    %v3472 = vpack.c.b16 %v2108, %v2104
    %v3473 = vpack.c.b16 %v2109, %v2105
    %v3474 = vpack.c.b16 %v2110, %v2106
    %v3475 = vpack.c.b16 %v2115, %v2111
    %v3476 = vpack.c.b16 %v2116, %v2112
    %v3477 = vpack.c.b16 %v2117, %v2113
    %v3478 = vpack.c.b16 %v2118, %v2114
    %v3479 = vpack.c.b16 %v2123, %v2119
    %v3480 = vpack.c.b16 %v2124, %v2120
    %v3481 = vpack.c.b16 %v2125, %v2121
    %v3482 = vpack.c.b16 %v2126, %v2122
    %v3483 = vpack.c.b16 %v2131, %v2127
    %v3484 = vpack.c.b16 %v2132, %v2128
    %v3485 = vpack.c.b16 %v2133, %v2129
    %v3486 = vpack.c.b16 %v2134, %v2130
    %v3487 = vpack.c.b16 %v2139, %v2135
    %v3488 = vpack.c.b16 %v2140, %v2136
    %v3489 = vpack.c.b16 %v2141, %v2137
    %v3490 = vpack.c.b16 %v2142, %v2138
    %v3491 = vpack.c.b16 %v2147, %v2143
    %v3492 = vpack.c.b16 %v2148, %v2144
    %v3493 = vpack.c.b16 %v2149, %v2145
    %v3494 = vpack.c.b16 %v2150, %v2146
    %v3495 = vpack.c.b16 %v2155, %v2151
    %v3496 = vpack.c.b16 %v2156, %v2152
    %v3497 = vpack.c.b16 %v2157, %v2153
    %v3498 = vpack.c.b16 %v2158, %v2154
    %v3499 = vpack.c.b16 %v2163, %v2159
    %v3500 = vpack.c.b16 %v2164, %v2160
    %v3501 = vpack.c.b16 %v2165, %v2161
    %v3502 = vpack.c.b16 %v2166, %v2162
    %v3503 = vpack.c.b16 %v2171, %v2167
    %v3504 = vpack.c.b16 %v2172, %v2168
    %v3505 = vpack.c.b16 %v2173, %v2169
    %v3506 = vpack.c.b16 %v2174, %v2170
    %v3507 = vpack.c.b16 %v2179, %v2175
    %v3508 = vpack.c.b16 %v2180, %v2176
    %v3509 = vpack.c.b16 %v2181, %v2177
    %v3510 = vpack.c.b16 %v2182, %v2178
    %v3511 = vpack.c.b16 %v2187, %v2183
    %v3512 = vpack.c.b16 %v2188, %v2184
    %v3513 = vpack.c.b16 %v2189, %v2185
    %v3514 = vpack.c.b16 %v2190, %v2186
    %v3515 = vpack.c.b16 %v2195, %v2191
    %v3516 = vpack.c.b16 %v2196, %v2192
    %v3517 = vpack.c.b16 %v2197, %v2193
    %v3518 = vpack.c.b16 %v2198, %v2194
    %v3519 = vpack.c.b16 %v2203, %v2199
    %v3520 = vpack.c.b16 %v2204, %v2200
    %v3521 = vpack.c.b16 %v2205, %v2201
    %v3522 = vpack.c.b16 %v2206, %v2202
    %v3523 = vpack.c.b16 %v2211, %v2207
    %v3524 = vpack.c.b16 %v2212, %v2208
    %v3525 = vpack.c.b16 %v2213, %v2209
    %v3526 = vpack.c.b16 %v2214, %v2210
    %v3527 = vpack.c.b16 %v2219, %v2215
    %v3528 = vpack.c.b16 %v2220, %v2216
    %v3529 = vpack.c.b16 %v2221, %v2217
    %v3530 = vpack.c.b16 %v2222, %v2218
    %v3531 = vpack.c.b16 %v2227, %v2223
    %v3532 = vpack.c.b16 %v2228, %v2224
    %v3533 = vpack.c.b16 %v2229, %v2225
    %v3534 = vpack.c.b16 %v2230, %v2226
    %v3535 = vpack.c.b16 %v2235, %v2231
    %v3536 = vpack.c.b16 %v2236, %v2232
    %v3537 = vpack.c.b16 %v2237, %v2233
    %v3538 = vpack.c.b16 %v2238, %v2234
    %v3539 = vpack.c.b16 %v2243, %v2239
    %v3540 = vpack.c.b16 %v2244, %v2240
    %v3541 = vpack.c.b16 %v2245, %v2241
    %v3542 = vpack.c.b16 %v2246, %v2242
    %v3543 = vpack.c.b16 %v2251, %v2247
    %v3544 = vpack.c.b16 %v2252, %v2248
    %v3545 = vpack.c.b16 %v2253, %v2249
    %v3546 = vpack.c.b16 %v2254, %v2250
    %v3547 = vpack.c.b16 %v2259, %v2255
    %v3548 = vpack.c.b16 %v2260, %v2256
    %v3549 = vpack.c.b16 %v2261, %v2257
    %v3550 = vpack.c.b16 %v2262, %v2258
    %v3551 = vpack.c.b16 %v2267, %v2263
    %v3552 = vpack.c.b16 %v2268, %v2264
    %v3553 = vpack.c.b16 %v2269, %v2265
    %v3554 = vpack.c.b16 %v2270, %v2266
    %v3555 = vpack.c.b16 %v2275, %v2271
    %v3556 = vpack.c.b16 %v2276, %v2272
    %v3557 = vpack.c.b16 %v2277, %v2273
    %v3558 = vpack.c.b16 %v2278, %v2274
    %v3559 = vpack.c.b16 %v2283, %v2279
    %v3560 = vpack.c.b16 %v2284, %v2280
    %v3561 = vpack.c.b16 %v2285, %v2281
    %v3562 = vpack.c.b16 %v2286, %v2282
    %v3563 = vpack.c.b16 %v2291, %v2287
    %v3564 = vpack.c.b16 %v2292, %v2288
    %v3565 = vpack.c.b16 %v2293, %v2289
    %v3566 = vpack.c.b16 %v2294, %v2290
    %v3567 = vpack.c.b16 %v2299, %v2295
    %v3568 = vpack.c.b16 %v2300, %v2296
    %v3569 = vpack.c.b16 %v2301, %v2297
    %v3570 = vpack.c.b16 %v2302, %v2298
    %v3571 = vpack.c.b16 %v2307, %v2303
    %v3572 = vpack.c.b16 %v2308, %v2304
    %v3573 = vpack.c.b16 %v2309, %v2305
    %v3574 = vpack.c.b16 %v2310, %v2306
    %v3575 = vpack.c.b16 %v2315, %v2311
    %v3576 = vpack.c.b16 %v2316, %v2312
    %v3577 = vpack.c.b16 %v2317, %v2313
    %v3578 = vpack.c.b16 %v2318, %v2314
    %v3579 = vpack.c.b16 %v2323, %v2319
    %v3580 = vpack.c.b16 %v2324, %v2320
    %v3581 = vpack.c.b16 %v2325, %v2321
    %v3582 = vpack.c.b16 %v2326, %v2322
    %v3583 = vpack.c.b16 %v2331, %v2327
    %v3584 = vpack.c.b16 %v2332, %v2328
    %v3585 = vpack.c.b16 %v2333, %v2329
    %v3586 = vpack.c.b16 %v2334, %v2330
    %v3587 = vpack.c.b16 %v2339, %v2335
    %v3588 = vpack.c.b16 %v2340, %v2336
    %v3589 = vpack.c.b16 %v2341, %v2337
    %v3590 = vpack.c.b16 %v2342, %v2338
    %v3591 = vpack.c.b16 %v2347, %v2343
    %v3592 = vpack.c.b16 %v2348, %v2344
    %v3593 = vpack.c.b16 %v2349, %v2345
    %v3594 = vpack.c.b16 %v2350, %v2346
    %v3595 = vpack.c.b16 %v2355, %v2351
    %v3596 = vpack.c.b16 %v2356, %v2352
    %v3597 = vpack.c.b16 %v2357, %v2353
    %v3598 = vpack.c.b16 %v2358, %v2354
    %v3599 = vpack.c.b16 %v2363, %v2359
    %v3600 = vpack.c.b16 %v2364, %v2360
    %v3601 = vpack.c.b16 %v2365, %v2361
    %v3602 = vpack.c.b16 %v2366, %v2362
    %v3603 = vpack.c.b16 %v2371, %v2367
    %v3604 = vpack.c.b16 %v2372, %v2368
    %v3605 = vpack.c.b16 %v2373, %v2369
    %v3606 = vpack.c.b16 %v2374, %v2370
    %v3607 = vpack.c.b16 %v2379, %v2375
    %v3608 = vpack.c.b16 %v2380, %v2376
    %v3609 = vpack.c.b16 %v2381, %v2377
    %v3610 = vpack.c.b16 %v2382, %v2378
    %v3611 = vpack.c.b16 %v2387, %v2383
    %v3612 = vpack.c.b16 %v2388, %v2384
    %v3613 = vpack.c.b16 %v2389, %v2385
    %v3614 = vpack.c.b16 %v2390, %v2386
    %v3615 = vpack.c.b16 %v2395, %v2391
    %v3616 = vpack.c.b16 %v2396, %v2392
    %v3617 = vpack.c.b16 %v2397, %v2393
    %v3618 = vpack.c.b16 %v2398, %v2394
    %v3619 = vpack.c.b16 %v2403, %v2399
    %v3620 = vpack.c.b16 %v2404, %v2400
    %v3621 = vpack.c.b16 %v2405, %v2401
    %v3622 = vpack.c.b16 %v2406, %v2402
    %v3623 = vpack.c.b16 %v2411, %v2407
    %v3624 = vpack.c.b16 %v2412, %v2408
    %v3625 = vpack.c.b16 %v2413, %v2409
    %v3626 = vpack.c.b16 %v2414, %v2410
    %v3627 = vpack.c.b16 %v2419, %v2415
    %v3628 = vpack.c.b16 %v2420, %v2416
    %v3629 = vpack.c.b16 %v2421, %v2417
    %v3630 = vpack.c.b16 %v2422, %v2418
    %v3631 = vpack.c.b16 %v2427, %v2423
    %v3632 = vpack.c.b16 %v2428, %v2424
    %v3633 = vpack.c.b16 %v2429, %v2425
    %v3634 = vpack.c.b16 %v2430, %v2426
    %v3635 = vpack.c.b16 %v2435, %v2431
    %v3636 = vpack.c.b16 %v2436, %v2432
    %v3637 = vpack.c.b16 %v2437, %v2433
    %v3638 = vpack.c.b16 %v2438, %v2434
    %v3639 = vpack.c.b16 %v2443, %v2439
    %v3640 = vpack.c.b16 %v2444, %v2440
    %v3641 = vpack.c.b16 %v2445, %v2441
    %v3642 = vpack.c.b16 %v2446, %v2442
    %v3643 = vpack.c.b16 %v2451, %v2447
    %v3644 = vpack.c.b16 %v2452, %v2448
    %v3645 = vpack.c.b16 %v2453, %v2449
    %v3646 = vpack.c.b16 %v2454, %v2450
    %v3647 = vpack.c.b16 %v2459, %v2455
    %v3648 = vpack.c.b16 %v2460, %v2456
    %v3649 = vpack.c.b16 %v2461, %v2457
    %v3650 = vpack.c.b16 %v2462, %v2458
    %v3651 = vpack.c.b16 %v2467, %v2463
    %v3652 = vpack.c.b16 %v2468, %v2464
    %v3653 = vpack.c.b16 %v2469, %v2465
    %v3654 = vpack.c.b16 %v2470, %v2466
    %v3655 = vpack.c.b16 %v2475, %v2471
    %v3656 = vpack.c.b16 %v2476, %v2472
    %v3657 = vpack.c.b16 %v2477, %v2473
    %v3658 = vpack.c.b16 %v2478, %v2474
    %v3659 = vpack.c.b16 %v2483, %v2479
    %v3660 = vpack.c.b16 %v2484, %v2480
    %v3661 = vpack.c.b16 %v2485, %v2481
    %v3662 = vpack.c.b16 %v2486, %v2482
    %v3663 = vpack.c.b16 %v2491, %v2487
    %v3664 = vpack.c.b16 %v2492, %v2488
    %v3665 = vpack.c.b16 %v2493, %v2489
    %v3666 = vpack.c.b16 %v2494, %v2490
    %v3667 = vpack.c.b16 %v2499, %v2495
    %v3668 = vpack.c.b16 %v2500, %v2496
    %v3669 = vpack.c.b16 %v2501, %v2497
    %v3670 = vpack.c.b16 %v2502, %v2498
    %v3671 = vpack.c.b16 %v2507, %v2503
    %v3672 = vpack.c.b16 %v2508, %v2504
    %v3673 = vpack.c.b16 %v2509, %v2505
    %v3674 = vpack.c.b16 %v2510, %v2506
    %v3675 = vpack.c.b16 %v2515, %v2511
    %v3676 = vpack.c.b16 %v2516, %v2512
    %v3677 = vpack.c.b16 %v2517, %v2513
    %v3678 = vpack.c.b16 %v2518, %v2514
    %v3679 = vpack.c.b16 %v2523, %v2519
    %v3680 = vpack.c.b16 %v2524, %v2520
    %v3681 = vpack.c.b16 %v2525, %v2521
    %v3682 = vpack.c.b16 %v2526, %v2522
    %v3683 = vpack.c.b16 %v2531, %v2527
    %v3684 = vpack.c.b16 %v2532, %v2528
    %v3685 = vpack.c.b16 %v2533, %v2529
    %v3686 = vpack.c.b16 %v2534, %v2530
    %v3687 = vpack.c.b16 %v2539, %v2535
    %v3688 = vpack.c.b16 %v2540, %v2536
    %v3689 = vpack.c.b16 %v2541, %v2537
    %v3690 = vpack.c.b16 %v2542, %v2538
    %v3691 = vpack.c.b16 %v2547, %v2543
    %v3692 = vpack.c.b16 %v2548, %v2544
    %v3693 = vpack.c.b16 %v2549, %v2545
    %v3694 = vpack.c.b16 %v2550, %v2546
    %v3695 = vpack.c.b16 %v2555, %v2551
    %v3696 = vpack.c.b16 %v2556, %v2552
    %v3697 = vpack.c.b16 %v2557, %v2553
    %v3698 = vpack.c.b16 %v2558, %v2554
    %v3699 = vpack.c.b16 %v2563, %v2559
    %v3700 = vpack.c.b16 %v2564, %v2560
    %v3701 = vpack.c.b16 %v2565, %v2561
    %v3702 = vpack.c.b16 %v2566, %v2562
    %v3703 = vpack.c.b16 %v2571, %v2567
    %v3704 = vpack.c.b16 %v2572, %v2568
    %v3705 = vpack.c.b16 %v2573, %v2569
    %v3706 = vpack.c.b16 %v2574, %v2570
    %v3707 = vpack.c.b16 %v2579, %v2575
    %v3708 = vpack.c.b16 %v2580, %v2576
    %v3709 = vpack.c.b16 %v2581, %v2577
    %v3710 = vpack.c.b16 %v2582, %v2578
    %v3711 = vpack.c.b16 %v2587, %v2583
    %v3712 = vpack.c.b16 %v2588, %v2584
    %v3713 = vpack.c.b16 %v2589, %v2585
    %v3714 = vpack.c.b16 %v2590, %v2586
    %v3715 = vpack.c.b16 %v2595, %v2591
    %v3716 = vpack.c.b16 %v2596, %v2592
    %v3717 = vpack.c.b16 %v2597, %v2593
    %v3718 = vpack.c.b16 %v2598, %v2594
    %v3719 = vpack.c.b16 %v2603, %v2599
    %v3720 = vpack.c.b16 %v2604, %v2600
    %v3721 = vpack.c.b16 %v2605, %v2601
    %v3722 = vpack.c.b16 %v2606, %v2602
    %v3723 = vpack.c.b16 %v2611, %v2607
    %v3724 = vpack.c.b16 %v2612, %v2608
    %v3725 = vpack.c.b16 %v2613, %v2609
    %v3726 = vpack.c.b16 %v2614, %v2610
    %v3727 = vpack.c.b16 %v2619, %v2615
    %v3728 = vpack.c.b16 %v2620, %v2616
    %v3729 = vpack.c.b16 %v2621, %v2617
    %v3730 = vpack.c.b16 %v2622, %v2618
    %v3731 = vpack.c.b16 %v2627, %v2623
    %v3732 = vpack.c.b16 %v2628, %v2624
    %v3733 = vpack.c.b16 %v2629, %v2625
    %v3734 = vpack.c.b16 %v2630, %v2626
    %v3735 = vpack.c.b16 %v2635, %v2631
    %v3736 = vpack.c.b16 %v2636, %v2632
    %v3737 = vpack.c.b16 %v2637, %v2633
    %v3738 = vpack.c.b16 %v2638, %v2634
    %v3739 = vpack.c.b16 %v2643, %v2639
    %v3740 = vpack.c.b16 %v2644, %v2640
    %v3741 = vpack.c.b16 %v2645, %v2641
    %v3742 = vpack.c.b16 %v2646, %v2642
    %v3743 = vpack.c.b16 %v2651, %v2647
    %v3744 = vpack.c.b16 %v2652, %v2648
    %v3745 = vpack.c.b16 %v2653, %v2649
    %v3746 = vpack.c.b16 %v2654, %v2650
    %v3747 = vpack.c.b16 %v2659, %v2655
    %v3748 = vpack.c.b16 %v2660, %v2656
    %v3749 = vpack.c.b16 %v2661, %v2657
    %v3750 = vpack.c.b16 %v2662, %v2658
    %v3751 = vpack.c.b16 %v2667, %v2663
    %v3752 = vpack.c.b16 %v2668, %v2664
    %v3753 = vpack.c.b16 %v2669, %v2665
    %v3754 = vpack.c.b16 %v2670, %v2666
    %v3755 = vpack.c.b16 %v2675, %v2671
    %v3756 = vpack.c.b16 %v2676, %v2672
    %v3757 = vpack.c.b16 %v2677, %v2673
    %v3758 = vpack.c.b16 %v2678, %v2674
    %v3759 = vpack.c.b16 %v2683, %v2679
    %v3760 = vpack.c.b16 %v2684, %v2680
    %v3761 = vpack.c.b16 %v2685, %v2681
    %v3762 = vpack.c.b16 %v2686, %v2682
    %v3763 = vpack.c.b16 %v2691, %v2687
    %v3764 = vpack.c.b16 %v2692, %v2688
    %v3765 = vpack.c.b16 %v2693, %v2689
    %v3766 = vpack.c.b16 %v2694, %v2690
    %v3767 = vpack.c.b16 %v2699, %v2695
    %v3768 = vpack.c.b16 %v2700, %v2696
    %v3769 = vpack.c.b16 %v2701, %v2697
    %v3770 = vpack.c.b16 %v2702, %v2698
    %v3771 = vpack.c.b16 %v2707, %v2703
    %v3772 = vpack.c.b16 %v2708, %v2704
    %v3773 = vpack.c.b16 %v2709, %v2705
    %v3774 = vpack.c.b16 %v2710, %v2706
    %v3775 = vpack.c.b16 %v2715, %v2711
    %v3776 = vpack.c.b16 %v2716, %v2712
    %v3777 = vpack.c.b16 %v2717, %v2713
    %v3778 = vpack.c.b16 %v2718, %v2714
    %v3779 = vpack.c.b16 %v2723, %v2719
    %v3780 = vpack.c.b16 %v2724, %v2720
    %v3781 = vpack.c.b16 %v2725, %v2721
    %v3782 = vpack.c.b16 %v2726, %v2722
    %v3783 = vpack.c.b16 %v2731, %v2727
    %v3784 = vpack.c.b16 %v2732, %v2728
    %v3785 = vpack.c.b16 %v2733, %v2729
    %v3786 = vpack.c.b16 %v2734, %v2730
    %v3787 = vpack.c.b16 %v2739, %v2735
    %v3788 = vpack.c.b16 %v2740, %v2736
    %v3789 = vpack.c.b16 %v2741, %v2737
    %v3790 = vpack.c.b16 %v2742, %v2738
    %v3791 = vpack.c.b16 %v2747, %v2743
    %v3792 = vpack.c.b16 %v2748, %v2744
    %v3793 = vpack.c.b16 %v2749, %v2745
    %v3794 = vpack.c.b16 %v2750, %v2746
    %v3795 = vpack.c.b16 %v2755, %v2751
    %v3796 = vpack.c.b16 %v2756, %v2752
    %v3797 = vpack.c.b16 %v2757, %v2753
    %v3798 = vpack.c.b16 %v2758, %v2754
    %v3799 = vpack.c.b16 %v2763, %v2759
    %v3800 = vpack.c.b16 %v2764, %v2760
    %v3801 = vpack.c.b16 %v2765, %v2761
    %v3802 = vpack.c.b16 %v2766, %v2762
    %v3803 = vpack.c.b16 %v2771, %v2767
    %v3804 = vpack.c.b16 %v2772, %v2768
    %v3805 = vpack.c.b16 %v2773, %v2769
    %v3806 = vpack.c.b16 %v2774, %v2770
    %v3807 = vpack.c.b16 %v2779, %v2775
    %v3808 = vpack.c.b16 %v2780, %v2776
    %v3809 = vpack.c.b16 %v2781, %v2777
    %v3810 = vpack.c.b16 %v2782, %v2778
    %v3811 = vpack.c.b16 %v2787, %v2783
    %v3812 = vpack.c.b16 %v2788, %v2784
    %v3813 = vpack.c.b16 %v2789, %v2785
    %v3814 = vpack.c.b16 %v2790, %v2786
    %v3815 = vpack.c.b16 %v2795, %v2791
    %v3816 = vpack.c.b16 %v2796, %v2792
    %v3817 = vpack.c.b16 %v2797, %v2793
    %v3818 = vpack.c.b16 %v2798, %v2794
    %v3819 = vpack.c.b16 %v2803, %v2799
    %v3820 = vpack.c.b16 %v2804, %v2800
    %v3821 = vpack.c.b16 %v2805, %v2801
    %v3822 = vpack.c.b16 %v2806, %v2802
    %v3823 = vpack.c.b16 %v2811, %v2807
    %v3824 = vpack.c.b16 %v2812, %v2808
    %v3825 = vpack.c.b16 %v2813, %v2809
    %v3826 = vpack.c.b16 %v2814, %v2810
    %v3827 = vpack.c.b16 %v2819, %v2815
    %v3828 = vpack.c.b16 %v2820, %v2816
    %v3829 = vpack.c.b16 %v2821, %v2817
    %v3830 = vpack.c.b16 %v2822, %v2818
    %v3831 = vpack.c.b16 %v2827, %v2823
    %v3832 = vpack.c.b16 %v2828, %v2824
    %v3833 = vpack.c.b16 %v2829, %v2825
    %v3834 = vpack.c.b16 %v2830, %v2826
    %v3835 = vpack.c.b16 %v2835, %v2831
    %v3836 = vpack.c.b16 %v2836, %v2832
    %v3837 = vpack.c.b16 %v2837, %v2833
    %v3838 = vpack.c.b16 %v2838, %v2834
    %v3839 = vpack.c.b16 %v2843, %v2839
    %v3840 = vpack.c.b16 %v2844, %v2840
    %v3841 = vpack.c.b16 %v2845, %v2841
    %v3842 = vpack.c.b16 %v2846, %v2842
    %v3843 = vpack.c.b16 %v2851, %v2847
    %v3844 = vpack.c.b16 %v2852, %v2848
    %v3845 = vpack.c.b16 %v2853, %v2849
    %v3846 = vpack.c.b16 %v2854, %v2850
    %v3847 = vpack.c.b16 %v2859, %v2855
    %v3848 = vpack.c.b16 %v2860, %v2856
    %v3849 = vpack.c.b16 %v2861, %v2857
    %v3850 = vpack.c.b16 %v2862, %v2858
    %v3851 = vpack.c.b16 %v2867, %v2863
    %v3852 = vpack.c.b16 %v2868, %v2864
    %v3853 = vpack.c.b16 %v2869, %v2865
    %v3854 = vpack.c.b16 %v2870, %v2866
    %v3855 = vpack.c.b16 %v2875, %v2871
    %v3856 = vpack.c.b16 %v2876, %v2872
    %v3857 = vpack.c.b16 %v2877, %v2873
    %v3858 = vpack.c.b16 %v2878, %v2874
    %v3859 = vpack.c.b16 %v2883, %v2879
    %v3860 = vpack.c.b16 %v2884, %v2880
    %v3861 = vpack.c.b16 %v2885, %v2881
    %v3862 = vpack.c.b16 %v2886, %v2882
    %v3863 = vpack.c.b16 %v2891, %v2887
    %v3864 = vpack.c.b16 %v2892, %v2888
    %v3865 = vpack.c.b16 %v2893, %v2889
    %v3866 = vpack.c.b16 %v2894, %v2890
    %v3867 = vpack.c.b16 %v2899, %v2895
    %v3868 = vpack.c.b16 %v2900, %v2896
    %v3869 = vpack.c.b16 %v2901, %v2897
    %v3870 = vpack.c.b16 %v2902, %v2898
    %v3871 = vpack.c.b16 %v2907, %v2903
    %v3872 = vpack.c.b16 %v2908, %v2904
    %v3873 = vpack.c.b16 %v2909, %v2905
    %v3874 = vpack.c.b16 %v2910, %v2906
    %v3875 = vpack.c.b16 %v2915, %v2911
    %v3876 = vpack.c.b16 %v2916, %v2912
    %v3877 = vpack.c.b16 %v2917, %v2913
    %v3878 = vpack.c.b16 %v2918, %v2914
    %v3879 = vpack.c.b16 %v2923, %v2919
    %v3880 = vpack.c.b16 %v2924, %v2920
    %v3881 = vpack.c.b16 %v2925, %v2921
    %v3882 = vpack.c.b16 %v2926, %v2922
    %v3883 = vpack.c.b16 %v2931, %v2927
    %v3884 = vpack.c.b16 %v2932, %v2928
    %v3885 = vpack.c.b16 %v2933, %v2929
    %v3886 = vpack.c.b16 %v2934, %v2930
    %v3887 = vpack.c.b16 %v2939, %v2935
    %v3888 = vpack.c.b16 %v2940, %v2936
    %v3889 = vpack.c.b16 %v2941, %v2937
    %v3890 = vpack.c.b16 %v2942, %v2938
    %v3891 = vpack.c.b16 %v2947, %v2943
    %v3892 = vpack.c.b16 %v2948, %v2944
    %v3893 = vpack.c.b16 %v2949, %v2945
    %v3894 = vpack.c.b16 %v2950, %v2946
    %v3895 = vpack.c.b16 %v2955, %v2951
    %v3896 = vpack.c.b16 %v2956, %v2952
    %v3897 = vpack.c.b16 %v2957, %v2953
    %v3898 = vpack.c.b16 %v2958, %v2954
    %v3899 = vpack.c.b16 %v2963, %v2959
    %v3900 = vpack.c.b16 %v2964, %v2960
    %v3901 = vpack.c.b16 %v2965, %v2961
    %v3902 = vpack.c.b16 %v2966, %v2962
    %v3903 = vpack.c.b16 %v2971, %v2967
    %v3904 = vpack.c.b16 %v2972, %v2968
    %v3905 = vpack.c.b16 %v2973, %v2969
    %v3906 = vpack.c.b16 %v2974, %v2970
    %v3907 = vpack.c.b16 %v2979, %v2975
    %v3908 = vpack.c.b16 %v2980, %v2976
    %v3909 = vpack.c.b16 %v2981, %v2977
    %v3910 = vpack.c.b16 %v2982, %v2978
    %v3911 = vpack.c.b16 %v2987, %v2983
    %v3912 = vpack.c.b16 %v2988, %v2984
    %v3913 = vpack.c.b16 %v2989, %v2985
    %v3914 = vpack.c.b16 %v2990, %v2986
    %v3915 = vpack.c.b16 %v2995, %v2991
    %v3916 = vpack.c.b16 %v2996, %v2992
    %v3917 = vpack.c.b16 %v2997, %v2993
    %v3918 = vpack.c.b16 %v2998, %v2994
    %v3919 = vpack.c.b16 %v3003, %v2999
    %v3920 = vpack.c.b16 %v3004, %v3000
    %v3921 = vpack.c.b16 %v3005, %v3001
    %v3922 = vpack.c.b16 %v3006, %v3002
    %v3923 = vpack.c.b16 %v3011, %v3007
    %v3924 = vpack.c.b16 %v3012, %v3008
    %v3925 = vpack.c.b16 %v3013, %v3009
    %v3926 = vpack.c.b16 %v3014, %v3010
    %v3927 = vpack.c.b16 %v3019, %v3015
    %v3928 = vpack.c.b16 %v3020, %v3016
    %v3929 = vpack.c.b16 %v3021, %v3017
    %v3930 = vpack.c.b16 %v3022, %v3018
    %v3931 = vpack.c.b16 %v3027, %v3023
    %v3932 = vpack.c.b16 %v3028, %v3024
    %v3933 = vpack.c.b16 %v3029, %v3025
    %v3934 = vpack.c.b16 %v3030, %v3026
    %v3935 = vpack.c.b16 %v3035, %v3031
    %v3936 = vpack.c.b16 %v3036, %v3032
    %v3937 = vpack.c.b16 %v3037, %v3033
    %v3938 = vpack.c.b16 %v3038, %v3034
    %v3939 = vpack.c.b16 %v3043, %v3039
    %v3940 = vpack.c.b16 %v3044, %v3040
    %v3941 = vpack.c.b16 %v3045, %v3041
    %v3942 = vpack.c.b16 %v3046, %v3042
    %v3943 = vpack.c.b16 %v3051, %v3047
    %v3944 = vpack.c.b16 %v3052, %v3048
    %v3945 = vpack.c.b16 %v3053, %v3049
    %v3946 = vpack.c.b16 %v3054, %v3050
    %v3947 = vpack.c.b16 %v3059, %v3055
    %v3948 = vpack.c.b16 %v3060, %v3056
    %v3949 = vpack.c.b16 %v3061, %v3057
    %v3950 = vpack.c.b16 %v3062, %v3058
    %v3951 = vpack.c.b16 %v3067, %v3063
    %v3952 = vpack.c.b16 %v3068, %v3064
    %v3953 = vpack.c.b16 %v3069, %v3065
    %v3954 = vpack.c.b16 %v3070, %v3066
    %v3955 = vpack.c.b16 %v3075, %v3071
    %v3956 = vpack.c.b16 %v3076, %v3072
    %v3957 = vpack.c.b16 %v3077, %v3073
    %v3958 = vpack.c.b16 %v3078, %v3074
    %v3959 = vpack.c.b16 %v3083, %v3079
    %v3960 = vpack.c.b16 %v3084, %v3080
    %v3961 = vpack.c.b16 %v3085, %v3081
    %v3962 = vpack.c.b16 %v3086, %v3082
    %v3963 = vpack.c.b16 %v3091, %v3087
    %v3964 = vpack.c.b16 %v3092, %v3088
    %v3965 = vpack.c.b16 %v3093, %v3089
    %v3966 = vpack.c.b16 %v3094, %v3090
    %v3967 = vpack.c.b16 %v3099, %v3095
    %v3968 = vpack.c.b16 %v3100, %v3096
    %v3969 = vpack.c.b16 %v3101, %v3097
    %v3970 = vpack.c.b16 %v3102, %v3098
    %v3971 = vpack.c.b16 %v3107, %v3103
    %v3972 = vpack.c.b16 %v3108, %v3104
    %v3973 = vpack.c.b16 %v3109, %v3105
    %v3974 = vpack.c.b16 %v3110, %v3106
    %v3975 = vpack.c.b16 %v3115, %v3111
    %v3976 = vpack.c.b16 %v3116, %v3112
    %v3977 = vpack.c.b16 %v3117, %v3113
    %v3978 = vpack.c.b16 %v3118, %v3114
    %v3979 = vpack.c.b16 %v3123, %v3119
    %v3980 = vpack.c.b16 %v3124, %v3120
    %v3981 = vpack.c.b16 %v3125, %v3121
    %v3982 = vpack.c.b16 %v3126, %v3122
    %v3983 = vpack.c.b16 %v3131, %v3127
    %v3984 = vpack.c.b16 %v3132, %v3128
    %v3985 = vpack.c.b16 %v3133, %v3129
    %v3986 = vpack.c.b16 %v3134, %v3130
    %v3987 = vpack.c.b16 %v3139, %v3135
    %v3988 = vpack.c.b16 %v3140, %v3136
    %v3989 = vpack.c.b16 %v3141, %v3137
    %v3990 = vpack.c.b16 %v3142, %v3138
    %v3991 = vpack.c.b16 %v3147, %v3143
    %v3992 = vpack.c.b16 %v3148, %v3144
    %v3993 = vpack.c.b16 %v3149, %v3145
    %v3994 = vpack.c.b16 %v3150, %v3146
    %v3995 = vpack.c.b16 %v3155, %v3151
    %v3996 = vpack.c.b16 %v3156, %v3152
    %v3997 = vpack.c.b16 %v3157, %v3153
    %v3998 = vpack.c.b16 %v3158, %v3154
    %v3999 = vpack.c.b16 %v3163, %v3159
    %v4000 = vpack.c.b16 %v3164, %v3160
    %v4001 = vpack.c.b16 %v3165, %v3161
    %v4002 = vpack.c.b16 %v3166, %v3162
    %v4003 = vpack.c.b16 %v3171, %v3167
    %v4004 = vpack.c.b16 %v3172, %v3168
    %v4005 = vpack.c.b16 %v3173, %v3169
    %v4006 = vpack.c.b16 %v3174, %v3170
    %v4007 = vpack.c.b16 %v3179, %v3175
    %v4008 = vpack.c.b16 %v3180, %v3176
    %v4009 = vpack.c.b16 %v3181, %v3177
    %v4010 = vpack.c.b16 %v3182, %v3178
    %v4011 = vpack.c.b16 %v3187, %v3183
    %v4012 = vpack.c.b16 %v3188, %v3184
    %v4013 = vpack.c.b16 %v3189, %v3185
    %v4014 = vpack.c.b16 %v3190, %v3186
    %v4015 = vpack.c.b16 %v3195, %v3191
    %v4016 = vpack.c.b16 %v3196, %v3192
    %v4017 = vpack.c.b16 %v3197, %v3193
    %v4018 = vpack.c.b16 %v3198, %v3194
    %v4019 = vpack.c.b16 %v3203, %v3199
    %v4020 = vpack.c.b16 %v3204, %v3200
    %v4021 = vpack.c.b16 %v3205, %v3201
    %v4022 = vpack.c.b16 %v3206, %v3202
    %v4023 = vpack.c.b16 %v3211, %v3207
    %v4024 = vpack.c.b16 %v3212, %v3208
    %v4025 = vpack.c.b16 %v3213, %v3209
    %v4026 = vpack.c.b16 %v3214, %v3210
    %v4027 = vpack.c.b16 %v3219, %v3215
    %v4028 = vpack.c.b16 %v3220, %v3216
    %v4029 = vpack.c.b16 %v3221, %v3217
    %v4030 = vpack.c.b16 %v3222, %v3218
    %v4031 = vpack.c.b16 %v3227, %v3223
    %v4032 = vpack.c.b16 %v3228, %v3224
    %v4033 = vpack.c.b16 %v3229, %v3225
    %v4034 = vpack.c.b16 %v3230, %v3226
    %v4035 = vpack.c.b16 %v3235, %v3231
    %v4036 = vpack.c.b16 %v3236, %v3232
    %v4037 = vpack.c.b16 %v3237, %v3233
    %v4038 = vpack.c.b16 %v3238, %v3234
    %v4039 = vpack.c.b16 %v3243, %v3239
    %v4040 = vpack.c.b16 %v3244, %v3240
    %v4041 = vpack.c.b16 %v3245, %v3241
    %v4042 = vpack.c.b16 %v3246, %v3242
    %v4043 = vpack.c.b16 %v3251, %v3247
    %v4044 = vpack.c.b16 %v3252, %v3248
    %v4045 = vpack.c.b16 %v3253, %v3249
    %v4046 = vpack.c.b16 %v3254, %v3250
    %v4047 = vpack.c.b16 %v3259, %v3255
    %v4048 = vpack.c.b16 %v3260, %v3256
    %v4049 = vpack.c.b16 %v3261, %v3257
    %v4050 = vpack.c.b16 %v3262, %v3258
    %v4051 = vpack.c.b16 %v3267, %v3263
    %v4052 = vpack.c.b16 %v3268, %v3264
    %v4053 = vpack.c.b16 %v3269, %v3265
    %v4054 = vpack.c.b16 %v3270, %v3266
    %v4055 = vpack.c.b16 %v3275, %v3271
    %v4056 = vpack.c.b16 %v3276, %v3272
    %v4057 = vpack.c.b16 %v3277, %v3273
    %v4058 = vpack.c.b16 %v3278, %v3274
    %v4059 = vpack.c.b16 %v3283, %v3279
    %v4060 = vpack.c.b16 %v3284, %v3280
    %v4061 = vpack.c.b16 %v3285, %v3281
    %v4062 = vpack.c.b16 %v3286, %v3282
    %v4063 = vpack.c.b16 %v3291, %v3287
    %v4064 = vpack.c.b16 %v3292, %v3288
    %v4065 = vpack.c.b16 %v3293, %v3289
    %v4066 = vpack.c.b16 %v3294, %v3290
    %v4067 = vpack.c.b16 %v3299, %v3295
    %v4068 = vpack.c.b16 %v3300, %v3296
    %v4069 = vpack.c.b16 %v3301, %v3297
    %v4070 = vpack.c.b16 %v3302, %v3298
    %4839 = vmatprep.subr.bf16.mxu0 %v3304
    %4840 = vmatpush1.bf16.msra.mxu0 %v3303
    %4841 = vmatprep.subr.bf16.mxu0 %v3308
    %4842 = vmatpush1.bf16.msra.mxu0 %v3307
    %4843 = vmatprep.subr.bf16.mxu0 %v3312
    %4844 = vmatpush1.bf16.msra.mxu0 %v3311
    %4845 = vmatprep.subr.bf16.mxu0 %v3316
    %4846 = vmatpush1.bf16.msra.mxu0 %v3315
    %4847 = vmatprep.subr.bf16.mxu0 %v3320
    %4848 = vmatpush1.bf16.msra.mxu0 %v3319
    %4849 = vmatprep.subr.bf16.mxu0 %v3324
    %4850 = vmatpush1.bf16.msra.mxu0 %v3323
    %4851 = vmatprep.subr.bf16.mxu0 %v3328
    %4852 = vmatpush1.bf16.msra.mxu0 %v3327
    %4853 = vmatprep.subr.bf16.mxu0 %v3332
    %4854 = vmatpush1.bf16.msra.mxu0 %v3331
    %4855 = vmatprep.subr.bf16.mxu0 %v3336
    %4856 = vmatpush1.bf16.msra.mxu0 %v3335
    %4857 = vmatprep.subr.bf16.mxu0 %v3340
    %4858 = vmatpush1.bf16.msra.mxu0 %v3339
    %4859 = vmatprep.subr.bf16.mxu0 %v3344
    %4860 = vmatpush1.bf16.msra.mxu0 %v3343
    %4861 = vmatprep.subr.bf16.mxu0 %v3348
    %4862 = vmatpush1.bf16.msra.mxu0 %v3347
    %4863 = vmatprep.subr.bf16.mxu0 %v3352
    %4864 = vmatpush1.bf16.msra.mxu0 %v3351
    %4865 = vmatprep.subr.bf16.mxu0 %v3356
    %4866 = vmatpush1.bf16.msra.mxu0 %v3355
    %4867 = vmatprep.subr.bf16.mxu0 %v3360
    %4868 = vmatpush1.bf16.msra.mxu0 %v3359
    %4869 = vmatprep.subr.bf16.mxu0 %v3364
    %4870 = vmatpush1.bf16.msra.mxu0 %v3363
    %4871 = vmatprep.mubr.bf16.mxu0 %v952
    %4872 = vmatmul.mubr.bf16.gmra.mrb[0].mxu0 %v951
    %v4873 = vpop.f32.mrb[0].mxu0
    %v4874 = vadd.f32 0.0, %v4873
    %v4875 = vpop.f32.mrb[0].mxu0
    %v4876 = vadd.f32 0.0, %v4875
    %v4877 = vpop.f32.mrb[0].mxu0
    %v4878 = vpop.f32.mrb[0].mxu0
    %4879 = vdwg.mxu0
    %4880 = vmatprep.subr.bf16.mxu0 %v3368
    %4881 = vmatpush1.bf16.msra.mxu0 %v3367
    %4882 = vmatprep.subr.bf16.mxu0 %v3372
    %4883 = vmatpush1.bf16.msra.mxu0 %v3371
    %4884 = vmatprep.subr.bf16.mxu0 %v3376
    %4885 = vmatpush1.bf16.msra.mxu0 %v3375
    %4886 = vmatprep.subr.bf16.mxu0 %v3380
    %4887 = vmatpush1.bf16.msra.mxu0 %v3379
    %4888 = vmatprep.subr.bf16.mxu0 %v3384
    %4889 = vmatpush1.bf16.msra.mxu0 %v3383
    %4890 = vmatprep.subr.bf16.mxu0 %v3388
    %4891 = vmatpush1.bf16.msra.mxu0 %v3387
    %4892 = vmatprep.subr.bf16.mxu0 %v3392
    %4893 = vmatpush1.bf16.msra.mxu0 %v3391
    %4894 = vmatprep.subr.bf16.mxu0 %v3396
    %4895 = vmatpush1.bf16.msra.mxu0 %v3395
    %4896 = vmatprep.subr.bf16.mxu0 %v3400
    %4897 = vmatpush1.bf16.msra.mxu0 %v3399
    %4898 = vmatprep.subr.bf16.mxu0 %v3404
    %4899 = vmatpush1.bf16.msra.mxu0 %v3403
    %4900 = vmatprep.subr.bf16.mxu0 %v3408
    %4901 = vmatpush1.bf16.msra.mxu0 %v3407
    %4902 = vmatprep.subr.bf16.mxu0 %v3412
    %4903 = vmatpush1.bf16.msra.mxu0 %v3411
    %4904 = vmatprep.subr.bf16.mxu0 %v3416
    %4905 = vmatpush1.bf16.msra.mxu0 %v3415
    %4906 = vmatprep.subr.bf16.mxu0 %v3420
    %4907 = vmatpush1.bf16.msra.mxu0 %v3419
    %4908 = vmatprep.subr.bf16.mxu0 %v3424
    %4909 = vmatpush1.bf16.msra.mxu0 %v3423
    %4910 = vmatprep.subr.bf16.mxu0 %v3428
    %4911 = vmatpush1.bf16.msra.mxu0 %v3427
    %4912 = vmatprep.mubr.bf16.mxu0 %v954
    %4913 = vmatmul.mubr.bf16.gmra.mrb[0].mxu0 %v953
    %v4914 = vpop.f32.mrb[0].mxu0
    %v4915 = vadd.f32 %v4874, %v4914
    %v4916 = vpop.f32.mrb[0].mxu0
    %v4917 = vadd.f32 %v4876, %v4916
    %v4918 = vpop.f32.mrb[0].mxu0
    %v4919 = vpop.f32.mrb[0].mxu0
    %4920 = vdwg.mxu0
    %4921 = vmatprep.subr.bf16.mxu0 %v3432
    %4922 = vmatpush1.bf16.msra.mxu0 %v3431
    %4923 = vmatprep.subr.bf16.mxu0 %v3436
    %4924 = vmatpush1.bf16.msra.mxu0 %v3435
    %4925 = vmatprep.subr.bf16.mxu0 %v3440
    %4926 = vmatpush1.bf16.msra.mxu0 %v3439
    %4927 = vmatprep.subr.bf16.mxu0 %v3444
    %4928 = vmatpush1.bf16.msra.mxu0 %v3443
    %4929 = vmatprep.subr.bf16.mxu0 %v3448
    %4930 = vmatpush1.bf16.msra.mxu0 %v3447
    %4931 = vmatprep.subr.bf16.mxu0 %v3452
    %4932 = vmatpush1.bf16.msra.mxu0 %v3451
    %4933 = vmatprep.subr.bf16.mxu0 %v3456
    %4934 = vmatpush1.bf16.msra.mxu0 %v3455
    %4935 = vmatprep.subr.bf16.mxu0 %v3460
    %4936 = vmatpush1.bf16.msra.mxu0 %v3459
    %4937 = vmatprep.subr.bf16.mxu0 %v3464
    %4938 = vmatpush1.bf16.msra.mxu0 %v3463
    %4939 = vmatprep.subr.bf16.mxu0 %v3468
    %4940 = vmatpush1.bf16.msra.mxu0 %v3467
    %4941 = vmatprep.subr.bf16.mxu0 %v3472
    %4942 = vmatpush1.bf16.msra.mxu0 %v3471
    %4943 = vmatprep.subr.bf16.mxu0 %v3476
    %4944 = vmatpush1.bf16.msra.mxu0 %v3475
    %4945 = vmatprep.subr.bf16.mxu0 %v3480
    %4946 = vmatpush1.bf16.msra.mxu0 %v3479
    %4947 = vmatprep.subr.bf16.mxu0 %v3484
    %4948 = vmatpush1.bf16.msra.mxu0 %v3483
    %4949 = vmatprep.subr.bf16.mxu0 %v3488
    %4950 = vmatpush1.bf16.msra.mxu0 %v3487
    %4951 = vmatprep.subr.bf16.mxu0 %v3492
    %4952 = vmatpush1.bf16.msra.mxu0 %v3491
    %4953 = vmatprep.mubr.bf16.mxu0 %v956
    %4954 = vmatmul.mubr.bf16.gmra.mrb[0].mxu0 %v955
    %v4955 = vpop.f32.mrb[0].mxu0
    %v4956 = vadd.f32 %v4915, %v4955
    %v4957 = vpop.f32.mrb[0].mxu0
    %v4958 = vadd.f32 %v4917, %v4957
    %v4959 = vpop.f32.mrb[0].mxu0
    %v4960 = vpop.f32.mrb[0].mxu0
    %4961 = vdwg.mxu0
    %4962 = vmatprep.subr.bf16.mxu0 %v3496
    %4963 = vmatpush1.bf16.msra.mxu0 %v3495
    %4964 = vmatprep.subr.bf16.mxu0 %v3500
    %4965 = vmatpush1.bf16.msra.mxu0 %v3499
    %4966 = vmatprep.subr.bf16.mxu0 %v3504
    %4967 = vmatpush1.bf16.msra.mxu0 %v3503
    %4968 = vmatprep.subr.bf16.mxu0 %v3508
    %4969 = vmatpush1.bf16.msra.mxu0 %v3507
    %4970 = vmatprep.subr.bf16.mxu0 %v3512
    %4971 = vmatpush1.bf16.msra.mxu0 %v3511
    %4972 = vmatprep.subr.bf16.mxu0 %v3516
    %4973 = vmatpush1.bf16.msra.mxu0 %v3515
    %4974 = vmatprep.subr.bf16.mxu0 %v3520
    %4975 = vmatpush1.bf16.msra.mxu0 %v3519
    %4976 = vmatprep.subr.bf16.mxu0 %v3524
    %4977 = vmatpush1.bf16.msra.mxu0 %v3523
    %4978 = vmatprep.subr.bf16.mxu0 %v3528
    %4979 = vmatpush1.bf16.msra.mxu0 %v3527
    %4980 = vmatprep.subr.bf16.mxu0 %v3532
    %4981 = vmatpush1.bf16.msra.mxu0 %v3531
    %4982 = vmatprep.subr.bf16.mxu0 %v3536
    %4983 = vmatpush1.bf16.msra.mxu0 %v3535
    %4984 = vmatprep.subr.bf16.mxu0 %v3540
    %4985 = vmatpush1.bf16.msra.mxu0 %v3539
    %4986 = vmatprep.subr.bf16.mxu0 %v3544
    %4987 = vmatpush1.bf16.msra.mxu0 %v3543
    %4988 = vmatprep.subr.bf16.mxu0 %v3548
    %4989 = vmatpush1.bf16.msra.mxu0 %v3547
    %4990 = vmatprep.subr.bf16.mxu0 %v3552
    %4991 = vmatpush1.bf16.msra.mxu0 %v3551
    %4992 = vmatprep.subr.bf16.mxu0 %v3556
    %4993 = vmatpush1.bf16.msra.mxu0 %v3555
    %4994 = vmatprep.mubr.bf16.mxu0 %v958
    %4995 = vmatmul.mubr.bf16.gmra.mrb[0].mxu0 %v957
    %v4996 = vpop.f32.mrb[0].mxu0
    %v4997 = vadd.f32 %v4956, %v4996
    %v4998 = vpop.f32.mrb[0].mxu0
    %v4999 = vadd.f32 %v4958, %v4998
    %v5000 = vpop.f32.mrb[0].mxu0
    %v5001 = vpop.f32.mrb[0].mxu0
    %5002 = vdwg.mxu0
    %5003 = vmatprep.subr.bf16.mxu0 %v3560
    %5004 = vmatpush1.bf16.msra.mxu0 %v3559
    %5005 = vmatprep.subr.bf16.mxu0 %v3564
    %5006 = vmatpush1.bf16.msra.mxu0 %v3563
    %5007 = vmatprep.subr.bf16.mxu0 %v3568
    %5008 = vmatpush1.bf16.msra.mxu0 %v3567
    %5009 = vmatprep.subr.bf16.mxu0 %v3572
    %5010 = vmatpush1.bf16.msra.mxu0 %v3571
    %5011 = vmatprep.subr.bf16.mxu0 %v3576
    %5012 = vmatpush1.bf16.msra.mxu0 %v3575
    %5013 = vmatprep.subr.bf16.mxu0 %v3580
    %5014 = vmatpush1.bf16.msra.mxu0 %v3579
    %5015 = vmatprep.subr.bf16.mxu0 %v3584
    %5016 = vmatpush1.bf16.msra.mxu0 %v3583
    %5017 = vmatprep.subr.bf16.mxu0 %v3588
    %5018 = vmatpush1.bf16.msra.mxu0 %v3587
    %5019 = vmatprep.subr.bf16.mxu0 %v3592
    %5020 = vmatpush1.bf16.msra.mxu0 %v3591
    %5021 = vmatprep.subr.bf16.mxu0 %v3596
    %5022 = vmatpush1.bf16.msra.mxu0 %v3595
    %5023 = vmatprep.subr.bf16.mxu0 %v3600
    %5024 = vmatpush1.bf16.msra.mxu0 %v3599
    %5025 = vmatprep.subr.bf16.mxu0 %v3604
    %5026 = vmatpush1.bf16.msra.mxu0 %v3603
    %5027 = vmatprep.subr.bf16.mxu0 %v3608
    %5028 = vmatpush1.bf16.msra.mxu0 %v3607
    %5029 = vmatprep.subr.bf16.mxu0 %v3612
    %5030 = vmatpush1.bf16.msra.mxu0 %v3611
    %5031 = vmatprep.subr.bf16.mxu0 %v3616
    %5032 = vmatpush1.bf16.msra.mxu0 %v3615
    %5033 = vmatprep.subr.bf16.mxu0 %v3620
    %5034 = vmatpush1.bf16.msra.mxu0 %v3619
    %5035 = vmatprep.mubr.bf16.mxu0 %v960
    %5036 = vmatmul.mubr.bf16.gmra.mrb[0].mxu0 %v959
    %v5037 = vpop.f32.mrb[0].mxu0
    %v5038 = vadd.f32 %v4997, %v5037
    %v5039 = vpop.f32.mrb[0].mxu0
    %v5040 = vadd.f32 %v4999, %v5039
    %v5041 = vpop.f32.mrb[0].mxu0
    %v5042 = vpop.f32.mrb[0].mxu0
    %5043 = vdwg.mxu0
    %5044 = vmatprep.subr.bf16.mxu0 %v3624
    %5045 = vmatpush1.bf16.msra.mxu0 %v3623
    %5046 = vmatprep.subr.bf16.mxu0 %v3628
    %5047 = vmatpush1.bf16.msra.mxu0 %v3627
    %5048 = vmatprep.subr.bf16.mxu0 %v3632
    %5049 = vmatpush1.bf16.msra.mxu0 %v3631
    %5050 = vmatprep.subr.bf16.mxu0 %v3636
    %5051 = vmatpush1.bf16.msra.mxu0 %v3635
    %5052 = vmatprep.subr.bf16.mxu0 %v3640
    %5053 = vmatpush1.bf16.msra.mxu0 %v3639
    %5054 = vmatprep.subr.bf16.mxu0 %v3644
    %5055 = vmatpush1.bf16.msra.mxu0 %v3643
    %5056 = vmatprep.subr.bf16.mxu0 %v3648
    %5057 = vmatpush1.bf16.msra.mxu0 %v3647
    %5058 = vmatprep.subr.bf16.mxu0 %v3652
    %5059 = vmatpush1.bf16.msra.mxu0 %v3651
    %5060 = vmatprep.subr.bf16.mxu0 %v3656
    %5061 = vmatpush1.bf16.msra.mxu0 %v3655
    %5062 = vmatprep.subr.bf16.mxu0 %v3660
    %5063 = vmatpush1.bf16.msra.mxu0 %v3659
    %5064 = vmatprep.subr.bf16.mxu0 %v3664
    %5065 = vmatpush1.bf16.msra.mxu0 %v3663
    %5066 = vmatprep.subr.bf16.mxu0 %v3668
    %5067 = vmatpush1.bf16.msra.mxu0 %v3667
    %5068 = vmatprep.subr.bf16.mxu0 %v3672
    %5069 = vmatpush1.bf16.msra.mxu0 %v3671
    %5070 = vmatprep.subr.bf16.mxu0 %v3676
    %5071 = vmatpush1.bf16.msra.mxu0 %v3675
    %5072 = vmatprep.subr.bf16.mxu0 %v3680
    %5073 = vmatpush1.bf16.msra.mxu0 %v3679
    %5074 = vmatprep.subr.bf16.mxu0 %v3684
    %5075 = vmatpush1.bf16.msra.mxu0 %v3683
    %5076 = vmatprep.mubr.bf16.mxu0 %v962
    %5077 = vmatmul.mubr.bf16.gmra.mrb[0].mxu0 %v961
    %v5078 = vpop.f32.mrb[0].mxu0
    %v5079 = vadd.f32 %v5038, %v5078
    %v5080 = vpop.f32.mrb[0].mxu0
    %v5081 = vadd.f32 %v5040, %v5080
    %v5082 = vpop.f32.mrb[0].mxu0
    %v5083 = vpop.f32.mrb[0].mxu0
    %5084 = vdwg.mxu0
    %5085 = vmatprep.subr.bf16.mxu0 %v3688
    %5086 = vmatpush1.bf16.msra.mxu0 %v3687
    %5087 = vmatprep.subr.bf16.mxu0 %v3692
    %5088 = vmatpush1.bf16.msra.mxu0 %v3691
    %5089 = vmatprep.subr.bf16.mxu0 %v3696
    %5090 = vmatpush1.bf16.msra.mxu0 %v3695
    %5091 = vmatprep.subr.bf16.mxu0 %v3700
    %5092 = vmatpush1.bf16.msra.mxu0 %v3699
    %5093 = vmatprep.subr.bf16.mxu0 %v3704
    %5094 = vmatpush1.bf16.msra.mxu0 %v3703
    %5095 = vmatprep.subr.bf16.mxu0 %v3708
    %5096 = vmatpush1.bf16.msra.mxu0 %v3707
    %5097 = vmatprep.subr.bf16.mxu0 %v3712
    %5098 = vmatpush1.bf16.msra.mxu0 %v3711
    %5099 = vmatprep.subr.bf16.mxu0 %v3716
    %5100 = vmatpush1.bf16.msra.mxu0 %v3715
    %5101 = vmatprep.subr.bf16.mxu0 %v3720
    %5102 = vmatpush1.bf16.msra.mxu0 %v3719
    %5103 = vmatprep.subr.bf16.mxu0 %v3724
    %5104 = vmatpush1.bf16.msra.mxu0 %v3723
    %5105 = vmatprep.subr.bf16.mxu0 %v3728
    %5106 = vmatpush1.bf16.msra.mxu0 %v3727
    %5107 = vmatprep.subr.bf16.mxu0 %v3732
    %5108 = vmatpush1.bf16.msra.mxu0 %v3731
    %5109 = vmatprep.subr.bf16.mxu0 %v3736
    %5110 = vmatpush1.bf16.msra.mxu0 %v3735
    %5111 = vmatprep.subr.bf16.mxu0 %v3740
    %5112 = vmatpush1.bf16.msra.mxu0 %v3739
    %5113 = vmatprep.subr.bf16.mxu0 %v3744
    %5114 = vmatpush1.bf16.msra.mxu0 %v3743
    %5115 = vmatprep.subr.bf16.mxu0 %v3748
    %5116 = vmatpush1.bf16.msra.mxu0 %v3747
    %5117 = vmatprep.mubr.bf16.mxu0 %v964
    %5118 = vmatmul.mubr.bf16.gmra.mrb[0].mxu0 %v963
    %v5119 = vpop.f32.mrb[0].mxu0
    %v5120 = vadd.f32 %v5079, %v5119
    %v5121 = vpop.f32.mrb[0].mxu0
    %v5122 = vadd.f32 %v5081, %v5121
    %v5123 = vpop.f32.mrb[0].mxu0
    %v5124 = vpop.f32.mrb[0].mxu0
    %5125 = vdwg.mxu0
    %5126 = vmatprep.subr.bf16.mxu0 %v3752
    %5127 = vmatpush1.bf16.msra.mxu0 %v3751
    %5128 = vmatprep.subr.bf16.mxu0 %v3756
    %5129 = vmatpush1.bf16.msra.mxu0 %v3755
    %5130 = vmatprep.subr.bf16.mxu0 %v3760
    %5131 = vmatpush1.bf16.msra.mxu0 %v3759
    %5132 = vmatprep.subr.bf16.mxu0 %v3764
    %5133 = vmatpush1.bf16.msra.mxu0 %v3763
    %5134 = vmatprep.subr.bf16.mxu0 %v3768
    %5135 = vmatpush1.bf16.msra.mxu0 %v3767
    %5136 = vmatprep.subr.bf16.mxu0 %v3772
    %5137 = vmatpush1.bf16.msra.mxu0 %v3771
    %5138 = vmatprep.subr.bf16.mxu0 %v3776
    %5139 = vmatpush1.bf16.msra.mxu0 %v3775
    %5140 = vmatprep.subr.bf16.mxu0 %v3780
    %5141 = vmatpush1.bf16.msra.mxu0 %v3779
    %5142 = vmatprep.subr.bf16.mxu0 %v3784
    %5143 = vmatpush1.bf16.msra.mxu0 %v3783
    %5144 = vmatprep.subr.bf16.mxu0 %v3788
    %5145 = vmatpush1.bf16.msra.mxu0 %v3787
    %5146 = vmatprep.subr.bf16.mxu0 %v3792
    %5147 = vmatpush1.bf16.msra.mxu0 %v3791
    %5148 = vmatprep.subr.bf16.mxu0 %v3796
    %5149 = vmatpush1.bf16.msra.mxu0 %v3795
    %5150 = vmatprep.subr.bf16.mxu0 %v3800
    %5151 = vmatpush1.bf16.msra.mxu0 %v3799
    %5152 = vmatprep.subr.bf16.mxu0 %v3804
    %5153 = vmatpush1.bf16.msra.mxu0 %v3803
    %5154 = vmatprep.subr.bf16.mxu0 %v3808
    %5155 = vmatpush1.bf16.msra.mxu0 %v3807
    %5156 = vmatprep.subr.bf16.mxu0 %v3812
    %5157 = vmatpush1.bf16.msra.mxu0 %v3811
    %5158 = vmatprep.mubr.bf16.mxu0 %v966
    %5159 = vmatmul.mubr.bf16.gmra.mrb[0].mxu0 %v965
    %v5160 = vpop.f32.mrb[0].mxu0
    %v5161 = vadd.f32 %v5120, %v5160
    %v5162 = vpop.f32.mrb[0].mxu0
    %v5163 = vadd.f32 %v5122, %v5162
    %v5164 = vpop.f32.mrb[0].mxu0
    %v5165 = vpop.f32.mrb[0].mxu0
    %5166 = vdwg.mxu0
    %5167 = vmatprep.subr.bf16.mxu0 %v3816
    %5168 = vmatpush1.bf16.msra.mxu0 %v3815
    %5169 = vmatprep.subr.bf16.mxu0 %v3820
    %5170 = vmatpush1.bf16.msra.mxu0 %v3819
    %5171 = vmatprep.subr.bf16.mxu0 %v3824
    %5172 = vmatpush1.bf16.msra.mxu0 %v3823
    %5173 = vmatprep.subr.bf16.mxu0 %v3828
    %5174 = vmatpush1.bf16.msra.mxu0 %v3827
    %5175 = vmatprep.subr.bf16.mxu0 %v3832
    %5176 = vmatpush1.bf16.msra.mxu0 %v3831
    %5177 = vmatprep.subr.bf16.mxu0 %v3836
    %5178 = vmatpush1.bf16.msra.mxu0 %v3835
    %5179 = vmatprep.subr.bf16.mxu0 %v3840
    %5180 = vmatpush1.bf16.msra.mxu0 %v3839
    %5181 = vmatprep.subr.bf16.mxu0 %v3844
    %5182 = vmatpush1.bf16.msra.mxu0 %v3843
    %5183 = vmatprep.subr.bf16.mxu0 %v3848
    %5184 = vmatpush1.bf16.msra.mxu0 %v3847
    %5185 = vmatprep.subr.bf16.mxu0 %v3852
    %5186 = vmatpush1.bf16.msra.mxu0 %v3851
    %5187 = vmatprep.subr.bf16.mxu0 %v3856
    %5188 = vmatpush1.bf16.msra.mxu0 %v3855
    %5189 = vmatprep.subr.bf16.mxu0 %v3860
    %5190 = vmatpush1.bf16.msra.mxu0 %v3859
    %5191 = vmatprep.subr.bf16.mxu0 %v3864
    %5192 = vmatpush1.bf16.msra.mxu0 %v3863
    %5193 = vmatprep.subr.bf16.mxu0 %v3868
    %5194 = vmatpush1.bf16.msra.mxu0 %v3867
    %5195 = vmatprep.subr.bf16.mxu0 %v3872
    %5196 = vmatpush1.bf16.msra.mxu0 %v3871
    %5197 = vmatprep.subr.bf16.mxu0 %v3876
    %5198 = vmatpush1.bf16.msra.mxu0 %v3875
    %5199 = vmatprep.mubr.bf16.mxu0 %v968
    %5200 = vmatmul.mubr.bf16.gmra.mrb[0].mxu0 %v967
    %v5201 = vpop.f32.mrb[0].mxu0
    %v5202 = vadd.f32 %v5161, %v5201
    %v5203 = vpop.f32.mrb[0].mxu0
    %v5204 = vadd.f32 %v5163, %v5203
    %v5205 = vpop.f32.mrb[0].mxu0
    %v5206 = vpop.f32.mrb[0].mxu0
    %5207 = vdwg.mxu0
    %5208 = vmatprep.subr.bf16.mxu0 %v3880
    %5209 = vmatpush1.bf16.msra.mxu0 %v3879
    %5210 = vmatprep.subr.bf16.mxu0 %v3884
    %5211 = vmatpush1.bf16.msra.mxu0 %v3883
    %5212 = vmatprep.subr.bf16.mxu0 %v3888
    %5213 = vmatpush1.bf16.msra.mxu0 %v3887
    %5214 = vmatprep.subr.bf16.mxu0 %v3892
    %5215 = vmatpush1.bf16.msra.mxu0 %v3891
    %5216 = vmatprep.subr.bf16.mxu0 %v3896
    %5217 = vmatpush1.bf16.msra.mxu0 %v3895
    %5218 = vmatprep.subr.bf16.mxu0 %v3900
    %5219 = vmatpush1.bf16.msra.mxu0 %v3899
    %5220 = vmatprep.subr.bf16.mxu0 %v3904
    %5221 = vmatpush1.bf16.msra.mxu0 %v3903
    %5222 = vmatprep.subr.bf16.mxu0 %v3908
    %5223 = vmatpush1.bf16.msra.mxu0 %v3907
    %5224 = vmatprep.subr.bf16.mxu0 %v3912
    %5225 = vmatpush1.bf16.msra.mxu0 %v3911
    %5226 = vmatprep.subr.bf16.mxu0 %v3916
    %5227 = vmatpush1.bf16.msra.mxu0 %v3915
    %5228 = vmatprep.subr.bf16.mxu0 %v3920
    %5229 = vmatpush1.bf16.msra.mxu0 %v3919
    %5230 = vmatprep.subr.bf16.mxu0 %v3924
    %5231 = vmatpush1.bf16.msra.mxu0 %v3923
    %5232 = vmatprep.subr.bf16.mxu0 %v3928
    %5233 = vmatpush1.bf16.msra.mxu0 %v3927
    %5234 = vmatprep.subr.bf16.mxu0 %v3932
    %5235 = vmatpush1.bf16.msra.mxu0 %v3931
    %5236 = vmatprep.subr.bf16.mxu0 %v3936
    %5237 = vmatpush1.bf16.msra.mxu0 %v3935
    %5238 = vmatprep.subr.bf16.mxu0 %v3940
    %5239 = vmatpush1.bf16.msra.mxu0 %v3939
    %5240 = vmatprep.mubr.bf16.mxu0 %v970
    %5241 = vmatmul.mubr.bf16.gmra.mrb[0].mxu0 %v969
    %v5242 = vpop.f32.mrb[0].mxu0
    %v5243 = vadd.f32 %v5202, %v5242
    %v5244 = vpop.f32.mrb[0].mxu0
    %v5245 = vadd.f32 %v5204, %v5244
    %v5246 = vpop.f32.mrb[0].mxu0
    %v5247 = vpop.f32.mrb[0].mxu0
    %5248 = vdwg.mxu0
    %5249 = vmatprep.subr.bf16.mxu0 %v3944
    %5250 = vmatpush1.bf16.msra.mxu0 %v3943
    %5251 = vmatprep.subr.bf16.mxu0 %v3948
    %5252 = vmatpush1.bf16.msra.mxu0 %v3947
    %5253 = vmatprep.subr.bf16.mxu0 %v3952
    %5254 = vmatpush1.bf16.msra.mxu0 %v3951
    %5255 = vmatprep.subr.bf16.mxu0 %v3956
    %5256 = vmatpush1.bf16.msra.mxu0 %v3955
    %5257 = vmatprep.subr.bf16.mxu0 %v3960
    %5258 = vmatpush1.bf16.msra.mxu0 %v3959
    %5259 = vmatprep.subr.bf16.mxu0 %v3964
    %5260 = vmatpush1.bf16.msra.mxu0 %v3963
    %5261 = vmatprep.subr.bf16.mxu0 %v3968
    %5262 = vmatpush1.bf16.msra.mxu0 %v3967
    %5263 = vmatprep.subr.bf16.mxu0 %v3972
    %5264 = vmatpush1.bf16.msra.mxu0 %v3971
    %5265 = vmatprep.subr.bf16.mxu0 %v3976
    %5266 = vmatpush1.bf16.msra.mxu0 %v3975
    %5267 = vmatprep.subr.bf16.mxu0 %v3980
    %5268 = vmatpush1.bf16.msra.mxu0 %v3979
    %5269 = vmatprep.subr.bf16.mxu0 %v3984
    %5270 = vmatpush1.bf16.msra.mxu0 %v3983
    %5271 = vmatprep.subr.bf16.mxu0 %v3988
    %5272 = vmatpush1.bf16.msra.mxu0 %v3987
    %5273 = vmatprep.subr.bf16.mxu0 %v3992
    %5274 = vmatpush1.bf16.msra.mxu0 %v3991
    %5275 = vmatprep.subr.bf16.mxu0 %v3996
    %5276 = vmatpush1.bf16.msra.mxu0 %v3995
    %5277 = vmatprep.subr.bf16.mxu0 %v4000
    %5278 = vmatpush1.bf16.msra.mxu0 %v3999
    %5279 = vmatprep.subr.bf16.mxu0 %v4004
    %5280 = vmatpush1.bf16.msra.mxu0 %v4003
    %5281 = vmatprep.mubr.bf16.mxu0 %v972
    %5282 = vmatmul.mubr.bf16.gmra.mrb[0].mxu0 %v971
    %v5283 = vpop.f32.mrb[0].mxu0
    %v5284 = vadd.f32 %v5243, %v5283
    %v5285 = vpop.f32.mrb[0].mxu0
    %v5286 = vadd.f32 %v5245, %v5285
    %v5287 = vpop.f32.mrb[0].mxu0
    %v5288 = vpop.f32.mrb[0].mxu0
    %5289 = vdwg.mxu0
    %5290 = vmatprep.subr.bf16.mxu0 %v4008
    %5291 = vmatpush1.bf16.msra.mxu0 %v4007
    %5292 = vmatprep.subr.bf16.mxu0 %v4012
    %5293 = vmatpush1.bf16.msra.mxu0 %v4011
    %5294 = vmatprep.subr.bf16.mxu0 %v4016
    %5295 = vmatpush1.bf16.msra.mxu0 %v4015
    %5296 = vmatprep.subr.bf16.mxu0 %v4020
    %5297 = vmatpush1.bf16.msra.mxu0 %v4019
    %5298 = vmatprep.subr.bf16.mxu0 %v4024
    %5299 = vmatpush1.bf16.msra.mxu0 %v4023
    %5300 = vmatprep.subr.bf16.mxu0 %v4028
    %5301 = vmatpush1.bf16.msra.mxu0 %v4027
    %5302 = vmatprep.subr.bf16.mxu0 %v4032
    %5303 = vmatpush1.bf16.msra.mxu0 %v4031
    %5304 = vmatprep.subr.bf16.mxu0 %v4036
    %5305 = vmatpush1.bf16.msra.mxu0 %v4035
    %5306 = vmatprep.subr.bf16.mxu0 %v4040
    %5307 = vmatpush1.bf16.msra.mxu0 %v4039
    %5308 = vmatprep.subr.bf16.mxu0 %v4044
    %5309 = vmatpush1.bf16.msra.mxu0 %v4043
    %5310 = vmatprep.subr.bf16.mxu0 %v4048
    %5311 = vmatpush1.bf16.msra.mxu0 %v4047
    %5312 = vmatprep.subr.bf16.mxu0 %v4052
    %5313 = vmatpush1.bf16.msra.mxu0 %v4051
    %5314 = vmatprep.subr.bf16.mxu0 %v4056
    %5315 = vmatpush1.bf16.msra.mxu0 %v4055
    %5316 = vmatprep.subr.bf16.mxu0 %v4060
    %5317 = vmatpush1.bf16.msra.mxu0 %v4059
    %5318 = vmatprep.subr.bf16.mxu0 %v4064
    %5319 = vmatpush1.bf16.msra.mxu0 %v4063
    %5320 = vmatprep.subr.bf16.mxu0 %v4068
    %5321 = vmatpush1.bf16.msra.mxu0 %v4067
    %5322 = vmatprep.mubr.bf16.mxu0 %v974
    %5323 = vmatmul.mubr.bf16.gmra.mrb[0].mxu0 %v973
    %v5324 = vpop.f32.mrb[0].mxu0
    %v5325 = vadd.f32 %v5284, %v5324
    %v5326 = vpop.f32.mrb[0].mxu0
    %v5327 = vadd.f32 %v5286, %v5326
    %v5328 = vpop.f32.mrb[0].mxu0
    %v5329 = vpop.f32.mrb[0].mxu0
    %5330 = vdwg.mxu0
    %5331 = vmatprep.subr.bf16.mxu0 %v3306
    %5332 = vmatpush1.bf16.msra.mxu0 %v3305
    %5333 = vmatprep.subr.bf16.mxu0 %v3310
    %5334 = vmatpush1.bf16.msra.mxu0 %v3309
    %5335 = vmatprep.subr.bf16.mxu0 %v3314
    %5336 = vmatpush1.bf16.msra.mxu0 %v3313
    %5337 = vmatprep.subr.bf16.mxu0 %v3318
    %5338 = vmatpush1.bf16.msra.mxu0 %v3317
    %5339 = vmatprep.subr.bf16.mxu0 %v3322
    %5340 = vmatpush1.bf16.msra.mxu0 %v3321
    %5341 = vmatprep.subr.bf16.mxu0 %v3326
    %5342 = vmatpush1.bf16.msra.mxu0 %v3325
    %5343 = vmatprep.subr.bf16.mxu0 %v3330
    %5344 = vmatpush1.bf16.msra.mxu0 %v3329
    %5345 = vmatprep.subr.bf16.mxu0 %v3334
    %5346 = vmatpush1.bf16.msra.mxu0 %v3333
    %5347 = vmatprep.subr.bf16.mxu0 %v3338
    %5348 = vmatpush1.bf16.msra.mxu0 %v3337
    %5349 = vmatprep.subr.bf16.mxu0 %v3342
    %5350 = vmatpush1.bf16.msra.mxu0 %v3341
    %5351 = vmatprep.subr.bf16.mxu0 %v3346
    %5352 = vmatpush1.bf16.msra.mxu0 %v3345
    %5353 = vmatprep.subr.bf16.mxu0 %v3350
    %5354 = vmatpush1.bf16.msra.mxu0 %v3349
    %5355 = vmatprep.subr.bf16.mxu0 %v3354
    %5356 = vmatpush1.bf16.msra.mxu0 %v3353
    %5357 = vmatprep.subr.bf16.mxu0 %v3358
    %5358 = vmatpush1.bf16.msra.mxu0 %v3357
    %5359 = vmatprep.subr.bf16.mxu0 %v3362
    %5360 = vmatpush1.bf16.msra.mxu0 %v3361
    %5361 = vmatprep.subr.bf16.mxu0 %v3366
    %5362 = vmatpush1.bf16.msra.mxu0 %v3365
    %5363 = vmatprep.mubr.bf16.mxu0 %v952
    %5364 = vmatmul.mubr.bf16.gmra.mrb[0].mxu0 %v951
    %v5365 = vpop.f32.mrb[0].mxu0
    %v5366 = vadd.f32 0.0, %v5365
    %v5367 = vpop.f32.mrb[0].mxu0
    %v5368 = vadd.f32 0.0, %v5367
    %v5369 = vpop.f32.mrb[0].mxu0
    %v5370 = vpop.f32.mrb[0].mxu0
    %5371 = vdwg.mxu0
    %5372 = vmatprep.subr.bf16.mxu0 %v3370
    %5373 = vmatpush1.bf16.msra.mxu0 %v3369
    %5374 = vmatprep.subr.bf16.mxu0 %v3374
    %5375 = vmatpush1.bf16.msra.mxu0 %v3373
    %5376 = vmatprep.subr.bf16.mxu0 %v3378
    %5377 = vmatpush1.bf16.msra.mxu0 %v3377
    %5378 = vmatprep.subr.bf16.mxu0 %v3382
    %5379 = vmatpush1.bf16.msra.mxu0 %v3381
    %5380 = vmatprep.subr.bf16.mxu0 %v3386
    %5381 = vmatpush1.bf16.msra.mxu0 %v3385
    %5382 = vmatprep.subr.bf16.mxu0 %v3390
    %5383 = vmatpush1.bf16.msra.mxu0 %v3389
    %5384 = vmatprep.subr.bf16.mxu0 %v3394
    %5385 = vmatpush1.bf16.msra.mxu0 %v3393
    %5386 = vmatprep.subr.bf16.mxu0 %v3398
    %5387 = vmatpush1.bf16.msra.mxu0 %v3397
    %5388 = vmatprep.subr.bf16.mxu0 %v3402
    %5389 = vmatpush1.bf16.msra.mxu0 %v3401
    %5390 = vmatprep.subr.bf16.mxu0 %v3406
    %5391 = vmatpush1.bf16.msra.mxu0 %v3405
    %5392 = vmatprep.subr.bf16.mxu0 %v3410
    %5393 = vmatpush1.bf16.msra.mxu0 %v3409
    %5394 = vmatprep.subr.bf16.mxu0 %v3414
    %5395 = vmatpush1.bf16.msra.mxu0 %v3413
    %5396 = vmatprep.subr.bf16.mxu0 %v3418
    %5397 = vmatpush1.bf16.msra.mxu0 %v3417
    %5398 = vmatprep.subr.bf16.mxu0 %v3422
    %5399 = vmatpush1.bf16.msra.mxu0 %v3421
    %5400 = vmatprep.subr.bf16.mxu0 %v3426
    %5401 = vmatpush1.bf16.msra.mxu0 %v3425
    %5402 = vmatprep.subr.bf16.mxu0 %v3430
    %5403 = vmatpush1.bf16.msra.mxu0 %v3429
    %5404 = vmatprep.mubr.bf16.mxu0 %v954
    %5405 = vmatmul.mubr.bf16.gmra.mrb[0].mxu0 %v953
    %v5406 = vpop.f32.mrb[0].mxu0
    %v5407 = vadd.f32 %v5366, %v5406
    %v5408 = vpop.f32.mrb[0].mxu0
    %v5409 = vadd.f32 %v5368, %v5408
    %v5410 = vpop.f32.mrb[0].mxu0
    %v5411 = vpop.f32.mrb[0].mxu0
    %5412 = vdwg.mxu0
    %5413 = vmatprep.subr.bf16.mxu0 %v3434
    %5414 = vmatpush1.bf16.msra.mxu0 %v3433
    %5415 = vmatprep.subr.bf16.mxu0 %v3438
    %5416 = vmatpush1.bf16.msra.mxu0 %v3437
    %5417 = vmatprep.subr.bf16.mxu0 %v3442
    %5418 = vmatpush1.bf16.msra.mxu0 %v3441
    %5419 = vmatprep.subr.bf16.mxu0 %v3446
    %5420 = vmatpush1.bf16.msra.mxu0 %v3445
    %5421 = vmatprep.subr.bf16.mxu0 %v3450
    %5422 = vmatpush1.bf16.msra.mxu0 %v3449
    %5423 = vmatprep.subr.bf16.mxu0 %v3454
    %5424 = vmatpush1.bf16.msra.mxu0 %v3453
    %5425 = vmatprep.subr.bf16.mxu0 %v3458
    %5426 = vmatpush1.bf16.msra.mxu0 %v3457
    %5427 = vmatprep.subr.bf16.mxu0 %v3462
    %5428 = vmatpush1.bf16.msra.mxu0 %v3461
    %5429 = vmatprep.subr.bf16.mxu0 %v3466
    %5430 = vmatpush1.bf16.msra.mxu0 %v3465
    %5431 = vmatprep.subr.bf16.mxu0 %v3470
    %5432 = vmatpush1.bf16.msra.mxu0 %v3469
    %5433 = vmatprep.subr.bf16.mxu0 %v3474
    %5434 = vmatpush1.bf16.msra.mxu0 %v3473
    %5435 = vmatprep.subr.bf16.mxu0 %v3478
    %5436 = vmatpush1.bf16.msra.mxu0 %v3477
    %5437 = vmatprep.subr.bf16.mxu0 %v3482
    %5438 = vmatpush1.bf16.msra.mxu0 %v3481
    %5439 = vmatprep.subr.bf16.mxu0 %v3486
    %5440 = vmatpush1.bf16.msra.mxu0 %v3485
    %5441 = vmatprep.subr.bf16.mxu0 %v3490
    %5442 = vmatpush1.bf16.msra.mxu0 %v3489
    %5443 = vmatprep.subr.bf16.mxu0 %v3494
    %5444 = vmatpush1.bf16.msra.mxu0 %v3493
    %5445 = vmatprep.mubr.bf16.mxu0 %v956
    %5446 = vmatmul.mubr.bf16.gmra.mrb[0].mxu0 %v955
    %v5447 = vpop.f32.mrb[0].mxu0
    %v5448 = vadd.f32 %v5407, %v5447
    %v5449 = vpop.f32.mrb[0].mxu0
    %v5450 = vadd.f32 %v5409, %v5449
    %v5451 = vpop.f32.mrb[0].mxu0
    %v5452 = vpop.f32.mrb[0].mxu0
    %5453 = vdwg.mxu0
    %5454 = vmatprep.subr.bf16.mxu0 %v3498
    %5455 = vmatpush1.bf16.msra.mxu0 %v3497
    %5456 = vmatprep.subr.bf16.mxu0 %v3502
    %5457 = vmatpush1.bf16.msra.mxu0 %v3501
    %5458 = vmatprep.subr.bf16.mxu0 %v3506
    %5459 = vmatpush1.bf16.msra.mxu0 %v3505
    %5460 = vmatprep.subr.bf16.mxu0 %v3510
    %5461 = vmatpush1.bf16.msra.mxu0 %v3509
    %5462 = vmatprep.subr.bf16.mxu0 %v3514
    %5463 = vmatpush1.bf16.msra.mxu0 %v3513
    %5464 = vmatprep.subr.bf16.mxu0 %v3518
    %5465 = vmatpush1.bf16.msra.mxu0 %v3517
    %5466 = vmatprep.subr.bf16.mxu0 %v3522
    %5467 = vmatpush1.bf16.msra.mxu0 %v3521
    %5468 = vmatprep.subr.bf16.mxu0 %v3526
    %5469 = vmatpush1.bf16.msra.mxu0 %v3525
    %5470 = vmatprep.subr.bf16.mxu0 %v3530
    %5471 = vmatpush1.bf16.msra.mxu0 %v3529
    %5472 = vmatprep.subr.bf16.mxu0 %v3534
    %5473 = vmatpush1.bf16.msra.mxu0 %v3533
    %5474 = vmatprep.subr.bf16.mxu0 %v3538
    %5475 = vmatpush1.bf16.msra.mxu0 %v3537
    %5476 = vmatprep.subr.bf16.mxu0 %v3542
    %5477 = vmatpush1.bf16.msra.mxu0 %v3541
    %5478 = vmatprep.subr.bf16.mxu0 %v3546
    %5479 = vmatpush1.bf16.msra.mxu0 %v3545
    %5480 = vmatprep.subr.bf16.mxu0 %v3550
    %5481 = vmatpush1.bf16.msra.mxu0 %v3549
    %5482 = vmatprep.subr.bf16.mxu0 %v3554
    %5483 = vmatpush1.bf16.msra.mxu0 %v3553
    %5484 = vmatprep.subr.bf16.mxu0 %v3558
    %5485 = vmatpush1.bf16.msra.mxu0 %v3557
    %5486 = vmatprep.mubr.bf16.mxu0 %v958
    %5487 = vmatmul.mubr.bf16.gmra.mrb[0].mxu0 %v957
    %v5488 = vpop.f32.mrb[0].mxu0
    %v5489 = vadd.f32 %v5448, %v5488
    %v5490 = vpop.f32.mrb[0].mxu0
    %v5491 = vadd.f32 %v5450, %v5490
    %v5492 = vpop.f32.mrb[0].mxu0
    %v5493 = vpop.f32.mrb[0].mxu0
    %5494 = vdwg.mxu0
    %5495 = vmatprep.subr.bf16.mxu0 %v3562
    %5496 = vmatpush1.bf16.msra.mxu0 %v3561
    %5497 = vmatprep.subr.bf16.mxu0 %v3566
    %5498 = vmatpush1.bf16.msra.mxu0 %v3565
    %5499 = vmatprep.subr.bf16.mxu0 %v3570
    %5500 = vmatpush1.bf16.msra.mxu0 %v3569
    %5501 = vmatprep.subr.bf16.mxu0 %v3574
    %5502 = vmatpush1.bf16.msra.mxu0 %v3573
    %5503 = vmatprep.subr.bf16.mxu0 %v3578
    %5504 = vmatpush1.bf16.msra.mxu0 %v3577
    %5505 = vmatprep.subr.bf16.mxu0 %v3582
    %5506 = vmatpush1.bf16.msra.mxu0 %v3581
    %5507 = vmatprep.subr.bf16.mxu0 %v3586
    %5508 = vmatpush1.bf16.msra.mxu0 %v3585
    %5509 = vmatprep.subr.bf16.mxu0 %v3590
    %5510 = vmatpush1.bf16.msra.mxu0 %v3589
    %5511 = vmatprep.subr.bf16.mxu0 %v3594
    %5512 = vmatpush1.bf16.msra.mxu0 %v3593
    %5513 = vmatprep.subr.bf16.mxu0 %v3598
    %5514 = vmatpush1.bf16.msra.mxu0 %v3597
    %5515 = vmatprep.subr.bf16.mxu0 %v3602
    %5516 = vmatpush1.bf16.msra.mxu0 %v3601
    %5517 = vmatprep.subr.bf16.mxu0 %v3606
    %5518 = vmatpush1.bf16.msra.mxu0 %v3605
    %5519 = vmatprep.subr.bf16.mxu0 %v3610
    %5520 = vmatpush1.bf16.msra.mxu0 %v3609
    %5521 = vmatprep.subr.bf16.mxu0 %v3614
    %5522 = vmatpush1.bf16.msra.mxu0 %v3613
    %5523 = vmatprep.subr.bf16.mxu0 %v3618
    %5524 = vmatpush1.bf16.msra.mxu0 %v3617
    %5525 = vmatprep.subr.bf16.mxu0 %v3622
    %5526 = vmatpush1.bf16.msra.mxu0 %v3621
    %5527 = vmatprep.mubr.bf16.mxu0 %v960
    %5528 = vmatmul.mubr.bf16.gmra.mrb[0].mxu0 %v959
    %v5529 = vpop.f32.mrb[0].mxu0
    %v5530 = vadd.f32 %v5489, %v5529
    %v5531 = vpop.f32.mrb[0].mxu0
    %v5532 = vadd.f32 %v5491, %v5531
    %v5533 = vpop.f32.mrb[0].mxu0
    %v5534 = vpop.f32.mrb[0].mxu0
    %5535 = vdwg.mxu0
    %5536 = vmatprep.subr.bf16.mxu0 %v3626
    %5537 = vmatpush1.bf16.msra.mxu0 %v3625
    %5538 = vmatprep.subr.bf16.mxu0 %v3630
    %5539 = vmatpush1.bf16.msra.mxu0 %v3629
    %5540 = vmatprep.subr.bf16.mxu0 %v3634
    %5541 = vmatpush1.bf16.msra.mxu0 %v3633
    %5542 = vmatprep.subr.bf16.mxu0 %v3638
    %5543 = vmatpush1.bf16.msra.mxu0 %v3637
    %5544 = vmatprep.subr.bf16.mxu0 %v3642
    %5545 = vmatpush1.bf16.msra.mxu0 %v3641
    %5546 = vmatprep.subr.bf16.mxu0 %v3646
    %5547 = vmatpush1.bf16.msra.mxu0 %v3645
    %5548 = vmatprep.subr.bf16.mxu0 %v3650
    %5549 = vmatpush1.bf16.msra.mxu0 %v3649
    %5550 = vmatprep.subr.bf16.mxu0 %v3654
    %5551 = vmatpush1.bf16.msra.mxu0 %v3653
    %5552 = vmatprep.subr.bf16.mxu0 %v3658
    %5553 = vmatpush1.bf16.msra.mxu0 %v3657
    %5554 = vmatprep.subr.bf16.mxu0 %v3662
    %5555 = vmatpush1.bf16.msra.mxu0 %v3661
    %5556 = vmatprep.subr.bf16.mxu0 %v3666
    %5557 = vmatpush1.bf16.msra.mxu0 %v3665
    %5558 = vmatprep.subr.bf16.mxu0 %v3670
    %5559 = vmatpush1.bf16.msra.mxu0 %v3669
    %5560 = vmatprep.subr.bf16.mxu0 %v3674
    %5561 = vmatpush1.bf16.msra.mxu0 %v3673
    %5562 = vmatprep.subr.bf16.mxu0 %v3678
    %5563 = vmatpush1.bf16.msra.mxu0 %v3677
    %5564 = vmatprep.subr.bf16.mxu0 %v3682
    %5565 = vmatpush1.bf16.msra.mxu0 %v3681
    %5566 = vmatprep.subr.bf16.mxu0 %v3686
    %5567 = vmatpush1.bf16.msra.mxu0 %v3685
    %5568 = vmatprep.mubr.bf16.mxu0 %v962
    %5569 = vmatmul.mubr.bf16.gmra.mrb[0].mxu0 %v961
    %v5570 = vpop.f32.mrb[0].mxu0
    %v5571 = vadd.f32 %v5530, %v5570
    %v5572 = vpop.f32.mrb[0].mxu0
    %v5573 = vadd.f32 %v5532, %v5572
    %v5574 = vpop.f32.mrb[0].mxu0
    %v5575 = vpop.f32.mrb[0].mxu0
    %5576 = vdwg.mxu0
    %5577 = vmatprep.subr.bf16.mxu0 %v3690
    %5578 = vmatpush1.bf16.msra.mxu0 %v3689
    %5579 = vmatprep.subr.bf16.mxu0 %v3694
    %5580 = vmatpush1.bf16.msra.mxu0 %v3693
    %5581 = vmatprep.subr.bf16.mxu0 %v3698
    %5582 = vmatpush1.bf16.msra.mxu0 %v3697
    %5583 = vmatprep.subr.bf16.mxu0 %v3702
    %5584 = vmatpush1.bf16.msra.mxu0 %v3701
    %5585 = vmatprep.subr.bf16.mxu0 %v3706
    %5586 = vmatpush1.bf16.msra.mxu0 %v3705
    %5587 = vmatprep.subr.bf16.mxu0 %v3710
    %5588 = vmatpush1.bf16.msra.mxu0 %v3709
    %5589 = vmatprep.subr.bf16.mxu0 %v3714
    %5590 = vmatpush1.bf16.msra.mxu0 %v3713
    %5591 = vmatprep.subr.bf16.mxu0 %v3718
    %5592 = vmatpush1.bf16.msra.mxu0 %v3717
    %5593 = vmatprep.subr.bf16.mxu0 %v3722
    %5594 = vmatpush1.bf16.msra.mxu0 %v3721
    %5595 = vmatprep.subr.bf16.mxu0 %v3726
    %5596 = vmatpush1.bf16.msra.mxu0 %v3725
    %5597 = vmatprep.subr.bf16.mxu0 %v3730
    %5598 = vmatpush1.bf16.msra.mxu0 %v3729
    %5599 = vmatprep.subr.bf16.mxu0 %v3734
    %5600 = vmatpush1.bf16.msra.mxu0 %v3733
    %5601 = vmatprep.subr.bf16.mxu0 %v3738
    %5602 = vmatpush1.bf16.msra.mxu0 %v3737
    %5603 = vmatprep.subr.bf16.mxu0 %v3742
    %5604 = vmatpush1.bf16.msra.mxu0 %v3741
    %5605 = vmatprep.subr.bf16.mxu0 %v3746
    %5606 = vmatpush1.bf16.msra.mxu0 %v3745
    %5607 = vmatprep.subr.bf16.mxu0 %v3750
    %5608 = vmatpush1.bf16.msra.mxu0 %v3749
    %5609 = vmatprep.mubr.bf16.mxu0 %v964
    %5610 = vmatmul.mubr.bf16.gmra.mrb[0].mxu0 %v963
    %v5611 = vpop.f32.mrb[0].mxu0
    %v5612 = vadd.f32 %v5571, %v5611
    %v5613 = vpop.f32.mrb[0].mxu0
    %v5614 = vadd.f32 %v5573, %v5613
    %v5615 = vpop.f32.mrb[0].mxu0
    %v5616 = vpop.f32.mrb[0].mxu0
    %5617 = vdwg.mxu0
    %5618 = vmatprep.subr.bf16.mxu0 %v3754
    %5619 = vmatpush1.bf16.msra.mxu0 %v3753
    %5620 = vmatprep.subr.bf16.mxu0 %v3758
    %5621 = vmatpush1.bf16.msra.mxu0 %v3757
    %5622 = vmatprep.subr.bf16.mxu0 %v3762
    %5623 = vmatpush1.bf16.msra.mxu0 %v3761
    %5624 = vmatprep.subr.bf16.mxu0 %v3766
    %5625 = vmatpush1.bf16.msra.mxu0 %v3765
    %5626 = vmatprep.subr.bf16.mxu0 %v3770
    %5627 = vmatpush1.bf16.msra.mxu0 %v3769
    %5628 = vmatprep.subr.bf16.mxu0 %v3774
    %5629 = vmatpush1.bf16.msra.mxu0 %v3773
    %5630 = vmatprep.subr.bf16.mxu0 %v3778
    %5631 = vmatpush1.bf16.msra.mxu0 %v3777
    %5632 = vmatprep.subr.bf16.mxu0 %v3782
    %5633 = vmatpush1.bf16.msra.mxu0 %v3781
    %5634 = vmatprep.subr.bf16.mxu0 %v3786
    %5635 = vmatpush1.bf16.msra.mxu0 %v3785
    %5636 = vmatprep.subr.bf16.mxu0 %v3790
    %5637 = vmatpush1.bf16.msra.mxu0 %v3789
    %5638 = vmatprep.subr.bf16.mxu0 %v3794
    %5639 = vmatpush1.bf16.msra.mxu0 %v3793
    %5640 = vmatprep.subr.bf16.mxu0 %v3798
    %5641 = vmatpush1.bf16.msra.mxu0 %v3797
    %5642 = vmatprep.subr.bf16.mxu0 %v3802
    %5643 = vmatpush1.bf16.msra.mxu0 %v3801
    %5644 = vmatprep.subr.bf16.mxu0 %v3806
    %5645 = vmatpush1.bf16.msra.mxu0 %v3805
    %5646 = vmatprep.subr.bf16.mxu0 %v3810
    %5647 = vmatpush1.bf16.msra.mxu0 %v3809
    %5648 = vmatprep.subr.bf16.mxu0 %v3814
    %5649 = vmatpush1.bf16.msra.mxu0 %v3813
    %5650 = vmatprep.mubr.bf16.mxu0 %v966
    %5651 = vmatmul.mubr.bf16.gmra.mrb[0].mxu0 %v965
    %v5652 = vpop.f32.mrb[0].mxu0
    %v5653 = vadd.f32 %v5612, %v5652
    %v5654 = vpop.f32.mrb[0].mxu0
    %v5655 = vadd.f32 %v5614, %v5654
    %v5656 = vpop.f32.mrb[0].mxu0
    %v5657 = vpop.f32.mrb[0].mxu0
    %5658 = vdwg.mxu0
    %5659 = vmatprep.subr.bf16.mxu0 %v3818
    %5660 = vmatpush1.bf16.msra.mxu0 %v3817
    %5661 = vmatprep.subr.bf16.mxu0 %v3822
    %5662 = vmatpush1.bf16.msra.mxu0 %v3821
    %5663 = vmatprep.subr.bf16.mxu0 %v3826
    %5664 = vmatpush1.bf16.msra.mxu0 %v3825
    %5665 = vmatprep.subr.bf16.mxu0 %v3830
    %5666 = vmatpush1.bf16.msra.mxu0 %v3829
    %5667 = vmatprep.subr.bf16.mxu0 %v3834
    %5668 = vmatpush1.bf16.msra.mxu0 %v3833
    %5669 = vmatprep.subr.bf16.mxu0 %v3838
    %5670 = vmatpush1.bf16.msra.mxu0 %v3837
    %5671 = vmatprep.subr.bf16.mxu0 %v3842
    %5672 = vmatpush1.bf16.msra.mxu0 %v3841
    %5673 = vmatprep.subr.bf16.mxu0 %v3846
    %5674 = vmatpush1.bf16.msra.mxu0 %v3845
    %5675 = vmatprep.subr.bf16.mxu0 %v3850
    %5676 = vmatpush1.bf16.msra.mxu0 %v3849
    %5677 = vmatprep.subr.bf16.mxu0 %v3854
    %5678 = vmatpush1.bf16.msra.mxu0 %v3853
    %5679 = vmatprep.subr.bf16.mxu0 %v3858
    %5680 = vmatpush1.bf16.msra.mxu0 %v3857
    %5681 = vmatprep.subr.bf16.mxu0 %v3862
    %5682 = vmatpush1.bf16.msra.mxu0 %v3861
    %5683 = vmatprep.subr.bf16.mxu0 %v3866
    %5684 = vmatpush1.bf16.msra.mxu0 %v3865
    %5685 = vmatprep.subr.bf16.mxu0 %v3870
    %5686 = vmatpush1.bf16.msra.mxu0 %v3869
    %5687 = vmatprep.subr.bf16.mxu0 %v3874
    %5688 = vmatpush1.bf16.msra.mxu0 %v3873
    %5689 = vmatprep.subr.bf16.mxu0 %v3878
    %5690 = vmatpush1.bf16.msra.mxu0 %v3877
    %5691 = vmatprep.mubr.bf16.mxu0 %v968
    %5692 = vmatmul.mubr.bf16.gmra.mrb[0].mxu0 %v967
    %v5693 = vpop.f32.mrb[0].mxu0
    %v5694 = vadd.f32 %v5653, %v5693
    %v5695 = vpop.f32.mrb[0].mxu0
    %v5696 = vadd.f32 %v5655, %v5695
    %v5697 = vpop.f32.mrb[0].mxu0
    %v5698 = vpop.f32.mrb[0].mxu0
    %5699 = vdwg.mxu0
    %5700 = vmatprep.subr.bf16.mxu0 %v3882
    %5701 = vmatpush1.bf16.msra.mxu0 %v3881
    %5702 = vmatprep.subr.bf16.mxu0 %v3886
    %5703 = vmatpush1.bf16.msra.mxu0 %v3885
    %5704 = vmatprep.subr.bf16.mxu0 %v3890
    %5705 = vmatpush1.bf16.msra.mxu0 %v3889
    %5706 = vmatprep.subr.bf16.mxu0 %v3894
    %5707 = vmatpush1.bf16.msra.mxu0 %v3893
    %5708 = vmatprep.subr.bf16.mxu0 %v3898
    %5709 = vmatpush1.bf16.msra.mxu0 %v3897
    %5710 = vmatprep.subr.bf16.mxu0 %v3902
    %5711 = vmatpush1.bf16.msra.mxu0 %v3901
    %5712 = vmatprep.subr.bf16.mxu0 %v3906
    %5713 = vmatpush1.bf16.msra.mxu0 %v3905
    %5714 = vmatprep.subr.bf16.mxu0 %v3910
    %5715 = vmatpush1.bf16.msra.mxu0 %v3909
    %5716 = vmatprep.subr.bf16.mxu0 %v3914
    %5717 = vmatpush1.bf16.msra.mxu0 %v3913
    %5718 = vmatprep.subr.bf16.mxu0 %v3918
    %5719 = vmatpush1.bf16.msra.mxu0 %v3917
    %5720 = vmatprep.subr.bf16.mxu0 %v3922
    %5721 = vmatpush1.bf16.msra.mxu0 %v3921
    %5722 = vmatprep.subr.bf16.mxu0 %v3926
    %5723 = vmatpush1.bf16.msra.mxu0 %v3925
    %5724 = vmatprep.subr.bf16.mxu0 %v3930
    %5725 = vmatpush1.bf16.msra.mxu0 %v3929
    %5726 = vmatprep.subr.bf16.mxu0 %v3934
    %5727 = vmatpush1.bf16.msra.mxu0 %v3933
    %5728 = vmatprep.subr.bf16.mxu0 %v3938
    %5729 = vmatpush1.bf16.msra.mxu0 %v3937
    %5730 = vmatprep.subr.bf16.mxu0 %v3942
    %5731 = vmatpush1.bf16.msra.mxu0 %v3941
    %5732 = vmatprep.mubr.bf16.mxu0 %v970
    %5733 = vmatmul.mubr.bf16.gmra.mrb[0].mxu0 %v969
    %v5734 = vpop.f32.mrb[0].mxu0
    %v5735 = vadd.f32 %v5694, %v5734
    %v5736 = vpop.f32.mrb[0].mxu0
    %v5737 = vadd.f32 %v5696, %v5736
    %v5738 = vpop.f32.mrb[0].mxu0
    %v5739 = vpop.f32.mrb[0].mxu0
    %5740 = vdwg.mxu0
    %5741 = vmatprep.subr.bf16.mxu0 %v3946
    %5742 = vmatpush1.bf16.msra.mxu0 %v3945
    %5743 = vmatprep.subr.bf16.mxu0 %v3950
    %5744 = vmatpush1.bf16.msra.mxu0 %v3949
    %5745 = vmatprep.subr.bf16.mxu0 %v3954
    %5746 = vmatpush1.bf16.msra.mxu0 %v3953
    %5747 = vmatprep.subr.bf16.mxu0 %v3958
    %5748 = vmatpush1.bf16.msra.mxu0 %v3957
    %5749 = vmatprep.subr.bf16.mxu0 %v3962
    %5750 = vmatpush1.bf16.msra.mxu0 %v3961
    %5751 = vmatprep.subr.bf16.mxu0 %v3966
    %5752 = vmatpush1.bf16.msra.mxu0 %v3965
    %5753 = vmatprep.subr.bf16.mxu0 %v3970
    %5754 = vmatpush1.bf16.msra.mxu0 %v3969
    %5755 = vmatprep.subr.bf16.mxu0 %v3974
    %5756 = vmatpush1.bf16.msra.mxu0 %v3973
    %5757 = vmatprep.subr.bf16.mxu0 %v3978
    %5758 = vmatpush1.bf16.msra.mxu0 %v3977
    %5759 = vmatprep.subr.bf16.mxu0 %v3982
    %5760 = vmatpush1.bf16.msra.mxu0 %v3981
    %5761 = vmatprep.subr.bf16.mxu0 %v3986
    %5762 = vmatpush1.bf16.msra.mxu0 %v3985
    %5763 = vmatprep.subr.bf16.mxu0 %v3990
    %5764 = vmatpush1.bf16.msra.mxu0 %v3989
    %5765 = vmatprep.subr.bf16.mxu0 %v3994
    %5766 = vmatpush1.bf16.msra.mxu0 %v3993
    %5767 = vmatprep.subr.bf16.mxu0 %v3998
    %5768 = vmatpush1.bf16.msra.mxu0 %v3997
    %5769 = vmatprep.subr.bf16.mxu0 %v4002
    %5770 = vmatpush1.bf16.msra.mxu0 %v4001
    %5771 = vmatprep.subr.bf16.mxu0 %v4006
    %5772 = vmatpush1.bf16.msra.mxu0 %v4005
    %5773 = vmatprep.mubr.bf16.mxu0 %v972
    %5774 = vmatmul.mubr.bf16.gmra.mrb[0].mxu0 %v971
    %v5775 = vpop.f32.mrb[0].mxu0
    %v5776 = vadd.f32 %v5735, %v5775
    %v5777 = vpop.f32.mrb[0].mxu0
    %v5778 = vadd.f32 %v5737, %v5777
    %v5779 = vpop.f32.mrb[0].mxu0
    %v5780 = vpop.f32.mrb[0].mxu0
    %5781 = vdwg.mxu0
    %5782 = vmatprep.subr.bf16.mxu0 %v4010
    %5783 = vmatpush1.bf16.msra.mxu0 %v4009
    %5784 = vmatprep.subr.bf16.mxu0 %v4014
    %5785 = vmatpush1.bf16.msra.mxu0 %v4013
    %5786 = vmatprep.subr.bf16.mxu0 %v4018
    %5787 = vmatpush1.bf16.msra.mxu0 %v4017
    %5788 = vmatprep.subr.bf16.mxu0 %v4022
    %5789 = vmatpush1.bf16.msra.mxu0 %v4021
    %5790 = vmatprep.subr.bf16.mxu0 %v4026
    %5791 = vmatpush1.bf16.msra.mxu0 %v4025
    %5792 = vmatprep.subr.bf16.mxu0 %v4030
    %5793 = vmatpush1.bf16.msra.mxu0 %v4029
    %5794 = vmatprep.subr.bf16.mxu0 %v4034
    %5795 = vmatpush1.bf16.msra.mxu0 %v4033
    %5796 = vmatprep.subr.bf16.mxu0 %v4038
    %5797 = vmatpush1.bf16.msra.mxu0 %v4037
    %5798 = vmatprep.subr.bf16.mxu0 %v4042
    %5799 = vmatpush1.bf16.msra.mxu0 %v4041
    %5800 = vmatprep.subr.bf16.mxu0 %v4046
    %5801 = vmatpush1.bf16.msra.mxu0 %v4045
    %5802 = vmatprep.subr.bf16.mxu0 %v4050
    %5803 = vmatpush1.bf16.msra.mxu0 %v4049
    %5804 = vmatprep.subr.bf16.mxu0 %v4054
    %5805 = vmatpush1.bf16.msra.mxu0 %v4053
    %5806 = vmatprep.subr.bf16.mxu0 %v4058
    %5807 = vmatpush1.bf16.msra.mxu0 %v4057
    %5808 = vmatprep.subr.bf16.mxu0 %v4062
    %5809 = vmatpush1.bf16.msra.mxu0 %v4061
    %5810 = vmatprep.subr.bf16.mxu0 %v4066
    %5811 = vmatpush1.bf16.msra.mxu0 %v4065
    %5812 = vmatprep.subr.bf16.mxu0 %v4070
    %5813 = vmatpush1.bf16.msra.mxu0 %v4069
    %5814 = vmatprep.mubr.bf16.mxu0 %v974
    %5815 = vmatmul.mubr.bf16.gmra.mrb[0].mxu0 %v973
    %v5816 = vpop.f32.mrb[0].mxu0
    %v5817 = vadd.f32 %v5776, %v5816
    %v5818 = vpop.f32.mrb[0].mxu0
    %v5819 = vadd.f32 %v5778, %v5818
    %v5820 = vpop.f32.mrb[0].mxu0
    %v5821 = vpop.f32.mrb[0].mxu0
    %5822 = vdwg.mxu0
    %v5823 = vpack.c.bf16 %v5325, %v5325
    %v5824 = vpack.c.bf16 %v5327, %v5327
    %v5825 = vpack.c.bf16 %v5817, %v5817
    %v5826 = vpack.c.bf16 %v5819, %v5819
    %v5827 = vld [vmem:[#allocation6] sm:$0xff]
    %v5828 = vld [vmem:[#allocation6 + $0x8] sm:$0xff]
    %v5829 = vld [vmem:[#allocation6 + $0x10] sm:$0xff]
    %v5830 = vld [vmem:[#allocation6 + $0x18] sm:$0xff]
    %v5831 = vld [vmem:[#allocation6 + $0x20] sm:$0xff]
    %v5832 = vld [vmem:[#allocation6 + $0x28] sm:$0xff]
    %v5833 = vld [vmem:[#allocation6 + $0x30] sm:$0xff]
    %v5834 = vld [vmem:[#allocation6 + $0x38] sm:$0xff]
    %v5835 = vld [vmem:[#allocation6 + $0x40] sm:$0xff]
    %v5836 = vld [vmem:[#allocation6 + $0x48] sm:$0xff]
    %v5837 = vld [vmem:[#allocation6 + $0x50] sm:$0xff]
    %v5838 = vld [vmem:[#allocation6 + $0x58] sm:$0xff]
    %v5839 = vld [vmem:[#allocation6 + $0x60] sm:$0xff]
    %v5840 = vld [vmem:[#allocation6 + $0x68] sm:$0xff]
    %v5841 = vld [vmem:[#allocation6 + $0x70] sm:$0xff]
    %v5842 = vld [vmem:[#allocation6 + $0x78] sm:$0xff]
    %v5843 = vld [vmem:[#allocation6 + $0x80] sm:$0xff]
    %v5844 = vld [vmem:[#allocation6 + $0x88] sm:$0xff]
    %v5845 = vld [vmem:[#allocation6 + $0x90] sm:$0xff]
    %v5846 = vld [vmem:[#allocation6 + $0x98] sm:$0xff]
    %v5847 = vld [vmem:[#allocation6 + $0xa0] sm:$0xff]
    %v5848 = vld [vmem:[#allocation6 + $0xa8] sm:$0xff]
    %v5849 = vld [vmem:[#allocation6 + $0xb0] sm:$0xff]
    %v5850 = vld [vmem:[#allocation6 + $0xb8] sm:$0xff]
    %v5851 = vld [vmem:[#allocation6 + $0xc0] sm:$0xff]
    %v5852 = vld [vmem:[#allocation6 + $0xc8] sm:$0xff]
    %v5853 = vld [vmem:[#allocation6 + $0xd0] sm:$0xff]
    %v5854 = vld [vmem:[#allocation6 + $0xd8] sm:$0xff]
    %v5855 = vld [vmem:[#allocation6 + $0xe0] sm:$0xff]
    %v5856 = vld [vmem:[#allocation6 + $0xe8] sm:$0xff]
    %v5857 = vld [vmem:[#allocation6 + $0xf0] sm:$0xff]
    %v5858 = vld [vmem:[#allocation6 + $0xf8] sm:$0xff]
    %v5859 = vld [vmem:[#allocation6 + $0x100] sm:$0xff]
    %v5860 = vld [vmem:[#allocation6 + $0x108] sm:$0xff]
    %v5861 = vld [vmem:[#allocation6 + $0x110] sm:$0xff]
    %v5862 = vld [vmem:[#allocation6 + $0x118] sm:$0xff]
    %v5863 = vld [vmem:[#allocation6 + $0x120] sm:$0xff]
    %v5864 = vld [vmem:[#allocation6 + $0x128] sm:$0xff]
    %v5865 = vld [vmem:[#allocation6 + $0x130] sm:$0xff]
    %v5866 = vld [vmem:[#allocation6 + $0x138] sm:$0xff]
    %v5867 = vld [vmem:[#allocation6 + $0x140] sm:$0xff]
    %v5868 = vld [vmem:[#allocation6 + $0x148] sm:$0xff]
    %v5869 = vld [vmem:[#allocation6 + $0x150] sm:$0xff]
    %v5870 = vld [vmem:[#allocation6 + $0x158] sm:$0xff]
    %v5871 = vld [vmem:[#allocation6 + $0x160] sm:$0xff]
    %v5872 = vld [vmem:[#allocation6 + $0x168] sm:$0xff]
    %v5873 = vld [vmem:[#allocation6 + $0x170] sm:$0xff]
    %v5874 = vld [vmem:[#allocation6 + $0x178] sm:$0xff]
    %v5875 = vld [vmem:[#allocation6 + $0x180] sm:$0xff]
    %v5876 = vld [vmem:[#allocation6 + $0x188] sm:$0xff]
    %v5877 = vld [vmem:[#allocation6 + $0x190] sm:$0xff]
    %v5878 = vld [vmem:[#allocation6 + $0x198] sm:$0xff]
    %v5879 = vld [vmem:[#allocation6 + $0x1a0] sm:$0xff]
    %v5880 = vld [vmem:[#allocation6 + $0x1a8] sm:$0xff]
    %v5881 = vld [vmem:[#allocation6 + $0x1b0] sm:$0xff]
    %v5882 = vld [vmem:[#allocation6 + $0x1b8] sm:$0xff]
    %v5883 = vld [vmem:[#allocation6 + $0x1c0] sm:$0xff]
    %v5884 = vld [vmem:[#allocation6 + $0x1c8] sm:$0xff]
    %v5885 = vld [vmem:[#allocation6 + $0x1d0] sm:$0xff]
    %v5886 = vld [vmem:[#allocation6 + $0x1d8] sm:$0xff]
    %v5887 = vld [vmem:[#allocation6 + $0x1e0] sm:$0xff]
    %v5888 = vld [vmem:[#allocation6 + $0x1e8] sm:$0xff]
    %v5889 = vld [vmem:[#allocation6 + $0x1f0] sm:$0xff]
    %v5890 = vld [vmem:[#allocation6 + $0x1f8] sm:$0xff]
    %v5891 = vld [vmem:[#allocation7] sm:$0x3]
    %v5893 = vlaneseq
    %v5894 = vshrl.u32 %v5893, 7
    %v5895 = vsub.s32 0, %v5894
    %v5896 = vrot.slane %v5891, %v5895
    %v5897 = vlaneseq
    %v5898 = vshrl.u32 %v5897, 7
    %v5899 = vsub.s32 1, %v5898
    %v5900 = vrot.slane %v5891, %v5899
    %v5967 = vunpack.c.l.b16 %v5827
    %v5968 = vunpack.c.h.b16 %v5827
    %v5969 = vunpack.c.l.b16 %v5828
    %v5970 = vunpack.c.h.b16 %v5828
    %v5971 = vunpack.c.l.b16 %v5829
    %v5972 = vunpack.c.h.b16 %v5829
    %v5973 = vunpack.c.l.b16 %v5830
    %v5974 = vunpack.c.h.b16 %v5830
    %v5975 = vunpack.c.l.b16 %v5831
    %v5976 = vunpack.c.h.b16 %v5831
    %v5977 = vunpack.c.l.b16 %v5832
    %v5978 = vunpack.c.h.b16 %v5832
    %v5979 = vunpack.c.l.b16 %v5833
    %v5980 = vunpack.c.h.b16 %v5833
    %v5981 = vunpack.c.l.b16 %v5834
    %v5982 = vunpack.c.h.b16 %v5834
    %v5983 = vunpack.c.l.b16 %v5835
    %v5984 = vunpack.c.h.b16 %v5835
    %v5985 = vunpack.c.l.b16 %v5836
    %v5986 = vunpack.c.h.b16 %v5836
    %v5987 = vunpack.c.l.b16 %v5837
    %v5988 = vunpack.c.h.b16 %v5837
    %v5989 = vunpack.c.l.b16 %v5838
    %v5990 = vunpack.c.h.b16 %v5838
    %v5991 = vunpack.c.l.b16 %v5839
    %v5992 = vunpack.c.h.b16 %v5839
    %v5993 = vunpack.c.l.b16 %v5840
    %v5994 = vunpack.c.h.b16 %v5840
    %v5995 = vunpack.c.l.b16 %v5841
    %v5996 = vunpack.c.h.b16 %v5841
    %v5997 = vunpack.c.l.b16 %v5842
    %v5998 = vunpack.c.h.b16 %v5842
    %v5999 = vunpack.c.l.b16 %v5843
    %v6000 = vunpack.c.h.b16 %v5843
    %v6001 = vunpack.c.l.b16 %v5844
    %v6002 = vunpack.c.h.b16 %v5844
    %v6003 = vunpack.c.l.b16 %v5845
    %v6004 = vunpack.c.h.b16 %v5845
    %v6005 = vunpack.c.l.b16 %v5846
    %v6006 = vunpack.c.h.b16 %v5846
    %v6007 = vunpack.c.l.b16 %v5847
    %v6008 = vunpack.c.h.b16 %v5847
    %v6009 = vunpack.c.l.b16 %v5848
    %v6010 = vunpack.c.h.b16 %v5848
    %v6011 = vunpack.c.l.b16 %v5849
    %v6012 = vunpack.c.h.b16 %v5849
    %v6013 = vunpack.c.l.b16 %v5850
    %v6014 = vunpack.c.h.b16 %v5850
    %v6015 = vunpack.c.l.b16 %v5851
    %v6016 = vunpack.c.h.b16 %v5851
    %v6017 = vunpack.c.l.b16 %v5852
    %v6018 = vunpack.c.h.b16 %v5852
    %v6019 = vunpack.c.l.b16 %v5853
    %v6020 = vunpack.c.h.b16 %v5853
    %v6021 = vunpack.c.l.b16 %v5854
    %v6022 = vunpack.c.h.b16 %v5854
    %v6023 = vunpack.c.l.b16 %v5855
    %v6024 = vunpack.c.h.b16 %v5855
    %v6025 = vunpack.c.l.b16 %v5856
    %v6026 = vunpack.c.h.b16 %v5856
    %v6027 = vunpack.c.l.b16 %v5857
    %v6028 = vunpack.c.h.b16 %v5857
    %v6029 = vunpack.c.l.b16 %v5858
    %v6030 = vunpack.c.h.b16 %v5858
    %v6031 = vunpack.c.l.b16 %v5859
    %v6032 = vunpack.c.h.b16 %v5859
    %v6033 = vunpack.c.l.b16 %v5860
    %v6034 = vunpack.c.h.b16 %v5860
    %v6035 = vunpack.c.l.b16 %v5861
    %v6036 = vunpack.c.h.b16 %v5861
    %v6037 = vunpack.c.l.b16 %v5862
    %v6038 = vunpack.c.h.b16 %v5862
    %v6039 = vunpack.c.l.b16 %v5863
    %v6040 = vunpack.c.h.b16 %v5863
    %v6041 = vunpack.c.l.b16 %v5864
    %v6042 = vunpack.c.h.b16 %v5864
    %v6043 = vunpack.c.l.b16 %v5865
    %v6044 = vunpack.c.h.b16 %v5865
    %v6045 = vunpack.c.l.b16 %v5866
    %v6046 = vunpack.c.h.b16 %v5866
    %v6047 = vunpack.c.l.b16 %v5867
    %v6048 = vunpack.c.h.b16 %v5867
    %v6049 = vunpack.c.l.b16 %v5868
    %v6050 = vunpack.c.h.b16 %v5868
    %v6051 = vunpack.c.l.b16 %v5869
    %v6052 = vunpack.c.h.b16 %v5869
    %v6053 = vunpack.c.l.b16 %v5870
    %v6054 = vunpack.c.h.b16 %v5870
    %v6055 = vunpack.c.l.b16 %v5871
    %v6056 = vunpack.c.h.b16 %v5871
    %v6057 = vunpack.c.l.b16 %v5872
    %v6058 = vunpack.c.h.b16 %v5872
    %v6059 = vunpack.c.l.b16 %v5873
    %v6060 = vunpack.c.h.b16 %v5873
    %v6061 = vunpack.c.l.b16 %v5874
    %v6062 = vunpack.c.h.b16 %v5874
    %v6063 = vunpack.c.l.b16 %v5875
    %v6064 = vunpack.c.h.b16 %v5875
    %v6065 = vunpack.c.l.b16 %v5876
    %v6066 = vunpack.c.h.b16 %v5876
    %v6067 = vunpack.c.l.b16 %v5877
    %v6068 = vunpack.c.h.b16 %v5877
    %v6069 = vunpack.c.l.b16 %v5878
    %v6070 = vunpack.c.h.b16 %v5878
    %v6071 = vunpack.c.l.b16 %v5879
    %v6072 = vunpack.c.h.b16 %v5879
    %v6073 = vunpack.c.l.b16 %v5880
    %v6074 = vunpack.c.h.b16 %v5880
    %v6075 = vunpack.c.l.b16 %v5881
    %v6076 = vunpack.c.h.b16 %v5881
    %v6077 = vunpack.c.l.b16 %v5882
    %v6078 = vunpack.c.h.b16 %v5882
    %v6079 = vunpack.c.l.b16 %v5883
    %v6080 = vunpack.c.h.b16 %v5883
    %v6081 = vunpack.c.l.b16 %v5884
    %v6082 = vunpack.c.h.b16 %v5884
    %v6083 = vunpack.c.l.b16 %v5885
    %v6084 = vunpack.c.h.b16 %v5885
    %v6085 = vunpack.c.l.b16 %v5886
    %v6086 = vunpack.c.h.b16 %v5886
    %v6087 = vunpack.c.l.b16 %v5887
    %v6088 = vunpack.c.h.b16 %v5887
    %v6089 = vunpack.c.l.b16 %v5888
    %v6090 = vunpack.c.h.b16 %v5888
    %v6091 = vunpack.c.l.b16 %v5889
    %v6092 = vunpack.c.h.b16 %v5889
    %v6093 = vunpack.c.l.b16 %v5890
    %v6094 = vunpack.c.h.b16 %v5890
    %v6095 = vpack.c.b16 %v5969, %v5967
    %v6096 = vpack.c.b16 %v5970, %v5968
    %v6097 = vpack.c.b16 %v5973, %v5971
    %v6098 = vpack.c.b16 %v5974, %v5972
    %v6099 = vpack.c.b16 %v5977, %v5975
    %v6100 = vpack.c.b16 %v5978, %v5976
    %v6101 = vpack.c.b16 %v5981, %v5979
    %v6102 = vpack.c.b16 %v5982, %v5980
    %v6103 = vpack.c.b16 %v5985, %v5983
    %v6104 = vpack.c.b16 %v5986, %v5984
    %v6105 = vpack.c.b16 %v5989, %v5987
    %v6106 = vpack.c.b16 %v5990, %v5988
    %v6107 = vpack.c.b16 %v5993, %v5991
    %v6108 = vpack.c.b16 %v5994, %v5992
    %v6109 = vpack.c.b16 %v5997, %v5995
    %v6110 = vpack.c.b16 %v5998, %v5996
    %v6111 = vpack.c.b16 %v6001, %v5999
    %v6112 = vpack.c.b16 %v6002, %v6000
    %v6113 = vpack.c.b16 %v6005, %v6003
    %v6114 = vpack.c.b16 %v6006, %v6004
    %v6115 = vpack.c.b16 %v6009, %v6007
    %v6116 = vpack.c.b16 %v6010, %v6008
    %v6117 = vpack.c.b16 %v6013, %v6011
    %v6118 = vpack.c.b16 %v6014, %v6012
    %v6119 = vpack.c.b16 %v6017, %v6015
    %v6120 = vpack.c.b16 %v6018, %v6016
    %v6121 = vpack.c.b16 %v6021, %v6019
    %v6122 = vpack.c.b16 %v6022, %v6020
    %v6123 = vpack.c.b16 %v6025, %v6023
    %v6124 = vpack.c.b16 %v6026, %v6024
    %v6125 = vpack.c.b16 %v6029, %v6027
    %v6126 = vpack.c.b16 %v6030, %v6028
    %v6127 = vpack.c.b16 %v6033, %v6031
    %v6128 = vpack.c.b16 %v6034, %v6032
    %v6129 = vpack.c.b16 %v6037, %v6035
    %v6130 = vpack.c.b16 %v6038, %v6036
    %v6131 = vpack.c.b16 %v6041, %v6039
    %v6132 = vpack.c.b16 %v6042, %v6040
    %v6133 = vpack.c.b16 %v6045, %v6043
    %v6134 = vpack.c.b16 %v6046, %v6044
    %v6135 = vpack.c.b16 %v6049, %v6047
    %v6136 = vpack.c.b16 %v6050, %v6048
    %v6137 = vpack.c.b16 %v6053, %v6051
    %v6138 = vpack.c.b16 %v6054, %v6052
    %v6139 = vpack.c.b16 %v6057, %v6055
    %v6140 = vpack.c.b16 %v6058, %v6056
    %v6141 = vpack.c.b16 %v6061, %v6059
    %v6142 = vpack.c.b16 %v6062, %v6060
    %v6143 = vpack.c.b16 %v6065, %v6063
    %v6144 = vpack.c.b16 %v6066, %v6064
    %v6145 = vpack.c.b16 %v6069, %v6067
    %v6146 = vpack.c.b16 %v6070, %v6068
    %v6147 = vpack.c.b16 %v6073, %v6071
    %v6148 = vpack.c.b16 %v6074, %v6072
    %v6149 = vpack.c.b16 %v6077, %v6075
    %v6150 = vpack.c.b16 %v6078, %v6076
    %v6151 = vpack.c.b16 %v6081, %v6079
    %v6152 = vpack.c.b16 %v6082, %v6080
    %v6153 = vpack.c.b16 %v6085, %v6083
    %v6154 = vpack.c.b16 %v6086, %v6084
    %v6155 = vpack.c.b16 %v6089, %v6087
    %v6156 = vpack.c.b16 %v6090, %v6088
    %v6157 = vpack.c.b16 %v6093, %v6091
    %v6158 = vpack.c.b16 %v6094, %v6092
    %6223 = vmatprep.subr.bf16.mxu0 %v6096
    %6224 = vmatpush1.bf16.msra.mxu0 %v6095
    %6225 = vmatprep.subr.bf16.mxu0 %v6098
    %6226 = vmatpush1.bf16.msra.mxu0 %v6097
    %6227 = vmatprep.subr.bf16.mxu0 %v6100
    %6228 = vmatpush1.bf16.msra.mxu0 %v6099
    %6229 = vmatprep.subr.bf16.mxu0 %v6102
    %6230 = vmatpush1.bf16.msra.mxu0 %v6101
    %6231 = vmatprep.subr.bf16.mxu0 %v6104
    %6232 = vmatpush1.bf16.msra.mxu0 %v6103
    %6233 = vmatprep.subr.bf16.mxu0 %v6106
    %6234 = vmatpush1.bf16.msra.mxu0 %v6105
    %6235 = vmatprep.subr.bf16.mxu0 %v6108
    %6236 = vmatpush1.bf16.msra.mxu0 %v6107
    %6237 = vmatprep.subr.bf16.mxu0 %v6110
    %6238 = vmatpush1.bf16.msra.mxu0 %v6109
    %6239 = vmatprep.subr.bf16.mxu0 %v6112
    %6240 = vmatpush1.bf16.msra.mxu0 %v6111
    %6241 = vmatprep.subr.bf16.mxu0 %v6114
    %6242 = vmatpush1.bf16.msra.mxu0 %v6113
    %6243 = vmatprep.subr.bf16.mxu0 %v6116
    %6244 = vmatpush1.bf16.msra.mxu0 %v6115
    %6245 = vmatprep.subr.bf16.mxu0 %v6118
    %6246 = vmatpush1.bf16.msra.mxu0 %v6117
    %6247 = vmatprep.subr.bf16.mxu0 %v6120
    %6248 = vmatpush1.bf16.msra.mxu0 %v6119
    %6249 = vmatprep.subr.bf16.mxu0 %v6122
    %6250 = vmatpush1.bf16.msra.mxu0 %v6121
    %6251 = vmatprep.subr.bf16.mxu0 %v6124
    %6252 = vmatpush1.bf16.msra.mxu0 %v6123
    %6253 = vmatprep.subr.bf16.mxu0 %v6126
    %6254 = vmatpush1.bf16.msra.mxu0 %v6125
    %6255 = vmatprep.mubr.bf16.mxu0 %v5824
    %6256 = vmatmul.mubr.bf16.gmra.mrb[0].mxu0 %v5823
    %v6257 = vpop.f32.mrb[0].mxu0
    %v6258 = vadd.f32 %v5896, %v6257
    %v6259 = vpop.f32.mrb[0].mxu0
    %v6260 = vadd.f32 %v5900, %v6259
    %v6261 = vpop.f32.mrb[0].mxu0
    %v6262 = vpop.f32.mrb[0].mxu0
    %6263 = vdwg.mxu0
    %6264 = vmatprep.subr.bf16.mxu0 %v6128
    %6265 = vmatpush1.bf16.msra.mxu0 %v6127
    %6266 = vmatprep.subr.bf16.mxu0 %v6130
    %6267 = vmatpush1.bf16.msra.mxu0 %v6129
    %6268 = vmatprep.subr.bf16.mxu0 %v6132
    %6269 = vmatpush1.bf16.msra.mxu0 %v6131
    %6270 = vmatprep.subr.bf16.mxu0 %v6134
    %6271 = vmatpush1.bf16.msra.mxu0 %v6133
    %6272 = vmatprep.subr.bf16.mxu0 %v6136
    %6273 = vmatpush1.bf16.msra.mxu0 %v6135
    %6274 = vmatprep.subr.bf16.mxu0 %v6138
    %6275 = vmatpush1.bf16.msra.mxu0 %v6137
    %6276 = vmatprep.subr.bf16.mxu0 %v6140
    %6277 = vmatpush1.bf16.msra.mxu0 %v6139
    %6278 = vmatprep.subr.bf16.mxu0 %v6142
    %6279 = vmatpush1.bf16.msra.mxu0 %v6141
    %6280 = vmatprep.subr.bf16.mxu0 %v6144
    %6281 = vmatpush1.bf16.msra.mxu0 %v6143
    %6282 = vmatprep.subr.bf16.mxu0 %v6146
    %6283 = vmatpush1.bf16.msra.mxu0 %v6145
    %6284 = vmatprep.subr.bf16.mxu0 %v6148
    %6285 = vmatpush1.bf16.msra.mxu0 %v6147
    %6286 = vmatprep.subr.bf16.mxu0 %v6150
    %6287 = vmatpush1.bf16.msra.mxu0 %v6149
    %6288 = vmatprep.subr.bf16.mxu0 %v6152
    %6289 = vmatpush1.bf16.msra.mxu0 %v6151
    %6290 = vmatprep.subr.bf16.mxu0 %v6154
    %6291 = vmatpush1.bf16.msra.mxu0 %v6153
    %6292 = vmatprep.subr.bf16.mxu0 %v6156
    %6293 = vmatpush1.bf16.msra.mxu0 %v6155
    %6294 = vmatprep.subr.bf16.mxu0 %v6158
    %6295 = vmatpush1.bf16.msra.mxu0 %v6157
    %6296 = vmatprep.mubr.bf16.mxu0 %v5826
    %6297 = vmatmul.mubr.bf16.gmra.mrb[0].mxu0 %v5825
    %v6298 = vpop.f32.mrb[0].mxu0
    %v6299 = vadd.f32 %v6258, %v6298
    %v6300 = vpop.f32.mrb[0].mxu0
    %v6301 = vadd.f32 %v6260, %v6300
    %v6302 = vpop.f32.mrb[0].mxu0
    %v6303 = vpop.f32.mrb[0].mxu0
    %6304 = vdwg.mxu0
    %v6305 = vpack.c.bf16 %v6299, %v6299
    %v6306 = vpack.c.bf16 %v6301, %v6301
    %v6307 = vld [vmem:[%s4] sm:$0xf]
    %v6308 = vld [vmem:[%s4 + $0x4] sm:$0xf]
    %v6309 = vld [vmem:[%s4 + $0x8] sm:$0xf]
    %v6310 = vld [vmem:[%s4 + $0xc] sm:$0xf]
    %v6311 = vld [vmem:[%s4 + $0x10] sm:$0xf]
    %v6312 = vld [vmem:[%s4 + $0x14] sm:$0xf]
    %v6313 = vld [vmem:[%s4 + $0x18] sm:$0xf]
    %v6314 = vld [vmem:[%s4 + $0x1c] sm:$0xf]
    %v6315 = vld [vmem:[%s4 + $0x20] sm:$0xf]
    %v6316 = vld [vmem:[%s4 + $0x24] sm:$0xf]
    %v6317 = vld [vmem:[%s4 + $0x28] sm:$0xf]
    %v6318 = vld [vmem:[%s4 + $0x2c] sm:$0xf]
    %v6319 = vld [vmem:[%s4 + $0x30] sm:$0xf]
    %v6320 = vld [vmem:[%s4 + $0x34] sm:$0xf]
    %v6321 = vld [vmem:[%s4 + $0x38] sm:$0xf]
    %v6322 = vld [vmem:[%s4 + $0x3c] sm:$0xf]
    %v6323 = vld [vmem:[%s4 + $0x40] sm:$0xf]
    %v6324 = vld [vmem:[%s4 + $0x44] sm:$0xf]
    %v6325 = vld [vmem:[%s4 + $0x48] sm:$0xf]
    %v6326 = vld [vmem:[%s4 + $0x4c] sm:$0xf]
    %v6327 = vld [vmem:[%s4 + $0x50] sm:$0xf]
    %v6328 = vld [vmem:[%s4 + $0x54] sm:$0xf]
    %v6329 = vld [vmem:[%s4 + $0x58] sm:$0xf]
    %v6330 = vld [vmem:[%s4 + $0x5c] sm:$0xf]
    %v6331 = vld [vmem:[%s4 + $0x60] sm:$0xf]
    %v6332 = vld [vmem:[%s4 + $0x64] sm:$0xf]
    %v6333 = vld [vmem:[%s4 + $0x68] sm:$0xf]
    %v6334 = vld [vmem:[%s4 + $0x6c] sm:$0xf]
    %v6335 = vld [vmem:[%s4 + $0x70] sm:$0xf]
    %v6336 = vld [vmem:[%s4 + $0x74] sm:$0xf]
    %v6337 = vld [vmem:[%s4 + $0x78] sm:$0xf]
    %v6338 = vld [vmem:[%s4 + $0x7c] sm:$0xf]
    %v6339 = vld [vmem:[#allocation9] sm:$0x1]
    %v6341 = vlaneseq
    %v6342 = vshrl.u32 %v6341, 7
    %v6343 = vsub.s32 0, %v6342
    %v6344 = vrot.slane %v6339, %v6343
    %v6378 = vunpack.c.l.b16 %v6307
    %v6379 = vunpack.c.l.b16 %v6308
    %v6380 = vunpack.c.l.b16 %v6309
    %v6381 = vunpack.c.l.b16 %v6310
    %v6382 = vunpack.c.l.b16 %v6311
    %v6383 = vunpack.c.l.b16 %v6312
    %v6384 = vunpack.c.l.b16 %v6313
    %v6385 = vunpack.c.l.b16 %v6314
    %v6386 = vunpack.c.l.b16 %v6315
    %v6387 = vunpack.c.l.b16 %v6316
    %v6388 = vunpack.c.l.b16 %v6317
    %v6389 = vunpack.c.l.b16 %v6318
    %v6390 = vunpack.c.l.b16 %v6319
    %v6391 = vunpack.c.l.b16 %v6320
    %v6392 = vunpack.c.l.b16 %v6321
    %v6393 = vunpack.c.l.b16 %v6322
    %v6394 = vunpack.c.l.b16 %v6323
    %v6395 = vunpack.c.l.b16 %v6324
    %v6396 = vunpack.c.l.b16 %v6325
    %v6397 = vunpack.c.l.b16 %v6326
    %v6398 = vunpack.c.l.b16 %v6327
    %v6399 = vunpack.c.l.b16 %v6328
    %v6400 = vunpack.c.l.b16 %v6329
    %v6401 = vunpack.c.l.b16 %v6330
    %v6402 = vunpack.c.l.b16 %v6331
    %v6403 = vunpack.c.l.b16 %v6332
    %v6404 = vunpack.c.l.b16 %v6333
    %v6405 = vunpack.c.l.b16 %v6334
    %v6406 = vunpack.c.l.b16 %v6335
    %v6407 = vunpack.c.l.b16 %v6336
    %v6408 = vunpack.c.l.b16 %v6337
    %v6409 = vunpack.c.l.b16 %v6338
    %v6410 = vpack.c.b16 %v6379, %v6378
    %v6411 = vpack.c.b16 %v6381, %v6380
    %v6412 = vpack.c.b16 %v6383, %v6382
    %v6413 = vpack.c.b16 %v6385, %v6384
    %v6414 = vpack.c.b16 %v6387, %v6386
    %v6415 = vpack.c.b16 %v6389, %v6388
    %v6416 = vpack.c.b16 %v6391, %v6390
    %v6417 = vpack.c.b16 %v6393, %v6392
    %v6418 = vpack.c.b16 %v6395, %v6394
    %v6419 = vpack.c.b16 %v6397, %v6396
    %v6420 = vpack.c.b16 %v6399, %v6398
    %v6421 = vpack.c.b16 %v6401, %v6400
    %v6422 = vpack.c.b16 %v6403, %v6402
    %v6423 = vpack.c.b16 %v6405, %v6404
    %v6424 = vpack.c.b16 %v6407, %v6406
    %v6425 = vpack.c.b16 %v6409, %v6408
    %6442 = vmatprep.subr.bf16.mxu0 0
    %6443 = vmatpush1.bf16.msra.mxu0 %v6410
    %6444 = vmatprep.subr.bf16.mxu0 0
    %6445 = vmatpush1.bf16.msra.mxu0 %v6411
    %6446 = vmatprep.subr.bf16.mxu0 0
    %6447 = vmatpush1.bf16.msra.mxu0 %v6412
    %6448 = vmatprep.subr.bf16.mxu0 0
    %6449 = vmatpush1.bf16.msra.mxu0 %v6413
    %6450 = vmatprep.subr.bf16.mxu0 0
    %6451 = vmatpush1.bf16.msra.mxu0 %v6414
    %6452 = vmatprep.subr.bf16.mxu0 0
    %6453 = vmatpush1.bf16.msra.mxu0 %v6415
    %6454 = vmatprep.subr.bf16.mxu0 0
    %6455 = vmatpush1.bf16.msra.mxu0 %v6416
    %6456 = vmatprep.subr.bf16.mxu0 0
    %6457 = vmatpush1.bf16.msra.mxu0 %v6417
    %6458 = vmatprep.subr.bf16.mxu0 0
    %6459 = vmatpush1.bf16.msra.mxu0 %v6418
    %6460 = vmatprep.subr.bf16.mxu0 0
    %6461 = vmatpush1.bf16.msra.mxu0 %v6419
    %6462 = vmatprep.subr.bf16.mxu0 0
    %6463 = vmatpush1.bf16.msra.mxu0 %v6420
    %6464 = vmatprep.subr.bf16.mxu0 0
    %6465 = vmatpush1.bf16.msra.mxu0 %v6421
    %6466 = vmatprep.subr.bf16.mxu0 0
    %6467 = vmatpush1.bf16.msra.mxu0 %v6422
    %6468 = vmatprep.subr.bf16.mxu0 0
    %6469 = vmatpush1.bf16.msra.mxu0 %v6423
    %6470 = vmatprep.subr.bf16.mxu0 0
    %6471 = vmatpush1.bf16.msra.mxu0 %v6424
    %6472 = vmatprep.subr.bf16.mxu0 0
    %6473 = vmatpush1.bf16.msra.mxu0 %v6425
    %6474 = vmatprep.mubr.bf16.mxu0 %v6306
    %6475 = vmatmul.mubr.bf16.gmra.mrb[0].mxu0 %v6305
    %v6476 = vpop.f32.mrb[0].mxu0
    %v6477 = vadd.f32 %v6344, %v6476
    %v6478 = vpop.f32.mrb[0].mxu0
    %v6479 = vpop.f32.mrb[0].mxu0
    %v6480 = vpop.f32.mrb[0].mxu0
    %6481 = vdwg.mxu0
    %v6482 = vmax.f32 %v6477, 0.0
    %v6483 = vpack.c.bf16 %v6482, %v6482
    %v6484 = vld [vmem:[#allocation10] sm:$0xff]
    %v6485 = vld [vmem:[#allocation10 + $0x8] sm:$0xff]
    %v6486 = vld [vmem:[#allocation12] sm:$0x3]
    %v6488 = vlaneseq
    %v6489 = vshrl.u32 %v6488, 7
    %v6490 = vsub.s32 0, %v6489
    %v6491 = vrot.slane %v6486, %v6490
    %v6492 = vlaneseq
    %v6493 = vshrl.u32 %v6492, 7
    %v6494 = vsub.s32 1, %v6493
    %v6495 = vrot.slane %v6486, %v6494
    %v6500 = vunpack.c.l.b16 %v6484
    %v6501 = vunpack.c.h.b16 %v6484
    %v6502 = vunpack.c.l.b16 %v6485
    %v6503 = vunpack.c.h.b16 %v6485
    %v6504 = vpack.c.b16 %v6502, %v6500
    %v6505 = vpack.c.b16 %v6503, %v6501
    %vm6508 = vcmask 130048
    %v6510 = vsel %vm6508, %v6483, 0
    %6512 = vmatprep.subr.bf16.mxu0 %v6505
    %6513 = vmatpush1.bf16.msra.mxu0 %v6504
    %6514 = vmatprep.subr.bf16.mxu0 0
    %6515 = vmatpush1.bf16.msra.mxu0 0
    %6516 = vmatprep.subr.bf16.mxu0 0
    %6517 = vmatpush1.bf16.msra.mxu0 0
    %6518 = vmatprep.subr.bf16.mxu0 0
    %6519 = vmatpush1.bf16.msra.mxu0 0
    %6520 = vmatprep.subr.bf16.mxu0 0
    %6521 = vmatpush1.bf16.msra.mxu0 0
    %6522 = vmatprep.subr.bf16.mxu0 0
    %6523 = vmatpush1.bf16.msra.mxu0 0
    %6524 = vmatprep.subr.bf16.mxu0 0
    %6525 = vmatpush1.bf16.msra.mxu0 0
    %6526 = vmatprep.subr.bf16.mxu0 0
    %6527 = vmatpush1.bf16.msra.mxu0 0
    %6528 = vmatprep.subr.bf16.mxu0 0
    %6529 = vmatpush1.bf16.msra.mxu0 0
    %6530 = vmatprep.subr.bf16.mxu0 0
    %6531 = vmatpush1.bf16.msra.mxu0 0
    %6532 = vmatprep.subr.bf16.mxu0 0
    %6533 = vmatpush1.bf16.msra.mxu0 0
    %6534 = vmatprep.subr.bf16.mxu0 0
    %6535 = vmatpush1.bf16.msra.mxu0 0
    %6536 = vmatprep.subr.bf16.mxu0 0
    %6537 = vmatpush1.bf16.msra.mxu0 0
    %6538 = vmatprep.subr.bf16.mxu0 0
    %6539 = vmatpush1.bf16.msra.mxu0 0
    %6540 = vmatprep.subr.bf16.mxu0 0
    %6541 = vmatpush1.bf16.msra.mxu0 0
    %6542 = vmatprep.subr.bf16.mxu0 0
    %6543 = vmatpush1.bf16.msra.mxu0 0
    %6544 = vmatprep.mubr.bf16.mxu0 0
    %6545 = vmatmul.mubr.bf16.gmra.mrb[0].mxu0 %v6510
    %v6546 = vpop.f32.mrb[0].mxu0
    %v6547 = vadd.f32 %v6491, %v6546
    %v6548 = vpop.f32.mrb[0].mxu0
    %v6549 = vadd.f32 %v6495, %v6548
    %v6550 = vpop.f32.mrb[0].mxu0
    %v6551 = vpop.f32.mrb[0].mxu0
    %6552 = vdwg.mxu0
    %v6553 = vxor.u32 %v6547, 2147483648
    %v6554 = vxor.u32 %v6549, 2147483648
    %v6555 = vmul.f32 %v6553, 1.442695
    %v6556 = vpow.pop %v6555
    %v6557 = vmul.f32 %v6554, 1.442695
    %v6558 = vpow.pop %v6557
    %v6559 = vadd.f32 %v6556, 1.0
    %v6560 = vadd.f32 %v6558, 1.0
    %v6561 = vrcp.pop %v6559
    %v6562 = vmul.f32 1.0, %v6561
    %v6563 = vrcp.pop %v6560
    %v6564 = vmul.f32 1.0, %v6563
    %v6565 = vmul.f32 %v6299, %v6562
    %v6566 = vmul.f32 %v6301, %v6564
    %v6567 = vmax.f32 %v6565, 0.0
    %v6568 = vmax.f32 %v6566, 0.0
    %v6569 = vpack.c.bf16 %v6567, %v6567
    %v6570 = vpack.c.bf16 %v6568, %v6568
    %v6571 = vld [vmem:[%s8] sm:$0xf]
    %v6572 = vld [vmem:[%s8 + $0x4] sm:$0xf]
    %v6573 = vld [vmem:[%s8 + $0x8] sm:$0xf]
    %v6574 = vld [vmem:[%s8 + $0xc] sm:$0xf]
    %v6575 = vld [vmem:[%s8 + $0x10] sm:$0xf]
    %v6576 = vld [vmem:[%s8 + $0x14] sm:$0xf]
    %v6577 = vld [vmem:[%s8 + $0x18] sm:$0xf]
    %v6578 = vld [vmem:[%s8 + $0x1c] sm:$0xf]
    %v6579 = vld [vmem:[%s8 + $0x20] sm:$0xf]
    %v6580 = vld [vmem:[%s8 + $0x24] sm:$0xf]
    %v6581 = vld [vmem:[%s8 + $0x28] sm:$0xf]
    %v6582 = vld [vmem:[%s8 + $0x2c] sm:$0xf]
    %v6583 = vld [vmem:[%s8 + $0x30] sm:$0xf]
    %v6584 = vld [vmem:[%s8 + $0x34] sm:$0xf]
    %v6585 = vld [vmem:[%s8 + $0x38] sm:$0xf]
    %v6586 = vld [vmem:[%s8 + $0x3c] sm:$0xf]
    %v6587 = vld [vmem:[%s8 + $0x40] sm:$0xf]
    %v6588 = vld [vmem:[%s8 + $0x44] sm:$0xf]
    %v6589 = vld [vmem:[%s8 + $0x48] sm:$0xf]
    %v6590 = vld [vmem:[%s8 + $0x4c] sm:$0xf]
    %v6591 = vld [vmem:[%s8 + $0x50] sm:$0xf]
    %v6592 = vld [vmem:[%s8 + $0x54] sm:$0xf]
    %v6593 = vld [vmem:[%s8 + $0x58] sm:$0xf]
    %v6594 = vld [vmem:[%s8 + $0x5c] sm:$0xf]
    %v6595 = vld [vmem:[%s8 + $0x60] sm:$0xf]
    %v6596 = vld [vmem:[%s8 + $0x64] sm:$0xf]
    %v6597 = vld [vmem:[%s8 + $0x68] sm:$0xf]
    %v6598 = vld [vmem:[%s8 + $0x6c] sm:$0xf]
    %v6599 = vld [vmem:[%s8 + $0x70] sm:$0xf]
    %v6600 = vld [vmem:[%s8 + $0x74] sm:$0xf]
    %v6601 = vld [vmem:[%s8 + $0x78] sm:$0xf]
    %v6602 = vld [vmem:[%s8 + $0x7c] sm:$0xf]
    %v6603 = vld [vmem:[#allocation13] sm:$0x1]
    %v6605 = vlaneseq
    %v6606 = vshrl.u32 %v6605, 7
    %v6607 = vsub.s32 0, %v6606
    %v6608 = vrot.slane %v6603, %v6607
    %v6642 = vunpack.c.l.b16 %v6571
    %v6643 = vunpack.c.l.b16 %v6572
    %v6644 = vunpack.c.l.b16 %v6573
    %v6645 = vunpack.c.l.b16 %v6574
    %v6646 = vunpack.c.l.b16 %v6575
    %v6647 = vunpack.c.l.b16 %v6576
    %v6648 = vunpack.c.l.b16 %v6577
    %v6649 = vunpack.c.l.b16 %v6578
    %v6650 = vunpack.c.l.b16 %v6579
    %v6651 = vunpack.c.l.b16 %v6580
    %v6652 = vunpack.c.l.b16 %v6581
    %v6653 = vunpack.c.l.b16 %v6582
    %v6654 = vunpack.c.l.b16 %v6583
    %v6655 = vunpack.c.l.b16 %v6584
    %v6656 = vunpack.c.l.b16 %v6585
    %v6657 = vunpack.c.l.b16 %v6586
    %v6658 = vunpack.c.l.b16 %v6587
    %v6659 = vunpack.c.l.b16 %v6588
    %v6660 = vunpack.c.l.b16 %v6589
    %v6661 = vunpack.c.l.b16 %v6590
    %v6662 = vunpack.c.l.b16 %v6591
    %v6663 = vunpack.c.l.b16 %v6592
    %v6664 = vunpack.c.l.b16 %v6593
    %v6665 = vunpack.c.l.b16 %v6594
    %v6666 = vunpack.c.l.b16 %v6595
    %v6667 = vunpack.c.l.b16 %v6596
    %v6668 = vunpack.c.l.b16 %v6597
    %v6669 = vunpack.c.l.b16 %v6598
    %v6670 = vunpack.c.l.b16 %v6599
    %v6671 = vunpack.c.l.b16 %v6600
    %v6672 = vunpack.c.l.b16 %v6601
    %v6673 = vunpack.c.l.b16 %v6602
    %v6674 = vpack.c.b16 %v6643, %v6642
    %v6675 = vpack.c.b16 %v6645, %v6644
    %v6676 = vpack.c.b16 %v6647, %v6646
    %v6677 = vpack.c.b16 %v6649, %v6648
    %v6678 = vpack.c.b16 %v6651, %v6650
    %v6679 = vpack.c.b16 %v6653, %v6652
    %v6680 = vpack.c.b16 %v6655, %v6654
    %v6681 = vpack.c.b16 %v6657, %v6656
    %v6682 = vpack.c.b16 %v6659, %v6658
    %v6683 = vpack.c.b16 %v6661, %v6660
    %v6684 = vpack.c.b16 %v6663, %v6662
    %v6685 = vpack.c.b16 %v6665, %v6664
    %v6686 = vpack.c.b16 %v6667, %v6666
    %v6687 = vpack.c.b16 %v6669, %v6668
    %v6688 = vpack.c.b16 %v6671, %v6670
    %v6689 = vpack.c.b16 %v6673, %v6672
    %6706 = vmatprep.subr.bf16.mxu0 0
    %6707 = vmatpush1.bf16.msra.mxu0 %v6674
    %6708 = vmatprep.subr.bf16.mxu0 0
    %6709 = vmatpush1.bf16.msra.mxu0 %v6675
    %6710 = vmatprep.subr.bf16.mxu0 0
    %6711 = vmatpush1.bf16.msra.mxu0 %v6676
    %6712 = vmatprep.subr.bf16.mxu0 0
    %6713 = vmatpush1.bf16.msra.mxu0 %v6677
    %6714 = vmatprep.subr.bf16.mxu0 0
    %6715 = vmatpush1.bf16.msra.mxu0 %v6678
    %6716 = vmatprep.subr.bf16.mxu0 0
    %6717 = vmatpush1.bf16.msra.mxu0 %v6679
    %6718 = vmatprep.subr.bf16.mxu0 0
    %6719 = vmatpush1.bf16.msra.mxu0 %v6680
    %6720 = vmatprep.subr.bf16.mxu0 0
    %6721 = vmatpush1.bf16.msra.mxu0 %v6681
    %6722 = vmatprep.subr.bf16.mxu0 0
    %6723 = vmatpush1.bf16.msra.mxu0 %v6682
    %6724 = vmatprep.subr.bf16.mxu0 0
    %6725 = vmatpush1.bf16.msra.mxu0 %v6683
    %6726 = vmatprep.subr.bf16.mxu0 0
    %6727 = vmatpush1.bf16.msra.mxu0 %v6684
    %6728 = vmatprep.subr.bf16.mxu0 0
    %6729 = vmatpush1.bf16.msra.mxu0 %v6685
    %6730 = vmatprep.subr.bf16.mxu0 0
    %6731 = vmatpush1.bf16.msra.mxu0 %v6686
    %6732 = vmatprep.subr.bf16.mxu0 0
    %6733 = vmatpush1.bf16.msra.mxu0 %v6687
    %6734 = vmatprep.subr.bf16.mxu0 0
    %6735 = vmatpush1.bf16.msra.mxu0 %v6688
    %6736 = vmatprep.subr.bf16.mxu0 0
    %6737 = vmatpush1.bf16.msra.mxu0 %v6689
    %6738 = vmatprep.mubr.bf16.mxu0 %v6570
    %6739 = vmatmul.mubr.bf16.gmra.mrb[0].mxu0 %v6569
    %v6740 = vpop.f32.mrb[0].mxu0
    %v6741 = vadd.f32 %v6608, %v6740
    %v6742 = vpop.f32.mrb[0].mxu0
    %v6743 = vpop.f32.mrb[0].mxu0
    %v6744 = vpop.f32.mrb[0].mxu0
    %6745 = vdwg.mxu0
    %v6746 = vxor.u32 %v6741, 2147483648
    %v6747 = vmul.f32 %v6746, 1.442695
    %v6748 = vpow.pop %v6747
    %v6749 = vadd.f32 %v6748, 1.0
    %v6750 = vrcp.pop %v6749
    %v6751 = vmul.f32 1.0, %v6750
    %vm6752 = vcmask 31744
    %6753 = vst.msk [vmem:[%s10] sm:$0xff] %vm6752, %v6751
    // Predicated region
    $region74: #{tpu_custom_call.1} parent=1 // pred_check
      _
    $region75: #{tpu_custom_call.1} parent=1 // pred_check_branch
      %6755 = sbr.rel (0) target = $region77
    $region76: #{tpu_custom_call.1} parent=1 // pred_region
      _
    $region77: #{tpu_custom_call.1} parent=1 // pred_fallthru
      _
    // Predicated region
    $region78: #{tpu_custom_call.1} parent=1 // pred_check
      _
    $region79: #{tpu_custom_call.1} parent=1 // pred_check_branch
      %6757 = sbr.rel (0) target = $region81
    $region80: #{tpu_custom_call.1} parent=1 // pred_region
      _
    $region81: #{tpu_custom_call.1} parent=1 // pred_fallthru
      _
    %6758 = vsyncpa [#allocation3], 1
    %6759 = vsyncpa [#allocation5], 1
    %6760 = vsyncpa [#allocation8], 1
    %6761 = vsyncpa [#allocation11], 1
    %6762 = vsyncpa [#allocation14], 1

</llo_original>
